<compile_context>
chip_gen: v5e
topology: v5e:2x2
jax: 0.10.0
libtpu: 0.0.40
codegen_flags: <defaults>
</compile_context>

<pallas_src>
import functools

import jax
import jax.numpy as jnp
import numpy as np
from jax.experimental import pallas as pl
from jax.experimental.pallas import tpu as pltpu


# Row-tile cap. Channel widths are tiny (<=64), so even 512-row tiles use well
# under 1 MiB of VMEM per operand -> safe on v5e/v6e (128 MiB) and v7x (64 MiB).
MAX_ROW_TILE = 512


# ----------------------------- small helpers --------------------------------

def _rup(x, m):
    return (x + m - 1) // m * m


def _pad_rows(x, n_pad):
    n = x.shape[0]
    if n == n_pad:
        return x
    return jnp.concatenate(
        [x, jnp.zeros((n_pad - n,) + x.shape[1:], x.dtype)], axis=0)


def _pad_idx(idx, n_pad, fill):
    idx = idx.astype(jnp.int32)
    n = idx.shape[0]
    if n == n_pad:
        return idx
    return jnp.concatenate([idx, jnp.full((n_pad - n,), fill, jnp.int32)])


# ----------------------------- Pallas kernels --------------------------------

def _mlp2_kernel(x_ref, w1_ref, b1_ref, w2_ref, b2_ref, o_ref):
    # relu(relu(x @ w1 + b1) @ w2 + b2), one row tile per grid step.
    h = jnp.dot(x_ref[...], w1_ref[...], preferred_element_type=jnp.float32)
    h = jnp.maximum(h + b1_ref[...], 0.0)
    y = jnp.dot(h, w2_ref[...], preferred_element_type=jnp.float32)
    o_ref[...] = jnp.maximum(y + b2_ref[...], 0.0)


def _bond_update_kernel(s1_ref, s2_ref, bd_ref, st_ref, init_ref,
                        w1a_ref, w1b_ref, w1c_ref, w1d_ref, b1_ref,
                        w2_ref, b2_ref, w3_ref, b3_ref,
                        new_ref, fin_ref):
    # fc1 on the (never materialized) concat [sites1 | sites2 | bonds | states]:
    # W1 is split row-wise into 4 partial matmuls.
    h1 = (jnp.dot(s1_ref[...], w1a_ref[...], preferred_element_type=jnp.float32)
          + jnp.dot(s2_ref[...], w1b_ref[...], preferred_element_type=jnp.float32)
          + jnp.dot(bd_ref[...], w1c_ref[...], preferred_element_type=jnp.float32)
          + jnp.dot(st_ref[...], w1d_ref[...], preferred_element_type=jnp.float32))
    h1 = jnp.maximum(h1 + b1_ref[...], 0.0)
    h2 = jnp.maximum(
        jnp.dot(h1, w2_ref[...], preferred_element_type=jnp.float32) + b2_ref[...], 0.0)
    y = jnp.maximum(
        jnp.dot(h2, w3_ref[...], preferred_element_type=jnp.float32) + b3_ref[...], 0.0)
    new_ref[...] = y                   # pre-residual (consumed by Site/StateUpdate)
    fin_ref[...] = y + init_ref[...]   # residual folded into the kernel epilogue


def _site_update_kernel(bonds_ref, idx_ref, sites_ref, states_ref, init_ref,
                        w1a_ref, w1b_ref, w1c_ref, b1_ref,
                        w2_ref, b2_ref, w3_ref, b3_ref,
                        new_ref, fin_ref, acc_ref, cnt_ref):
    # grid = (site tiles [parallel], bond tiles [arbitrary / reduction]).
    i = pl.program_id(0)
    k = pl.program_id(1)

    @pl.when(k == 0)
    def _():
        acc_ref[...] = jnp.zeros_like(acc_ref)
        cnt_ref[...] = jnp.zeros_like(cnt_ref)

    ts = acc_ref.shape[0]
    tb = idx_ref.shape[1]
    # scatter_mean(bonds, indices1) restricted to this site tile, via an
    # in-kernel one-hot built from the tiled index vector (padding idx = -1
    # never matches, so padded bond rows are excluded from sum and count).
    row_ids = jax.lax.broadcasted_iota(jnp.int32, (ts, tb), 0) + i * ts
    onehot = (idx_ref[...] == row_ids).astype(jnp.float32)
    acc_ref[...] += jnp.dot(onehot, bonds_ref[...],
                            preferred_element_type=jnp.float32)
    cnt_ref[...] += jnp.sum(onehot, axis=1, keepdims=True)

    @pl.when(k == pl.num_programs(1) - 1)
    def _():
        pool = acc_ref[...] / jnp.maximum(cnt_ref[...], 1.0)
        h1 = (jnp.dot(pool, w1a_ref[...], preferred_element_type=jnp.float32)
              + jnp.dot(sites_ref[...], w1b_ref[...], preferred_element_type=jnp.float32)
              + jnp.dot(states_ref[...], w1c_ref[...], preferred_element_type=jnp.float32))
        h1 = jnp.maximum(h1 + b1_ref[...], 0.0)
        h2 = jnp.maximum(
            jnp.dot(h1, w2_ref[...], preferred_element_type=jnp.float32) + b2_ref[...], 0.0)
        y = jnp.maximum(
            jnp.dot(h2, w3_ref[...], preferred_element_type=jnp.float32) + b3_ref[...], 0.0)
        new_ref[...] = y
        fin_ref[...] = y + init_ref[...]


def _state_update_kernel(bonds_ref, g2b_ref, sites_ref, g2s_ref, states_ref, init_ref,
                         w1a_ref, w1b_ref, w1c_ref, b1_ref,
                         w2_ref, b2_ref, w3_ref, b3_ref,
                         out_ref, accb_ref, cntb_ref, accs_ref, cnts_ref):
    # grid = (graph tiles [parallel], row tiles over bonds & sites [arbitrary]).
    i = pl.program_id(0)
    k = pl.program_id(1)

    @pl.when(k == 0)
    def _():
        accb_ref[...] = jnp.zeros_like(accb_ref)
        cntb_ref[...] = jnp.zeros_like(cntb_ref)
        accs_ref[...] = jnp.zeros_like(accs_ref)
        cnts_ref[...] = jnp.zeros_like(cnts_ref)

    tg = accb_ref.shape[0]
    tk = g2b_ref.shape[1]
    row_ids = jax.lax.broadcasted_iota(jnp.int32, (tg, tk), 0) + i * tg

    ohb = (g2b_ref[...] == row_ids).astype(jnp.float32)
    accb_ref[...] += jnp.dot(ohb, bonds_ref[...], preferred_element_type=jnp.float32)
    cntb_ref[...] += jnp.sum(ohb, axis=1, keepdims=True)

    ohs = (g2s_ref[...] == row_ids).astype(jnp.float32)
    accs_ref[...] += jnp.dot(ohs, sites_ref[...], preferred_element_type=jnp.float32)
    cnts_ref[...] += jnp.sum(ohs, axis=1, keepdims=True)

    @pl.when(k == pl.num_programs(1) - 1)
    def _():
        pool_b = accb_ref[...] / jnp.maximum(cntb_ref[...], 1.0)
        pool_s = accs_ref[...] / jnp.maximum(cnts_ref[...], 1.0)
        h1 = (jnp.dot(pool_b, w1a_ref[...], preferred_element_type=jnp.float32)
              + jnp.dot(pool_s, w1b_ref[...], preferred_element_type=jnp.float32)
              + jnp.dot(states_ref[...], w1c_ref[...], preferred_element_type=jnp.float32))
        h1 = jnp.maximum(h1 + b1_ref[...], 0.0)
        h2 = jnp.maximum(
            jnp.dot(h1, w2_ref[...], preferred_element_type=jnp.float32) + b2_ref[...], 0.0)
        y = jnp.maximum(
            jnp.dot(h2, w3_ref[...], preferred_element_type=jnp.float32) + b3_ref[...], 0.0)
        out_ref[...] = y + init_ref[...]


# ------------------------------ kernel wrappers ------------------------------

def mlp2(x, w1, b1, w2, b2, *, tile):
    n, in_dim = x.shape
    out_dim = w2.shape[1]
    full = lambda a: pl.BlockSpec(a.shape, lambda i: (0, 0))
    return pl.pallas_call(
        _mlp2_kernel,
        out_shape=jax.ShapeDtypeStruct((n, out_dim), jnp.float32),
        grid=(n // tile,),
        in_specs=[pl.BlockSpec((tile, in_dim), lambda i: (i, 0)),
                  full(w1), full(b1), full(w2), full(b2)],
        out_specs=pl.BlockSpec((tile, out_dim), lambda i: (i, 0)),
        compiler_params=pltpu.CompilerParams(dimension_semantics=("parallel",)),
    )(x, w1, b1, w2, b2)


def bond_update(s1, s2, bd, st, init, wsplit, *, tile):
    w1a, w1b, w1c, w1d, b1, w2, b2, w3, b3 = wsplit
    n, h = bd.shape
    out_dim = w3.shape[1]
    row = lambda c: pl.BlockSpec((tile, c), lambda i: (i, 0))
    full = lambda a: pl.BlockSpec(a.shape, lambda i: (0, 0))
    return pl.pallas_call(
        _bond_update_kernel,
        out_shape=(jax.ShapeDtypeStruct((n, out_dim), jnp.float32),
                   jax.ShapeDtypeStruct((n, out_dim), jnp.float32)),
        grid=(n // tile,),
        in_specs=[row(s1.shape[1]), row(s2.shape[1]), row(h), row(st.shape[1]),
                  row(init.shape[1]),
                  full(w1a), full(w1b), full(w1c), full(w1d), full(b1),
                  full(w2), full(b2), full(w3), full(b3)],
        out_specs=(pl.BlockSpec((tile, out_dim), lambda i: (i, 0)),
                   pl.BlockSpec((tile, out_dim), lambda i: (i, 0))),
        compiler_params=pltpu.CompilerParams(dimension_semantics=("parallel",)),
    )(s1, s2, bd, st, init, w1a, w1b, w1c, w1d, b1, w2, b2, w3, b3)


def site_update(bonds_new, idx_pool, sites_fc, states_s, init_sites, wsplit,
                *, tile_s, tile_b):
    w1a, w1b, w1c, b1, w2, b2, w3, b3 = wsplit
    ns, h = sites_fc.shape
    nb, pool_w = bonds_new.shape
    out_dim = w3.shape[1]
    row_s = lambda c: pl.BlockSpec((tile_s, c), lambda i, k: (i, 0))
    full = lambda a: pl.BlockSpec(a.shape, lambda i, k: (0, 0))
    return pl.pallas_call(
        _site_update_kernel,
        out_shape=(jax.ShapeDtypeStruct((ns, out_dim), jnp.float32),
                   jax.ShapeDtypeStruct((ns, out_dim), jnp.float32)),
        grid=(ns // tile_s, nb // tile_b),
        in_specs=[pl.BlockSpec((tile_b, pool_w), lambda i, k: (k, 0)),
                  pl.BlockSpec((1, tile_b), lambda i, k: (0, k)),
                  row_s(h), row_s(states_s.shape[1]), row_s(init_sites.shape[1]),
                  full(w1a), full(w1b), full(w1c), full(b1),
                  full(w2), full(b2), full(w3), full(b3)],
        out_specs=(pl.BlockSpec((tile_s, out_dim), lambda i, k: (i, 0)),
                   pl.BlockSpec((tile_s, out_dim), lambda i, k: (i, 0))),
        scratch_shapes=[pltpu.VMEM((tile_s, pool_w), jnp.float32),
                        pltpu.VMEM((tile_s, 1), jnp.float32)],
        compiler_params=pltpu.CompilerParams(
            dimension_semantics=("parallel", "arbitrary")),
    )(bonds_new, idx_pool, sites_fc, states_s, init_sites,
      w1a, w1b, w1c, b1, w2, b2, w3, b3)


def state_update(bonds_L, g2b_pool, sites_L, g2s_pool, states_fc, init_states,
                 wsplit, *, tile_g, tile_k):
    w1a, w1b, w1c, b1, w2, b2, w3, b3 = wsplit
    ng, h = states_fc.shape
    L = bonds_L.shape[0]
    out_dim = w3.shape[1]
    row_g = lambda c: pl.BlockSpec((tile_g, c), lambda i, k: (i, 0))
    full = lambda a: pl.BlockSpec(a.shape, lambda i, k: (0, 0))
    return pl.pallas_call(
        _state_update_kernel,
        out_shape=jax.ShapeDtypeStruct((ng, out_dim), jnp.float32),
        grid=(ng // tile_g, L // tile_k),
        in_specs=[pl.BlockSpec((tile_k, bonds_L.shape[1]), lambda i, k: (k, 0)),
                  pl.BlockSpec((1, tile_k), lambda i, k: (0, k)),
                  pl.BlockSpec((tile_k, sites_L.shape[1]), lambda i, k: (k, 0)),
                  pl.BlockSpec((1, tile_k), lambda i, k: (0, k)),
                  row_g(h), row_g(init_states.shape[1]),
                  full(w1a), full(w1b), full(w1c), full(b1),
                  full(w2), full(b2), full(w3), full(b3)],
        out_specs=pl.BlockSpec((tile_g, out_dim), lambda i, k: (i, 0)),
        scratch_shapes=[pltpu.VMEM((tile_g, bonds_L.shape[1]), jnp.float32),
                        pltpu.VMEM((tile_g, 1), jnp.float32),
                        pltpu.VMEM((tile_g, sites_L.shape[1]), jnp.float32),
                        pltpu.VMEM((tile_g, 1), jnp.float32)],
        compiler_params=pltpu.CompilerParams(
            dimension_semantics=("parallel", "arbitrary")),
    )(bonds_L, g2b_pool, sites_L, g2s_pool, states_fc, init_states,
      w1a, w1b, w1c, b1, w2, b2, w3, b3)


# ----------------------------- parameter setup ------------------------------

def _linear_params(key, fan_in, fan_out):
    # Matches torch nn.Linear default init (uniform +/- 1/sqrt(fan_in)).
    k1, k2 = jax.random.split(key)
    bound = 1.0 / np.sqrt(fan_in)
    w = jax.random.uniform(k1, (fan_in, fan_out), jnp.float32, -bound, bound)
    b = jax.random.uniform(k2, (1, fan_out), jnp.float32, -bound, bound)
    return w, b


def init_megnet_block_params(key, site_len, bond_len, state_len,
                             megnet_h1, megnet_h2, premegnet_h1, premegnet_h2):
    keys = jax.random.split(key, 15)
    p = {}
    p["bonds_fc1"] = _linear_params(keys[0], bond_len, premegnet_h1)
    p["bonds_fc2"] = _linear_params(keys[1], premegnet_h1, premegnet_h2)
    p["sites_fc1"] = _linear_params(keys[2], site_len, premegnet_h1)
    p["sites_fc2"] = _linear_params(keys[3], premegnet_h1, premegnet_h2)
    p["states_fc1"] = _linear_params(keys[4], state_len, premegnet_h1)
    p["states_fc2"] = _linear_params(keys[5], premegnet_h1, premegnet_h2)
    h = premegnet_h2
    p["bond_fc1"] = _linear_params(keys[6], 2 * h + h + h, megnet_h1)
    p["bond_fc2"] = _linear_params(keys[7], megnet_h1, megnet_h2)
    p["bond_fc3"] = _linear_params(keys[8], megnet_h2, h)
    p["site_fc1"] = _linear_params(keys[9], h + h + h, megnet_h1)
    p["site_fc2"] = _linear_params(keys[10], megnet_h1, megnet_h2)
    p["site_fc3"] = _linear_params(keys[11], megnet_h2, h)
    p["state_fc1"] = _linear_params(keys[12], h + h + h, megnet_h1)
    p["state_fc2"] = _linear_params(keys[13], megnet_h1, megnet_h2)
    p["state_fc3"] = _linear_params(keys[14], megnet_h2, h)
    return p


# ----------------------------- forward pass ---------------------------------

def megnet_block_forward(params, sites, bonds, states,
                         indices1, indices2, graph_to_sites, graph_to_bonds,
                         *, first_block, num_sites, num_graphs):
    num_bonds = bonds.shape[0]
    h = params["sites_fc2"][0].shape[1]  # premegnet_h2

    # ---- choose row tiles (128-multiples so tiled index vectors satisfy the
    #      lane-divisibility rule) and pad row spaces to tile multiples ----
    tb = min(MAX_ROW_TILE, _rup(num_bonds, 128))
    nb_pad = _rup(num_bonds, tb)
    ts = min(MAX_ROW_TILE, _rup(num_sites, 128))
    ns_pad = _rup(num_sites, ts)
    tg = min(MAX_ROW_TILE, _rup(num_graphs, 8))
    ng_pad = _rup(num_graphs, tg)
    L0 = max(nb_pad, ns_pad)              # shared reduction length for StateUpdate
    tks = min(MAX_ROW_TILE, L0)
    L = _rup(L0, tks)

    bonds_p = _pad_rows(bonds.astype(jnp.float32), nb_pad)
    sites_p = _pad_rows(sites.astype(jnp.float32), ns_pad)
    states_p = _pad_rows(states.astype(jnp.float32), ng_pad)

    # gather-indices padded with 0 (valid), pooling-indices padded with -1
    # (excluded from the in-kernel one-hot sums/counts).
    idx1_g = _pad_idx(indices1, nb_pad, 0)
    idx2_g = _pad_idx(indices2, nb_pad, 0)
    g2b_g = _pad_idx(graph_to_bonds, nb_pad, 0)
    g2s_g = _pad_idx(graph_to_sites, ns_pad, 0)
    idx1_pool = _pad_idx(indices1, nb_pad, -1).reshape(1, nb_pad)
    g2b_pool = _pad_idx(graph_to_bonds, L, -1).reshape(1, L)
    g2s_pool = _pad_idx(graph_to_sites, L, -1).reshape(1, L)

    # ---- pre-block fc_layers (fused 2-layer Linear+ReLU, row-tiled) ----
    bonds_fc = mlp2(bonds_p, *params["bonds_fc1"], *params["bonds_fc2"], tile=tb)
    sites_fc = mlp2(sites_p, *params["sites_fc1"], *params["sites_fc2"], tile=ts)
    states_fc = mlp2(states_p, *params["states_fc1"], *params["states_fc2"], tile=tg)

    if first_block:
        init_sites, init_bonds, init_states = sites_fc, bonds_fc, states_fc
    else:
        init_sites, init_bonds, init_states = sites_p, bonds_p, states_p

    # ---- BondUpdate (gathers as JAX glue; concat eliminated via split W1) ----
    sites1 = jnp.take(sites_fc, idx1_g, axis=0)
    sites2 = jnp.take(sites_fc, idx2_g, axis=0)
    states_b = jnp.take(states_fc, g2b_g, axis=0)
    w1, b1 = params["bond_fc1"]
    bond_split = (w1[:h], w1[h:2 * h], w1[2 * h:3 * h], w1[3 * h:], b1,
                  *params["bond_fc2"], *params["bond_fc3"])
    bonds_new, bonds_out = bond_update(
        sites1, sites2, bonds_fc, states_b, init_bonds, bond_split, tile=tb)

    # ---- SiteUpdate (scatter_mean over bonds fused into the kernel) ----
    states_s = jnp.take(states_fc, g2s_g, axis=0)
    w1, b1 = params["site_fc1"]
    site_split = (w1[:h], w1[h:2 * h], w1[2 * h:], b1,
                  *params["site_fc2"], *params["site_fc3"])
    sites_new, sites_out = site_update(
        bonds_new, idx1_pool, sites_fc, states_s, init_sites, site_split,
        tile_s=ts, tile_b=tb)

    # ---- StateUpdate (both scatter_means + MLP + residual in one kernel) ----
    bonds_L = _pad_rows(bonds_new, L)
    sites_L = _pad_rows(sites_new, L)
    w1, b1 = params["state_fc1"]
    state_split = (w1[:h], w1[h:2 * h], w1[2 * h:], b1,
                   *params["state_fc2"], *params["state_fc3"])
    states_out = state_update(
        bonds_L, g2b_pool, sites_L, g2s_pool, states_fc, init_states,
        state_split, tile_g=tg, tile_k=tks)

    return (sites_out[:num_sites], bonds_out[:num_bonds], states_out[:num_graphs])


# ---------------------------- pure-JAX reference ----------------------------

def _ref_linrelu(x, w, b):
    return jnp.maximum(jnp.dot(x, w, preferred_element_type=jnp.float32) + b, 0.0)


def _ref_scatter_mean(x, idx, num_segments):
    s = jax.ops.segment_sum(x, idx, num_segments=num_segments)
    c = jax.ops.segment_sum(jnp.ones((x.shape[0], 1), jnp.float32), idx,
                            num_segments=num_segments)
    return s / jnp.maximum(c, 1.0)


def megnet_block_reference(params, sites, bonds, states,
                           indices1, indices2, graph_to_sites, graph_to_bonds,
                           *, first_block, num_sites, num_graphs):
    init_s, init_b, init_st = sites, bonds, states
    bonds = _ref_linrelu(_ref_linrelu(bonds, *params["bonds_fc1"]), *params["bonds_fc2"])
    sites = _ref_linrelu(_ref_linrelu(sites, *params["sites_fc1"]), *params["sites_fc2"])
    states = _ref_linrelu(_ref_linrelu(states, *params["states_fc1"]), *params["states_fc2"])
    if first_block:
        init_s, init_b, init_st = sites, bonds, states
    vec = jnp.concatenate([jnp.take(sites, indices1, 0), jnp.take(sites, indices2, 0),
                           bonds, jnp.take(states, graph_to_bonds, 0)], axis=1)
    bonds = _ref_linrelu(_ref_linrelu(_ref_linrelu(vec, *params["bond_fc1"]),
                                      *params["bond_fc2"]), *params["bond_fc3"])
    vec = jnp.concatenate([_ref_scatter_mean(bonds, indices1, num_sites),
                           sites, jnp.take(states, graph_to_sites, 0)], axis=1)
    sites = _ref_linrelu(_ref_linrelu(_ref_linrelu(vec, *params["site_fc1"]),
                                      *params["site_fc2"]), *params["site_fc3"])
    vec = jnp.concatenate([_ref_scatter_mean(bonds, graph_to_bonds, num_graphs),
                           _ref_scatter_mean(sites, graph_to_sites, num_graphs),
                           states], axis=1)
    states = _ref_linrelu(_ref_linrelu(_ref_linrelu(vec, *params["state_fc1"]),
                                       *params["state_fc2"]), *params["state_fc3"])
    return sites + init_s, bonds + init_b, states + init_st


# --------------------------------- main --------------------------------------

if __name__ == "__main__":
    site_len, bond_len, state_len = 16, 8, 4
    premegnet_h1, premegnet_h2 = 32, 16
    megnet_h1, megnet_h2 = 32, 32
    num_sites, num_bonds, num_graphs = 12, 24, 2
    first_block = True  # residual widths match post-fc_layers widths

    key = jax.random.PRNGKey(0)
    k_param, k_s, k_b, k_st = jax.random.split(key, 4)

    params = init_megnet_block_params(
        k_param, site_len, bond_len, state_len,
        megnet_h1, megnet_h2, premegnet_h1, premegnet_h2)

    sites = jax.random.normal(k_s, (num_sites, site_len), jnp.float32)
    bonds = jax.random.normal(k_b, (num_bonds, bond_len), jnp.float32)
    states = jax.random.normal(k_st, (num_graphs, state_len), jnp.float32)

    indices1 = jnp.arange(num_bonds, dtype=jnp.int32) % num_sites
    indices2 = (jnp.arange(num_bonds, dtype=jnp.int32) * 5 + 3) % num_sites
    graph_to_bonds = jnp.arange(num_bonds, dtype=jnp.int32) // (num_bonds // num_graphs)
    graph_to_sites = jnp.arange(num_sites, dtype=jnp.int32) // (num_sites // num_graphs)

    fwd = functools.partial(megnet_block_forward,
                            first_block=first_block,
                            num_sites=num_sites, num_graphs=num_graphs)

    out_sites, out_bonds, out_states = jax.jit(fwd)(
        params, sites, bonds, states,
        indices1, indices2, graph_to_sites, graph_to_bonds)
    jax.block_until_ready((out_sites, out_bonds, out_states))

    ref_sites, ref_bonds, ref_states = megnet_block_reference(
        params, sites, bonds, states,
        indices1, indices2, graph_to_sites, graph_to_bonds,
        first_block=first_block, num_sites=num_sites, num_graphs=num_graphs)
    np.testing.assert_allclose(np.asarray(out_sites), np.asarray(ref_sites),
                               rtol=1e-3, atol=1e-3)
    np.testing.assert_allclose(np.asarray(out_bonds), np.asarray(ref_bonds),
                               rtol=1e-3, atol=1e-3)
    np.testing.assert_allclose(np.asarray(out_states), np.asarray(ref_states),
                               rtol=1e-3, atol=1e-3)

    print("KERNEL_OK")
</pallas_src>

<mosaic_0001>
module attributes {stable_mosaic.version = 11 : i64} {
  func.func @_mlp2_kernel(%arg0: i32, %arg1: memref<128x16xf32, #tpu.memory_space<vmem>>, %arg2: memref<16x32xf32, #tpu.memory_space<vmem>>, %arg3: memref<1x32xf32, #tpu.memory_space<vmem>>, %arg4: memref<32x16xf32, #tpu.memory_space<vmem>>, %arg5: memref<1x16xf32, #tpu.memory_space<vmem>>, %arg6: memref<128x16xf32, #tpu.memory_space<vmem>>) attributes {dimension_semantics = [#tpu.dimension_semantics<parallel>], iteration_bounds = array<i64: 1>, scalar_prefetch = 0 : i64, scratch_operands = 0 : i64, tpu.core_type = #tpu.core_type<tc>, window_params = [{transform_indices = @transform_0, window_bounds = array<i64: 128, 16>}, {pipeline_mode = #tpu.pipeline_mode<synchronous>, transform_indices = @transform_1, window_bounds = array<i64: 16, 32>}, {pipeline_mode = #tpu.pipeline_mode<synchronous>, transform_indices = @transform_2, window_bounds = array<i64: 1, 32>}, {pipeline_mode = #tpu.pipeline_mode<synchronous>, transform_indices = @transform_3, window_bounds = array<i64: 32, 16>}, {pipeline_mode = #tpu.pipeline_mode<synchronous>, transform_indices = @transform_4, window_bounds = array<i64: 1, 16>}, {transform_indices = @transform_5, window_bounds = array<i64: 128, 16>}]} {
    %c0 = arith.constant 0 : index
    %c0_0 = arith.constant 0 : index
    %0 = vector.load %arg1[%c0, %c0_0] : memref<128x16xf32, #tpu.memory_space<vmem>>, vector<128x16xf32>
    %c0_1 = arith.constant 0 : index
    %c0_2 = arith.constant 0 : index
    %1 = vector.load %arg2[%c0_1, %c0_2] : memref<16x32xf32, #tpu.memory_space<vmem>>, vector<16x32xf32>
    %cst = arith.constant dense<0.000000e+00> : vector<128x32xf32>
    %2 = tpu.matmul %0, %1, %cst {dimension_numbers = #tpu.dot_dimension_numbers<[1], [0], [0], [1], [0, 0, 1, 1], [], []>} : vector<128x16xf32>, vector<16x32xf32>, vector<128x32xf32> -> vector<128x32xf32>
    %c0_3 = arith.constant 0 : index
    %c0_4 = arith.constant 0 : index
    %3 = vector.load %arg3[%c0_3, %c0_4] : memref<1x32xf32, #tpu.memory_space<vmem>>, vector<1x32xf32>
    %4 = vector.broadcast %3 : vector<1x32xf32> to vector<128x32xf32>
    %5 = arith.addf %2, %4 : vector<128x32xf32>
    %cst_5 = arith.constant 0.000000e+00 : f32
    %6 = vector.broadcast %cst_5 : f32 to vector<128x32xf32>
    %7 = arith.maximumf %5, %6 : vector<128x32xf32>
    %c0_6 = arith.constant 0 : index
    %c0_7 = arith.constant 0 : index
    %8 = vector.load %arg4[%c0_6, %c0_7] : memref<32x16xf32, #tpu.memory_space<vmem>>, vector<32x16xf32>
    %cst_8 = arith.constant dense<0.000000e+00> : vector<128x16xf32>
    %9 = tpu.matmul %7, %8, %cst_8 {dimension_numbers = #tpu.dot_dimension_numbers<[1], [0], [0], [1], [0, 0, 1, 1], [], []>} : vector<128x32xf32>, vector<32x16xf32>, vector<128x16xf32> -> vector<128x16xf32>
    %c0_9 = arith.constant 0 : index
    %c0_10 = arith.constant 0 : index
    %10 = vector.load %arg5[%c0_9, %c0_10] : memref<1x16xf32, #tpu.memory_space<vmem>>, vector<1x16xf32>
    %11 = vector.broadcast %10 : vector<1x16xf32> to vector<128x16xf32>
    %12 = arith.addf %9, %11 : vector<128x16xf32>
    %cst_11 = arith.constant 0.000000e+00 : f32
    %13 = vector.broadcast %cst_11 : f32 to vector<128x16xf32>
    %14 = arith.maximumf %12, %13 : vector<128x16xf32>
    %c0_12 = arith.constant 0 : index
    %c0_13 = arith.constant 0 : index
    %15 = vector.load %arg6[%c0_12, %c0_13] : memref<128x16xf32, #tpu.memory_space<vmem>>, vector<128x16xf32>
    tpu.vector_store %arg6[%c0_12, %c0_13], %14 {strides = array<i32>} : memref<128x16xf32, #tpu.memory_space<vmem>>, vector<128x16xf32>,
    return
  }
  func.func @transform_0(%arg0: i32) -> (i32, i32) {
    %c0_i32 = arith.constant 0 : i32
    %c0_i32_0 = arith.constant 0 : i32
    return %arg0, %c0_i32 : i32, i32
  }
  func.func @transform_1(%arg0: i32) -> (i32, i32) {
    %c0_i32 = arith.constant 0 : i32
    %c0_i32_0 = arith.constant 0 : i32
    %c0_i32_1 = arith.constant 0 : i32
    return %c0_i32, %c0_i32_0 : i32, i32
  }
  func.func @transform_2(%arg0: i32) -> (i32, i32) {
    %c0_i32 = arith.constant 0 : i32
    %c0_i32_0 = arith.constant 0 : i32
    %c0_i32_1 = arith.constant 0 : i32
    return %c0_i32, %c0_i32_0 : i32, i32
  }
  func.func @transform_3(%arg0: i32) -> (i32, i32) {
    %c0_i32 = arith.constant 0 : i32
    %c0_i32_0 = arith.constant 0 : i32
    %c0_i32_1 = arith.constant 0 : i32
    return %c0_i32, %c0_i32_0 : i32, i32
  }
  func.func @transform_4(%arg0: i32) -> (i32, i32) {
    %c0_i32 = arith.constant 0 : i32
    %c0_i32_0 = arith.constant 0 : i32
    %c0_i32_1 = arith.constant 0 : i32
    return %c0_i32, %c0_i32_0 : i32, i32
  }
  func.func @transform_5(%arg0: i32) -> (i32, i32) {
    %c0_i32 = arith.constant 0 : i32
    %c0_i32_0 = arith.constant 0 : i32
    return %arg0, %c0_i32 : i32, i32
  }
}

module attributes {stable_mosaic.version = 11 : i64} {
  func.func @_mlp2_kernel(%arg0: i32, %arg1: memref<8x4xf32, #tpu.memory_space<vmem>>, %arg2: memref<4x32xf32, #tpu.memory_space<vmem>>, %arg3: memref<1x32xf32, #tpu.memory_space<vmem>>, %arg4: memref<32x16xf32, #tpu.memory_space<vmem>>, %arg5: memref<1x16xf32, #tpu.memory_space<vmem>>, %arg6: memref<8x16xf32, #tpu.memory_space<vmem>>) attributes {dimension_semantics = [#tpu.dimension_semantics<parallel>], iteration_bounds = array<i64: 1>, scalar_prefetch = 0 : i64, scratch_operands = 0 : i64, tpu.core_type = #tpu.core_type<tc>, window_params = [{transform_indices = @transform_0, window_bounds = array<i64: 8, 4>}, {pipeline_mode = #tpu.pipeline_mode<synchronous>, transform_indices = @transform_1, window_bounds = array<i64: 4, 32>}, {pipeline_mode = #tpu.pipeline_mode<synchronous>, transform_indices = @transform_2, window_bounds = array<i64: 1, 32>}, {pipeline_mode = #tpu.pipeline_mode<synchronous>, transform_indices = @transform_3, window_bounds = array<i64: 32, 16>}, {pipeline_mode = #tpu.pipeline_mode<synchronous>, transform_indices = @transform_4, window_bounds = array<i64: 1, 16>}, {transform_indices = @transform_5, window_bounds = array<i64: 8, 16>}]} {
    %c0 = arith.constant 0 : index
    %c0_0 = arith.constant 0 : index
    %0 = vector.load %arg1[%c0, %c0_0] : memref<8x4xf32, #tpu.memory_space<vmem>>, vector<8x4xf32>
    %c0_1 = arith.constant 0 : index
    %c0_2 = arith.constant 0 : index
    %1 = vector.load %arg2[%c0_1, %c0_2] : memref<4x32xf32, #tpu.memory_space<vmem>>, vector<4x32xf32>
    %cst = arith.constant dense<0.000000e+00> : vector<8x32xf32>
    %2 = tpu.matmul %0, %1, %cst {dimension_numbers = #tpu.dot_dimension_numbers<[1], [0], [0], [1], [0, 0, 1, 1], [], []>} : vector<8x4xf32>, vector<4x32xf32>, vector<8x32xf32> -> vector<8x32xf32>
    %c0_3 = arith.constant 0 : index
    %c0_4 = arith.constant 0 : index
    %3 = vector.load %arg3[%c0_3, %c0_4] : memref<1x32xf32, #tpu.memory_space<vmem>>, vector<1x32xf32>
    %4 = vector.broadcast %3 : vector<1x32xf32> to vector<8x32xf32>
    %5 = arith.addf %2, %4 : vector<8x32xf32>
    %cst_5 = arith.constant 0.000000e+00 : f32
    %6 = vector.broadcast %cst_5 : f32 to vector<8x32xf32>
    %7 = arith.maximumf %5, %6 : vector<8x32xf32>
    %c0_6 = arith.constant 0 : index
    %c0_7 = arith.constant 0 : index
    %8 = vector.load %arg4[%c0_6, %c0_7] : memref<32x16xf32, #tpu.memory_space<vmem>>, vector<32x16xf32>
    %cst_8 = arith.constant dense<0.000000e+00> : vector<8x16xf32>
    %9 = tpu.matmul %7, %8, %cst_8 {dimension_numbers = #tpu.dot_dimension_numbers<[1], [0], [0], [1], [0, 0, 1, 1], [], []>} : vector<8x32xf32>, vector<32x16xf32>, vector<8x16xf32> -> vector<8x16xf32>
    %c0_9 = arith.constant 0 : index
    %c0_10 = arith.constant 0 : index
    %10 = vector.load %arg5[%c0_9, %c0_10] : memref<1x16xf32, #tpu.memory_space<vmem>>, vector<1x16xf32>
    %11 = vector.broadcast %10 : vector<1x16xf32> to vector<8x16xf32>
    %12 = arith.addf %9, %11 : vector<8x16xf32>
    %cst_11 = arith.constant 0.000000e+00 : f32
    %13 = vector.broadcast %cst_11 : f32 to vector<8x16xf32>
    %14 = arith.maximumf %12, %13 : vector<8x16xf32>
    %c0_12 = arith.constant 0 : index
    %c0_13 = arith.constant 0 : index
    %15 = vector.load %arg6[%c0_12, %c0_13] : memref<8x16xf32, #tpu.memory_space<vmem>>, vector<8x16xf32>
    tpu.vector_store %arg6[%c0_12, %c0_13], %14 {strides = array<i32>} : memref<8x16xf32, #tpu.memory_space<vmem>>, vector<8x16xf32>,
    return
  }
  func.func @transform_0(%arg0: i32) -> (i32, i32) {
    %c0_i32 = arith.constant 0 : i32
    %c0_i32_0 = arith.constant 0 : i32
    return %arg0, %c0_i32 : i32, i32
  }
  func.func @transform_1(%arg0: i32) -> (i32, i32) {
    %c0_i32 = arith.constant 0 : i32
    %c0_i32_0 = arith.constant 0 : i32
    %c0_i32_1 = arith.constant 0 : i32
    return %c0_i32, %c0_i32_0 : i32, i32
  }
  func.func @transform_2(%arg0: i32) -> (i32, i32) {
    %c0_i32 = arith.constant 0 : i32
    %c0_i32_0 = arith.constant 0 : i32
    %c0_i32_1 = arith.constant 0 : i32
    return %c0_i32, %c0_i32_0 : i32, i32
  }
  func.func @transform_3(%arg0: i32) -> (i32, i32) {
    %c0_i32 = arith.constant 0 : i32
    %c0_i32_0 = arith.constant 0 : i32
    %c0_i32_1 = arith.constant 0 : i32
    return %c0_i32, %c0_i32_0 : i32, i32
  }
  func.func @transform_4(%arg0: i32) -> (i32, i32) {
    %c0_i32 = arith.constant 0 : i32
    %c0_i32_0 = arith.constant 0 : i32
    %c0_i32_1 = arith.constant 0 : i32
    return %c0_i32, %c0_i32_0 : i32, i32
  }
  func.func @transform_5(%arg0: i32) -> (i32, i32) {
    %c0_i32 = arith.constant 0 : i32
    %c0_i32_0 = arith.constant 0 : i32
    return %arg0, %c0_i32 : i32, i32
  }
}

module attributes {stable_mosaic.version = 11 : i64} {
  func.func @_mlp2_kernel(%arg0: i32, %arg1: memref<128x8xf32, #tpu.memory_space<vmem>>, %arg2: memref<8x32xf32, #tpu.memory_space<vmem>>, %arg3: memref<1x32xf32, #tpu.memory_space<vmem>>, %arg4: memref<32x16xf32, #tpu.memory_space<vmem>>, %arg5: memref<1x16xf32, #tpu.memory_space<vmem>>, %arg6: memref<128x16xf32, #tpu.memory_space<vmem>>) attributes {dimension_semantics = [#tpu.dimension_semantics<parallel>], iteration_bounds = array<i64: 1>, scalar_prefetch = 0 : i64, scratch_operands = 0 : i64, tpu.core_type = #tpu.core_type<tc>, window_params = [{transform_indices = @transform_0, window_bounds = array<i64: 128, 8>}, {pipeline_mode = #tpu.pipeline_mode<synchronous>, transform_indices = @transform_1, window_bounds = array<i64: 8, 32>}, {pipeline_mode = #tpu.pipeline_mode<synchronous>, transform_indices = @transform_2, window_bounds = array<i64: 1, 32>}, {pipeline_mode = #tpu.pipeline_mode<synchronous>, transform_indices = @transform_3, window_bounds = array<i64: 32, 16>}, {pipeline_mode = #tpu.pipeline_mode<synchronous>, transform_indices = @transform_4, window_bounds = array<i64: 1, 16>}, {transform_indices = @transform_5, window_bounds = array<i64: 128, 16>}]} {
    %c0 = arith.constant 0 : index
    %c0_0 = arith.constant 0 : index
    %0 = vector.load %arg1[%c0, %c0_0] : memref<128x8xf32, #tpu.memory_space<vmem>>, vector<128x8xf32>
    %c0_1 = arith.constant 0 : index
    %c0_2 = arith.constant 0 : index
    %1 = vector.load %arg2[%c0_1, %c0_2] : memref<8x32xf32, #tpu.memory_space<vmem>>, vector<8x32xf32>
    %cst = arith.constant dense<0.000000e+00> : vector<128x32xf32>
    %2 = tpu.matmul %0, %1, %cst {dimension_numbers = #tpu.dot_dimension_numbers<[1], [0], [0], [1], [0, 0, 1, 1], [], []>} : vector<128x8xf32>, vector<8x32xf32>, vector<128x32xf32> -> vector<128x32xf32>
    %c0_3 = arith.constant 0 : index
    %c0_4 = arith.constant 0 : index
    %3 = vector.load %arg3[%c0_3, %c0_4] : memref<1x32xf32, #tpu.memory_space<vmem>>, vector<1x32xf32>
    %4 = vector.broadcast %3 : vector<1x32xf32> to vector<128x32xf32>
    %5 = arith.addf %2, %4 : vector<128x32xf32>
    %cst_5 = arith.constant 0.000000e+00 : f32
    %6 = vector.broadcast %cst_5 : f32 to vector<128x32xf32>
    %7 = arith.maximumf %5, %6 : vector<128x32xf32>
    %c0_6 = arith.constant 0 : index
    %c0_7 = arith.constant 0 : index
    %8 = vector.load %arg4[%c0_6, %c0_7] : memref<32x16xf32, #tpu.memory_space<vmem>>, vector<32x16xf32>
    %cst_8 = arith.constant dense<0.000000e+00> : vector<128x16xf32>
    %9 = tpu.matmul %7, %8, %cst_8 {dimension_numbers = #tpu.dot_dimension_numbers<[1], [0], [0], [1], [0, 0, 1, 1], [], []>} : vector<128x32xf32>, vector<32x16xf32>, vector<128x16xf32> -> vector<128x16xf32>
    %c0_9 = arith.constant 0 : index
    %c0_10 = arith.constant 0 : index
    %10 = vector.load %arg5[%c0_9, %c0_10] : memref<1x16xf32, #tpu.memory_space<vmem>>, vector<1x16xf32>
    %11 = vector.broadcast %10 : vector<1x16xf32> to vector<128x16xf32>
    %12 = arith.addf %9, %11 : vector<128x16xf32>
    %cst_11 = arith.constant 0.000000e+00 : f32
    %13 = vector.broadcast %cst_11 : f32 to vector<128x16xf32>
    %14 = arith.maximumf %12, %13 : vector<128x16xf32>
    %c0_12 = arith.constant 0 : index
    %c0_13 = arith.constant 0 : index
    %15 = vector.load %arg6[%c0_12, %c0_13] : memref<128x16xf32, #tpu.memory_space<vmem>>, vector<128x16xf32>
    tpu.vector_store %arg6[%c0_12, %c0_13], %14 {strides = array<i32>} : memref<128x16xf32, #tpu.memory_space<vmem>>, vector<128x16xf32>,
    return
  }
  func.func @transform_0(%arg0: i32) -> (i32, i32) {
    %c0_i32 = arith.constant 0 : i32
    %c0_i32_0 = arith.constant 0 : i32
    return %arg0, %c0_i32 : i32, i32
  }
  func.func @transform_1(%arg0: i32) -> (i32, i32) {
    %c0_i32 = arith.constant 0 : i32
    %c0_i32_0 = arith.constant 0 : i32
    %c0_i32_1 = arith.constant 0 : i32
    return %c0_i32, %c0_i32_0 : i32, i32
  }
  func.func @transform_2(%arg0: i32) -> (i32, i32) {
    %c0_i32 = arith.constant 0 : i32
    %c0_i32_0 = arith.constant 0 : i32
    %c0_i32_1 = arith.constant 0 : i32
    return %c0_i32, %c0_i32_0 : i32, i32
  }
  func.func @transform_3(%arg0: i32) -> (i32, i32) {
    %c0_i32 = arith.constant 0 : i32
    %c0_i32_0 = arith.constant 0 : i32
    %c0_i32_1 = arith.constant 0 : i32
    return %c0_i32, %c0_i32_0 : i32, i32
  }
  func.func @transform_4(%arg0: i32) -> (i32, i32) {
    %c0_i32 = arith.constant 0 : i32
    %c0_i32_0 = arith.constant 0 : i32
    %c0_i32_1 = arith.constant 0 : i32
    return %c0_i32, %c0_i32_0 : i32, i32
  }
  func.func @transform_5(%arg0: i32) -> (i32, i32) {
    %c0_i32 = arith.constant 0 : i32
    %c0_i32_0 = arith.constant 0 : i32
    return %arg0, %c0_i32 : i32, i32
  }
}

module attributes {stable_mosaic.version = 11 : i64} {
  func.func @_bond_update_kernel(%arg0: i32, %arg1: memref<128x16xf32, #tpu.memory_space<vmem>>, %arg2: memref<128x16xf32, #tpu.memory_space<vmem>>, %arg3: memref<128x16xf32, #tpu.memory_space<vmem>>, %arg4: memref<128x16xf32, #tpu.memory_space<vmem>>, %arg5: memref<128x16xf32, #tpu.memory_space<vmem>>, %arg6: memref<16x32xf32, #tpu.memory_space<vmem>>, %arg7: memref<16x32xf32, #tpu.memory_space<vmem>>, %arg8: memref<16x32xf32, #tpu.memory_space<vmem>>, %arg9: memref<16x32xf32, #tpu.memory_space<vmem>>, %arg10: memref<1x32xf32, #tpu.memory_space<vmem>>, %arg11: memref<32x32xf32, #tpu.memory_space<vmem>>, %arg12: memref<1x32xf32, #tpu.memory_space<vmem>>, %arg13: memref<32x16xf32, #tpu.memory_space<vmem>>, %arg14: memref<1x16xf32, #tpu.memory_space<vmem>>, %arg15: memref<128x16xf32, #tpu.memory_space<vmem>>, %arg16: memref<128x16xf32, #tpu.memory_space<vmem>>) attributes {dimension_semantics = [#tpu.dimension_semantics<parallel>], iteration_bounds = array<i64: 1>, scalar_prefetch = 0 : i64, scratch_operands = 0 : i64, tpu.core_type = #tpu.core_type<tc>, window_params = [{transform_indices = @transform_0, window_bounds = array<i64: 128, 16>}, {transform_indices = @transform_1, window_bounds = array<i64: 128, 16>}, {transform_indices = @transform_2, window_bounds = array<i64: 128, 16>}, {transform_indices = @transform_3, window_bounds = array<i64: 128, 16>}, {transform_indices = @transform_4, window_bounds = array<i64: 128, 16>}, {pipeline_mode = #tpu.pipeline_mode<synchronous>, transform_indices = @transform_5, window_bounds = array<i64: 16, 32>}, {pipeline_mode = #tpu.pipeline_mode<synchronous>, transform_indices = @transform_6, window_bounds = array<i64: 16, 32>}, {pipeline_mode = #tpu.pipeline_mode<synchronous>, transform_indices = @transform_7, window_bounds = array<i64: 16, 32>}, {pipeline_mode = #tpu.pipeline_mode<synchronous>, transform_indices = @transform_8, window_bounds = array<i64: 16, 32>}, {pipeline_mode = #tpu.pipeline_mode<synchronous>, transform_indices = @transform_9, window_bounds = array<i64: 1, 32>}, {pipeline_mode = #tpu.pipeline_mode<synchronous>, transform_indices = @transform_10, window_bounds = array<i64: 32, 32>}, {pipeline_mode = #tpu.pipeline_mode<synchronous>, transform_indices = @transform_11, window_bounds = array<i64: 1, 32>}, {pipeline_mode = #tpu.pipeline_mode<synchronous>, transform_indices = @transform_12, window_bounds = array<i64: 32, 16>}, {pipeline_mode = #tpu.pipeline_mode<synchronous>, transform_indices = @transform_13, window_bounds = array<i64: 1, 16>}, {transform_indices = @transform_14, window_bounds = array<i64: 128, 16>}, {transform_indices = @transform_15, window_bounds = array<i64: 128, 16>}]} {
    %c0 = arith.constant 0 : index
    %c0_0 = arith.constant 0 : index
    %0 = vector.load %arg1[%c0, %c0_0] : memref<128x16xf32, #tpu.memory_space<vmem>>, vector<128x16xf32>
    %c0_1 = arith.constant 0 : index
    %c0_2 = arith.constant 0 : index
    %1 = vector.load %arg6[%c0_1, %c0_2] : memref<16x32xf32, #tpu.memory_space<vmem>>, vector<16x32xf32>
    %cst = arith.constant dense<0.000000e+00> : vector<128x32xf32>
    %2 = tpu.matmul %0, %1, %cst {dimension_numbers = #tpu.dot_dimension_numbers<[1], [0], [0], [1], [0, 0, 1, 1], [], []>} : vector<128x16xf32>, vector<16x32xf32>, vector<128x32xf32> -> vector<128x32xf32>
    %c0_3 = arith.constant 0 : index
    %c0_4 = arith.constant 0 : index
    %3 = vector.load %arg2[%c0_3, %c0_4] : memref<128x16xf32, #tpu.memory_space<vmem>>, vector<128x16xf32>
    %c0_5 = arith.constant 0 : index
    %c0_6 = arith.constant 0 : index
    %4 = vector.load %arg7[%c0_5, %c0_6] : memref<16x32xf32, #tpu.memory_space<vmem>>, vector<16x32xf32>
    %cst_7 = arith.constant dense<0.000000e+00> : vector<128x32xf32>
    %5 = tpu.matmul %3, %4, %cst_7 {dimension_numbers = #tpu.dot_dimension_numbers<[1], [0], [0], [1], [0, 0, 1, 1], [], []>} : vector<128x16xf32>, vector<16x32xf32>, vector<128x32xf32> -> vector<128x32xf32>
    %6 = arith.addf %2, %5 : vector<128x32xf32>
    %c0_8 = arith.constant 0 : index
    %c0_9 = arith.constant 0 : index
    %7 = vector.load %arg3[%c0_8, %c0_9] : memref<128x16xf32, #tpu.memory_space<vmem>>, vector<128x16xf32>
    %c0_10 = arith.constant 0 : index
    %c0_11 = arith.constant 0 : index
    %8 = vector.load %arg8[%c0_10, %c0_11] : memref<16x32xf32, #tpu.memory_space<vmem>>, vector<16x32xf32>
    %cst_12 = arith.constant dense<0.000000e+00> : vector<128x32xf32>
    %9 = tpu.matmul %7, %8, %cst_12 {dimension_numbers = #tpu.dot_dimension_numbers<[1], [0], [0], [1], [0, 0, 1, 1], [], []>} : vector<128x16xf32>, vector<16x32xf32>, vector<128x32xf32> -> vector<128x32xf32>
    %10 = arith.addf %6, %9 : vector<128x32xf32>
    %c0_13 = arith.constant 0 : index
    %c0_14 = arith.constant 0 : index
    %11 = vector.load %arg4[%c0_13, %c0_14] : memref<128x16xf32, #tpu.memory_space<vmem>>, vector<128x16xf32>
    %c0_15 = arith.constant 0 : index
    %c0_16 = arith.constant 0 : index
    %12 = vector.load %arg9[%c0_15, %c0_16] : memref<16x32xf32, #tpu.memory_space<vmem>>, vector<16x32xf32>
    %cst_17 = arith.constant dense<0.000000e+00> : vector<128x32xf32>
    %13 = tpu.matmul %11, %12, %cst_17 {dimension_numbers = #tpu.dot_dimension_numbers<[1], [0], [0], [1], [0, 0, 1, 1], [], []>} : vector<128x16xf32>, vector<16x32xf32>, vector<128x32xf32> -> vector<128x32xf32>
    %14 = arith.addf %10, %13 : vector<128x32xf32>
    %c0_18 = arith.constant 0 : index
    %c0_19 = arith.constant 0 : index
    %15 = vector.load %arg10[%c0_18, %c0_19] : memref<1x32xf32, #tpu.memory_space<vmem>>, vector<1x32xf32>
    %16 = vector.broadcast %15 : vector<1x32xf32> to vector<128x32xf32>
    %17 = arith.addf %14, %16 : vector<128x32xf32>
    %cst_20 = arith.constant 0.000000e+00 : f32
    %18 = vector.broadcast %cst_20 : f32 to vector<128x32xf32>
    %19 = arith.maximumf %17, %18 : vector<128x32xf32>
    %c0_21 = arith.constant 0 : index
    %c0_22 = arith.constant 0 : index
    %20 = vector.load %arg11[%c0_21, %c0_22] : memref<32x32xf32, #tpu.memory_space<vmem>>, vector<32x32xf32>
    %cst_23 = arith.constant dense<0.000000e+00> : vector<128x32xf32>
    %21 = tpu.matmul %19, %20, %cst_23 {dimension_numbers = #tpu.dot_dimension_numbers<[1], [0], [0], [1], [0, 0, 1, 1], [], []>} : vector<128x32xf32>, vector<32x32xf32>, vector<128x32xf32> -> vector<128x32xf32>
    %c0_24 = arith.constant 0 : index
    %c0_25 = arith.constant 0 : index
    %22 = vector.load %arg12[%c0_24, %c0_25] : memref<1x32xf32, #tpu.memory_space<vmem>>, vector<1x32xf32>
    %23 = vector.broadcast %22 : vector<1x32xf32> to vector<128x32xf32>
    %24 = arith.addf %21, %23 : vector<128x32xf32>
    %cst_26 = arith.constant 0.000000e+00 : f32
    %25 = vector.broadcast %cst_26 : f32 to vector<128x32xf32>
    %26 = arith.maximumf %24, %25 : vector<128x32xf32>
    %c0_27 = arith.constant 0 : index
    %c0_28 = arith.constant 0 : index
    %27 = vector.load %arg13[%c0_27, %c0_28] : memref<32x16xf32, #tpu.memory_space<vmem>>, vector<32x16xf32>
    %cst_29 = arith.constant dense<0.000000e+00> : vector<128x16xf32>
    %28 = tpu.matmul %26, %27, %cst_29 {dimension_numbers = #tpu.dot_dimension_numbers<[1], [0], [0], [1], [0, 0, 1, 1], [], []>} : vector<128x32xf32>, vector<32x16xf32>, vector<128x16xf32> -> vector<128x16xf32>
    %c0_30 = arith.constant 0 : index
    %c0_31 = arith.constant 0 : index
    %29 = vector.load %arg14[%c0_30, %c0_31] : memref<1x16xf32, #tpu.memory_space<vmem>>, vector<1x16xf32>
    %30 = vector.broadcast %29 : vector<1x16xf32> to vector<128x16xf32>
    %31 = arith.addf %28, %30 : vector<128x16xf32>
    %cst_32 = arith.constant 0.000000e+00 : f32
    %32 = vector.broadcast %cst_32 : f32 to vector<128x16xf32>
    %33 = arith.maximumf %31, %32 : vector<128x16xf32>
    %c0_33 = arith.constant 0 : index
    %c0_34 = arith.constant 0 : index
    %34 = vector.load %arg15[%c0_33, %c0_34] : memref<128x16xf32, #tpu.memory_space<vmem>>, vector<128x16xf32>
    tpu.vector_store %arg15[%c0_33, %c0_34], %33 {strides = array<i32>} : memref<128x16xf32, #tpu.memory_space<vmem>>, vector<128x16xf32>,
    %c0_35 = arith.constant 0 : index
    %c0_36 = arith.constant 0 : index
    %35 = vector.load %arg5[%c0_35, %c0_36] : memref<128x16xf32, #tpu.memory_space<vmem>>, vector<128x16xf32>
    %36 = arith.addf %33, %35 : vector<128x16xf32>
    %c0_37 = arith.constant 0 : index
    %c0_38 = arith.constant 0 : index
    %37 = vector.load %arg16[%c0_37, %c0_38] : memref<128x16xf32, #tpu.memory_space<vmem>>, vector<128x16xf32>
    tpu.vector_store %arg16[%c0_37, %c0_38], %36 {strides = array<i32>} : memref<128x16xf32, #tpu.memory_space<vmem>>, vector<128x16xf32>,
    return
  }
  func.func @transform_0(%arg0: i32) -> (i32, i32) {
    %c0_i32 = arith.constant 0 : i32
    %c0_i32_0 = arith.constant 0 : i32
    return %arg0, %c0_i32 : i32, i32
  }
  func.func @transform_1(%arg0: i32) -> (i32, i32) {
    %c0_i32 = arith.constant 0 : i32
    %c0_i32_0 = arith.constant 0 : i32
    return %arg0, %c0_i32 : i32, i32
  }
  func.func @transform_2(%arg0: i32) -> (i32, i32) {
    %c0_i32 = arith.constant 0 : i32
    %c0_i32_0 = arith.constant 0 : i32
    return %arg0, %c0_i32 : i32, i32
  }
  func.func @transform_3(%arg0: i32) -> (i32, i32) {
    %c0_i32 = arith.constant 0 : i32
    %c0_i32_0 = arith.constant 0 : i32
    return %arg0, %c0_i32 : i32, i32
  }
  func.func @transform_4(%arg0: i32) -> (i32, i32) {
    %c0_i32 = arith.constant 0 : i32
    %c0_i32_0 = arith.constant 0 : i32
    return %arg0, %c0_i32 : i32, i32
  }
  func.func @transform_5(%arg0: i32) -> (i32, i32) {
    %c0_i32 = arith.constant 0 : i32
    %c0_i32_0 = arith.constant 0 : i32
    %c0_i32_1 = arith.constant 0 : i32
    return %c0_i32, %c0_i32_0 : i32, i32
  }
  func.func @transform_6(%arg0: i32) -> (i32, i32) {
    %c0_i32 = arith.constant 0 : i32
    %c0_i32_0 = arith.constant 0 : i32
    %c0_i32_1 = arith.constant 0 : i32
    return %c0_i32, %c0_i32_0 : i32, i32
  }
  func.func @transform_7(%arg0: i32) -> (i32, i32) {
    %c0_i32 = arith.constant 0 : i32
    %c0_i32_0 = arith.constant 0 : i32
    %c0_i32_1 = arith.constant 0 : i32
    return %c0_i32, %c0_i32_0 : i32, i32
  }
  func.func @transform_8(%arg0: i32) -> (i32, i32) {
    %c0_i32 = arith.constant 0 : i32
    %c0_i32_0 = arith.constant 0 : i32
    %c0_i32_1 = arith.constant 0 : i32
    return %c0_i32, %c0_i32_0 : i32, i32
  }
  func.func @transform_9(%arg0: i32) -> (i32, i32) {
    %c0_i32 = arith.constant 0 : i32
    %c0_i32_0 = arith.constant 0 : i32
    %c0_i32_1 = arith.constant 0 : i32
    return %c0_i32, %c0_i32_0 : i32, i32
  }
  func.func @transform_10(%arg0: i32) -> (i32, i32) {
    %c0_i32 = arith.constant 0 : i32
    %c0_i32_0 = arith.constant 0 : i32
    %c0_i32_1 = arith.constant 0 : i32
    return %c0_i32, %c0_i32_0 : i32, i32
  }
  func.func @transform_11(%arg0: i32) -> (i32, i32) {
    %c0_i32 = arith.constant 0 : i32
    %c0_i32_0 = arith.constant 0 : i32
    %c0_i32_1 = arith.constant 0 : i32
    return %c0_i32, %c0_i32_0 : i32, i32
  }
  func.func @transform_12(%arg0: i32) -> (i32, i32) {
    %c0_i32 = arith.constant 0 : i32
    %c0_i32_0 = arith.constant 0 : i32
    %c0_i32_1 = arith.constant 0 : i32
    return %c0_i32, %c0_i32_0 : i32, i32
  }
  func.func @transform_13(%arg0: i32) -> (i32, i32) {
    %c0_i32 = arith.constant 0 : i32
    %c0_i32_0 = arith.constant 0 : i32
    %c0_i32_1 = arith.constant 0 : i32
    return %c0_i32, %c0_i32_0 : i32, i32
  }
  func.func @transform_14(%arg0: i32) -> (i32, i32) {
    %c0_i32 = arith.constant 0 : i32
    %c0_i32_0 = arith.constant 0 : i32
    return %arg0, %c0_i32 : i32, i32
  }
  func.func @transform_15(%arg0: i32) -> (i32, i32) {
    %c0_i32 = arith.constant 0 : i32
    %c0_i32_0 = arith.constant 0 : i32
    return %arg0, %c0_i32 : i32, i32
  }
}

module attributes {stable_mosaic.version = 11 : i64} {
  func.func @_site_update_kernel(%arg0: i32, %arg1: i32, %arg2: memref<128x16xf32, #tpu.memory_space<vmem>>, %arg3: memref<1x128xi32, #tpu.memory_space<vmem>>, %arg4: memref<128x16xf32, #tpu.memory_space<vmem>>, %arg5: memref<128x16xf32, #tpu.memory_space<vmem>>, %arg6: memref<128x16xf32, #tpu.memory_space<vmem>>, %arg7: memref<16x32xf32, #tpu.memory_space<vmem>>, %arg8: memref<16x32xf32, #tpu.memory_space<vmem>>, %arg9: memref<16x32xf32, #tpu.memory_space<vmem>>, %arg10: memref<1x32xf32, #tpu.memory_space<vmem>>, %arg11: memref<32x32xf32, #tpu.memory_space<vmem>>, %arg12: memref<1x32xf32, #tpu.memory_space<vmem>>, %arg13: memref<32x16xf32, #tpu.memory_space<vmem>>, %arg14: memref<1x16xf32, #tpu.memory_space<vmem>>, %arg15: memref<128x16xf32, #tpu.memory_space<vmem>>, %arg16: memref<128x16xf32, #tpu.memory_space<vmem>>, %arg17: memref<128x16xf32, #tpu.memory_space<vmem>>, %arg18: memref<128x1xf32, #tpu.memory_space<vmem>>) attributes {dimension_semantics = [#tpu.dimension_semantics<parallel>, #tpu.dimension_semantics<arbitrary>], iteration_bounds = array<i64: 1, 1>, scalar_prefetch = 0 : i64, scratch_operands = 2 : i64, tpu.core_type = #tpu.core_type<tc>, window_params = [{transform_indices = @transform_0, window_bounds = array<i64: 128, 16>}, {transform_indices = @transform_1, window_bounds = array<i64: 1, 128>}, {transform_indices = @transform_2, window_bounds = array<i64: 128, 16>}, {transform_indices = @transform_3, window_bounds = array<i64: 128, 16>}, {transform_indices = @transform_4, window_bounds = array<i64: 128, 16>}, {pipeline_mode = #tpu.pipeline_mode<synchronous>, transform_indices = @transform_5, window_bounds = array<i64: 16, 32>}, {pipeline_mode = #tpu.pipeline_mode<synchronous>, transform_indices = @transform_6, window_bounds = array<i64: 16, 32>}, {pipeline_mode = #tpu.pipeline_mode<synchronous>, transform_indices = @transform_7, window_bounds = array<i64: 16, 32>}, {pipeline_mode = #tpu.pipeline_mode<synchronous>, transform_indices = @transform_8, window_bounds = array<i64: 1, 32>}, {pipeline_mode = #tpu.pipeline_mode<synchronous>, transform_indices = @transform_9, window_bounds = array<i64: 32, 32>}, {pipeline_mode = #tpu.pipeline_mode<synchronous>, transform_indices = @transform_10, window_bounds = array<i64: 1, 32>}, {pipeline_mode = #tpu.pipeline_mode<synchronous>, transform_indices = @transform_11, window_bounds = array<i64: 32, 16>}, {pipeline_mode = #tpu.pipeline_mode<synchronous>, transform_indices = @transform_12, window_bounds = array<i64: 1, 16>}, {transform_indices = @transform_13, window_bounds = array<i64: 128, 16>}, {transform_indices = @transform_14, window_bounds = array<i64: 128, 16>}]} {
    %c0_i32 = arith.constant 0 : i32
    %0 = arith.cmpi eq, %arg1, %c0_i32 : i32
    %1 = arith.extui %0 : i1 to i32
    %c0_i32_0 = arith.constant 0 : i32
    %2 = arith.cmpi ne, %1, %c0_i32_0 : i32
    scf.if %2 {
      %cst_15 = arith.constant 0.000000e+00 : f32
      %25 = vector.broadcast %cst_15 : f32 to vector<128x16xf32>
      %c0_16 = arith.constant 0 : index
      %c0_17 = arith.constant 0 : index
      %26 = vector.load %arg17[%c0_16, %c0_17] : memref<128x16xf32, #tpu.memory_space<vmem>>, vector<128x16xf32>
      tpu.vector_store %arg17[%c0_16, %c0_17], %25 {strides = array<i32>} : memref<128x16xf32, #tpu.memory_space<vmem>>, vector<128x16xf32>,
      %cst_18 = arith.constant 0.000000e+00 : f32
      %27 = vector.broadcast %cst_18 : f32 to vector<128x1xf32>
      %c0_19 = arith.constant 0 : index
      %c0_20 = arith.constant 0 : index
      %28 = vector.load %arg18[%c0_19, %c0_20] : memref<128x1xf32, #tpu.memory_space<vmem>>, vector<128x1xf32>
      tpu.vector_store %arg18[%c0_19, %c0_20], %27 {strides = array<i32>} : memref<128x1xf32, #tpu.memory_space<vmem>>, vector<128x1xf32>,
    } else {
    }
    %3 = tpu.iota {dimensions = array<i32: 0>} : vector<128x128xi32>
    %c128_i32 = arith.constant 128 : i32
    %4 = arith.muli %arg0, %c128_i32 : i32
    %5 = vector.broadcast %4 : i32 to vector<128x128xi32>
    %6 = arith.addi %3, %5 : vector<128x128xi32>
    %c0 = arith.constant 0 : index
    %c0_1 = arith.constant 0 : index
    %7 = vector.load %arg3[%c0, %c0_1] : memref<1x128xi32, #tpu.memory_space<vmem>>, vector<1x128xi32>
    %8 = vector.broadcast %7 : vector<1x128xi32> to vector<128x128xi32>
    %9 = arith.cmpi eq, %8, %6 : vector<128x128xi32>
    %10 = arith.extui %9 : vector<128x128xi1> to vector<128x128xi32>
    %11 = arith.sitofp %10 : vector<128x128xi32> to vector<128x128xf32>
    %c0_2 = arith.constant 0 : index
    %c0_3 = arith.constant 0 : index
    %12 = vector.load %arg17[%c0_2, %c0_3] : memref<128x16xf32, #tpu.memory_space<vmem>>, vector<128x16xf32>
    %c0_4 = arith.constant 0 : index
    %c0_5 = arith.constant 0 : index
    %13 = vector.load %arg2[%c0_4, %c0_5] : memref<128x16xf32, #tpu.memory_space<vmem>>, vector<128x16xf32>
    %cst = arith.constant dense<0.000000e+00> : vector<128x16xf32>
    %14 = tpu.matmul %11, %13, %cst {dimension_numbers = #tpu.dot_dimension_numbers<[1], [0], [0], [1], [0, 0, 1, 1], [], []>} : vector<128x128xf32>, vector<128x16xf32>, vector<128x16xf32> -> vector<128x16xf32>
    %15 = arith.addf %12, %14 : vector<128x16xf32>
    %c0_6 = arith.constant 0 : index
    %c0_7 = arith.constant 0 : index
    %16 = vector.load %arg17[%c0_6, %c0_7] : memref<128x16xf32, #tpu.memory_space<vmem>>, vector<128x16xf32>
    tpu.vector_store %arg17[%c0_6, %c0_7], %15 {strides = array<i32>} : memref<128x16xf32, #tpu.memory_space<vmem>>, vector<128x16xf32>,
    %c0_8 = arith.constant 0 : index
    %c0_9 = arith.constant 0 : index
    %17 = vector.load %arg18[%c0_8, %c0_9] : memref<128x1xf32, #tpu.memory_space<vmem>>, vector<128x1xf32>
    %cst_10 = arith.constant dense<0.000000e+00> : vector<128xf32>
    %18 = vector.multi_reduction <add>, %11, %cst_10 [1] : vector<128x128xf32> to vector<128xf32>
    %19 = vector.shape_cast %18 : vector<128xf32> to vector<128x1xf32>
    %20 = arith.addf %17, %19 : vector<128x1xf32>
    %c0_11 = arith.constant 0 : index
    %c0_12 = arith.constant 0 : index
    %21 = vector.load %arg18[%c0_11, %c0_12] : memref<128x1xf32, #tpu.memory_space<vmem>>, vector<128x1xf32>
    tpu.vector_store %arg18[%c0_11, %c0_12], %20 {strides = array<i32>} : memref<128x1xf32, #tpu.memory_space<vmem>>, vector<128x1xf32>,
    %c0_i32_13 = arith.constant 0 : i32
    %22 = arith.cmpi eq, %arg1, %c0_i32_13 : i32
    %23 = arith.extui %22 : i1 to i32
    %c0_i32_14 = arith.constant 0 : i32
    %24 = arith.cmpi ne, %23, %c0_i32_14 : i32
    scf.if %24 {
      %c0_15 = arith.constant 0 : index
      %c0_16 = arith.constant 0 : index
      %25 = vector.load %arg17[%c0_15, %c0_16] : memref<128x16xf32, #tpu.memory_space<vmem>>, vector<128x16xf32>
      %c0_17 = arith.constant 0 : index
      %c0_18 = arith.constant 0 : index
      %26 = vector.load %arg18[%c0_17, %c0_18] : memref<128x1xf32, #tpu.memory_space<vmem>>, vector<128x1xf32>
      %cst_19 = arith.constant 1.000000e+00 : f32
      %27 = vector.broadcast %cst_19 : f32 to vector<128x1xf32>
      %28 = arith.maximumf %26, %27 : vector<128x1xf32>
      %29 = vector.broadcast %28 : vector<128x1xf32> to vector<128x16xf32>
      %30 = arith.divf %25, %29 : vector<128x16xf32>
      %c0_20 = arith.constant 0 : index
      %c0_21 = arith.constant 0 : index
      %31 = vector.load %arg7[%c0_20, %c0_21] : memref<16x32xf32, #tpu.memory_space<vmem>>, vector<16x32xf32>
      %cst_22 = arith.constant dense<0.000000e+00> : vector<128x32xf32>
      %32 = tpu.matmul %30, %31, %cst_22 {dimension_numbers = #tpu.dot_dimension_numbers<[1], [0], [0], [1], [0, 0, 1, 1], [], []>} : vector<128x16xf32>, vector<16x32xf32>, vector<128x32xf32> -> vector<128x32xf32>
      %c0_23 = arith.constant 0 : index
      %c0_24 = arith.constant 0 : index
      %33 = vector.load %arg4[%c0_23, %c0_24] : memref<128x16xf32, #tpu.memory_space<vmem>>, vector<128x16xf32>
      %c0_25 = arith.constant 0 : index
      %c0_26 = arith.constant 0 : index
      %34 = vector.load %arg8[%c0_25, %c0_26] : memref<16x32xf32, #tpu.memory_space<vmem>>, vector<16x32xf32>
      %cst_27 = arith.constant dense<0.000000e+00> : vector<128x32xf32>
      %35 = tpu.matmul %33, %34, %cst_27 {dimension_numbers = #tpu.dot_dimension_numbers<[1], [0], [0], [1], [0, 0, 1, 1], [], []>} : vector<128x16xf32>, vector<16x32xf32>, vector<128x32xf32> -> vector<128x32xf32>
      %36 = arith.addf %32, %35 : vector<128x32xf32>
      %c0_28 = arith.constant 0 : index
      %c0_29 = arith.constant 0 : index
      %37 = vector.load %arg5[%c0_28, %c0_29] : memref<128x16xf32, #tpu.memory_space<vmem>>, vector<128x16xf32>
      %c0_30 = arith.constant 0 : index
      %c0_31 = arith.constant 0 : index
      %38 = vector.load %arg9[%c0_30, %c0_31] : memref<16x32xf32, #tpu.memory_space<vmem>>, vector<16x32xf32>
      %cst_32 = arith.constant dense<0.000000e+00> : vector<128x32xf32>
      %39 = tpu.matmul %37, %38, %cst_32 {dimension_numbers = #tpu.dot_dimension_numbers<[1], [0], [0], [1], [0, 0, 1, 1], [], []>} : vector<128x16xf32>, vector<16x32xf32>, vector<128x32xf32> -> vector<128x32xf32>
      %40 = arith.addf %36, %39 : vector<128x32xf32>
      %c0_33 = arith.constant 0 : index
      %c0_34 = arith.constant 0 : index
      %41 = vector.load %arg10[%c0_33, %c0_34] : memref<1x32xf32, #tpu.memory_space<vmem>>, vector<1x32xf32>
      %42 = vector.broadcast %41 : vector<1x32xf32> to vector<128x32xf32>
      %43 = arith.addf %40, %42 : vector<128x32xf32>
      %cst_35 = arith.constant 0.000000e+00 : f32
      %44 = vector.broadcast %cst_35 : f32 to vector<128x32xf32>
      %45 = arith.maximumf %43, %44 : vector<128x32xf32>
      %c0_36 = arith.constant 0 : index
      %c0_37 = arith.constant 0 : index
      %46 = vector.load %arg11[%c0_36, %c0_37] : memref<32x32xf32, #tpu.memory_space<vmem>>, vector<32x32xf32>
      %cst_38 = arith.constant dense<0.000000e+00> : vector<128x32xf32>
      %47 = tpu.matmul %45, %46, %cst_38 {dimension_numbers = #tpu.dot_dimension_numbers<[1], [0], [0], [1], [0, 0, 1, 1], [], []>} : vector<128x32xf32>, vector<32x32xf32>, vector<128x32xf32> -> vector<128x32xf32>
      %c0_39 = arith.constant 0 : index
      %c0_40 = arith.constant 0 : index
      %48 = vector.load %arg12[%c0_39, %c0_40] : memref<1x32xf32, #tpu.memory_space<vmem>>, vector<1x32xf32>
      %49 = vector.broadcast %48 : vector<1x32xf32> to vector<128x32xf32>
      %50 = arith.addf %47, %49 : vector<128x32xf32>
      %cst_41 = arith.constant 0.000000e+00 : f32
      %51 = vector.broadcast %cst_41 : f32 to vector<128x32xf32>
      %52 = arith.maximumf %50, %51 : vector<128x32xf32>
      %c0_42 = arith.constant 0 : index
      %c0_43 = arith.constant 0 : index
      %53 = vector.load %arg13[%c0_42, %c0_43] : memref<32x16xf32, #tpu.memory_space<vmem>>, vector<32x16xf32>
      %cst_44 = arith.constant dense<0.000000e+00> : vector<128x16xf32>
      %54 = tpu.matmul %52, %53, %cst_44 {dimension_numbers = #tpu.dot_dimension_numbers<[1], [0], [0], [1], [0, 0, 1, 1], [], []>} : vector<128x32xf32>, vector<32x16xf32>, vector<128x16xf32> -> vector<128x16xf32>
      %c0_45 = arith.constant 0 : index
      %c0_46 = arith.constant 0 : index
      %55 = vector.load %arg14[%c0_45, %c0_46] : memref<1x16xf32, #tpu.memory_space<vmem>>, vector<1x16xf32>
      %56 = vector.broadcast %55 : vector<1x16xf32> to vector<128x16xf32>
      %57 = arith.addf %54, %56 : vector<128x16xf32>
      %cst_47 = arith.constant 0.000000e+00 : f32
      %58 = vector.broadcast %cst_47 : f32 to vector<128x16xf32>
      %59 = arith.maximumf %57, %58 : vector<128x16xf32>
      %c0_48 = arith.constant 0 : index
      %c0_49 = arith.constant 0 : index
      %60 = vector.load %arg15[%c0_48, %c0_49] : memref<128x16xf32, #tpu.memory_space<vmem>>, vector<128x16xf32>
      tpu.vector_store %arg15[%c0_48, %c0_49], %59 {strides = array<i32>} : memref<128x16xf32, #tpu.memory_space<vmem>>, vector<128x16xf32>,
      %c0_50 = arith.constant 0 : index
      %c0_51 = arith.constant 0 : index
      %61 = vector.load %arg6[%c0_50, %c0_51] : memref<128x16xf32, #tpu.memory_space<vmem>>, vector<128x16xf32>
      %62 = arith.addf %59, %61 : vector<128x16xf32>
      %c0_52 = arith.constant 0 : index
      %c0_53 = arith.constant 0 : index
      %63 = vector.load %arg16[%c0_52, %c0_53] : memref<128x16xf32, #tpu.memory_space<vmem>>, vector<128x16xf32>
      tpu.vector_store %arg16[%c0_52, %c0_53], %62 {strides = array<i32>} : memref<128x16xf32, #tpu.memory_space<vmem>>, vector<128x16xf32>,
    } else {
    }
    return
  }
  func.func @transform_0(%arg0: i32, %arg1: i32) -> (i32, i32) {
    %c0_i32 = arith.constant 0 : i32
    %c0_i32_0 = arith.constant 0 : i32
    return %arg1, %c0_i32 : i32, i32
  }
  func.func @transform_1(%arg0: i32, %arg1: i32) -> (i32, i32) {
    %c0_i32 = arith.constant 0 : i32
    %c0_i32_0 = arith.constant 0 : i32
    return %c0_i32, %arg1 : i32, i32
  }
  func.func @transform_2(%arg0: i32, %arg1: i32) -> (i32, i32) {
    %c0_i32 = arith.constant 0 : i32
    %c0_i32_0 = arith.constant 0 : i32
    return %arg0, %c0_i32 : i32, i32
  }
  func.func @transform_3(%arg0: i32, %arg1: i32) -> (i32, i32) {
    %c0_i32 = arith.constant 0 : i32
    %c0_i32_0 = arith.constant 0 : i32
    return %arg0, %c0_i32 : i32, i32
  }
  func.func @transform_4(%arg0: i32, %arg1: i32) -> (i32, i32) {
    %c0_i32 = arith.constant 0 : i32
    %c0_i32_0 = arith.constant 0 : i32
    return %arg0, %c0_i32 : i32, i32
  }
  func.func @transform_5(%arg0: i32, %arg1: i32) -> (i32, i32) {
    %c0_i32 = arith.constant 0 : i32
    %c0_i32_0 = arith.constant 0 : i32
    %c0_i32_1 = arith.constant 0 : i32
    return %c0_i32, %c0_i32_0 : i32, i32
  }
  func.func @transform_6(%arg0: i32, %arg1: i32) -> (i32, i32) {
    %c0_i32 = arith.constant 0 : i32
    %c0_i32_0 = arith.constant 0 : i32
    %c0_i32_1 = arith.constant 0 : i32
    return %c0_i32, %c0_i32_0 : i32, i32
  }
  func.func @transform_7(%arg0: i32, %arg1: i32) -> (i32, i32) {
    %c0_i32 = arith.constant 0 : i32
    %c0_i32_0 = arith.constant 0 : i32
    %c0_i32_1 = arith.constant 0 : i32
    return %c0_i32, %c0_i32_0 : i32, i32
  }
  func.func @transform_8(%arg0: i32, %arg1: i32) -> (i32, i32) {
    %c0_i32 = arith.constant 0 : i32
    %c0_i32_0 = arith.constant 0 : i32
    %c0_i32_1 = arith.constant 0 : i32
    return %c0_i32, %c0_i32_0 : i32, i32
  }
  func.func @transform_9(%arg0: i32, %arg1: i32) -> (i32, i32) {
    %c0_i32 = arith.constant 0 : i32
    %c0_i32_0 = arith.constant 0 : i32
    %c0_i32_1 = arith.constant 0 : i32
    return %c0_i32, %c0_i32_0 : i32, i32
  }
  func.func @transform_10(%arg0: i32, %arg1: i32) -> (i32, i32) {
    %c0_i32 = arith.constant 0 : i32
    %c0_i32_0 = arith.constant 0 : i32
    %c0_i32_1 = arith.constant 0 : i32
    return %c0_i32, %c0_i32_0 : i32, i32
  }
  func.func @transform_11(%arg0: i32, %arg1: i32) -> (i32, i32) {
    %c0_i32 = arith.constant 0 : i32
    %c0_i32_0 = arith.constant 0 : i32
    %c0_i32_1 = arith.constant 0 : i32
    return %c0_i32, %c0_i32_0 : i32, i32
  }
  func.func @transform_12(%arg0: i32, %arg1: i32) -> (i32, i32) {
    %c0_i32 = arith.constant 0 : i32
    %c0_i32_0 = arith.constant 0 : i32
    %c0_i32_1 = arith.constant 0 : i32
    return %c0_i32, %c0_i32_0 : i32, i32
  }
  func.func @transform_13(%arg0: i32, %arg1: i32) -> (i32, i32) {
    %c0_i32 = arith.constant 0 : i32
    %c0_i32_0 = arith.constant 0 : i32
    return %arg0, %c0_i32 : i32, i32
  }
  func.func @transform_14(%arg0: i32, %arg1: i32) -> (i32, i32) {
    %c0_i32 = arith.constant 0 : i32
    %c0_i32_0 = arith.constant 0 : i32
    return %arg0, %c0_i32 : i32, i32
  }
}

module attributes {stable_mosaic.version = 11 : i64} {
  func.func @_state_update_kernel(%arg0: i32, %arg1: i32, %arg2: memref<128x16xf32, #tpu.memory_space<vmem>>, %arg3: memref<1x128xi32, #tpu.memory_space<vmem>>, %arg4: memref<128x16xf32, #tpu.memory_space<vmem>>, %arg5: memref<1x128xi32, #tpu.memory_space<vmem>>, %arg6: memref<8x16xf32, #tpu.memory_space<vmem>>, %arg7: memref<8x16xf32, #tpu.memory_space<vmem>>, %arg8: memref<16x32xf32, #tpu.memory_space<vmem>>, %arg9: memref<16x32xf32, #tpu.memory_space<vmem>>, %arg10: memref<16x32xf32, #tpu.memory_space<vmem>>, %arg11: memref<1x32xf32, #tpu.memory_space<vmem>>, %arg12: memref<32x32xf32, #tpu.memory_space<vmem>>, %arg13: memref<1x32xf32, #tpu.memory_space<vmem>>, %arg14: memref<32x16xf32, #tpu.memory_space<vmem>>, %arg15: memref<1x16xf32, #tpu.memory_space<vmem>>, %arg16: memref<8x16xf32, #tpu.memory_space<vmem>>, %arg17: memref<8x16xf32, #tpu.memory_space<vmem>>, %arg18: memref<8x1xf32, #tpu.memory_space<vmem>>, %arg19: memref<8x16xf32, #tpu.memory_space<vmem>>, %arg20: memref<8x1xf32, #tpu.memory_space<vmem>>) attributes {dimension_semantics = [#tpu.dimension_semantics<parallel>, #tpu.dimension_semantics<arbitrary>], iteration_bounds = array<i64: 1, 1>, scalar_prefetch = 0 : i64, scratch_operands = 4 : i64, tpu.core_type = #tpu.core_type<tc>, window_params = [{transform_indices = @transform_0, window_bounds = array<i64: 128, 16>}, {transform_indices = @transform_1, window_bounds = array<i64: 1, 128>}, {transform_indices = @transform_2, window_bounds = array<i64: 128, 16>}, {transform_indices = @transform_3, window_bounds = array<i64: 1, 128>}, {transform_indices = @transform_4, window_bounds = array<i64: 8, 16>}, {transform_indices = @transform_5, window_bounds = array<i64: 8, 16>}, {pipeline_mode = #tpu.pipeline_mode<synchronous>, transform_indices = @transform_6, window_bounds = array<i64: 16, 32>}, {pipeline_mode = #tpu.pipeline_mode<synchronous>, transform_indices = @transform_7, window_bounds = array<i64: 16, 32>}, {pipeline_mode = #tpu.pipeline_mode<synchronous>, transform_indices = @transform_8, window_bounds = array<i64: 16, 32>}, {pipeline_mode = #tpu.pipeline_mode<synchronous>, transform_indices = @transform_9, window_bounds = array<i64: 1, 32>}, {pipeline_mode = #tpu.pipeline_mode<synchronous>, transform_indices = @transform_10, window_bounds = array<i64: 32, 32>}, {pipeline_mode = #tpu.pipeline_mode<synchronous>, transform_indices = @transform_11, window_bounds = array<i64: 1, 32>}, {pipeline_mode = #tpu.pipeline_mode<synchronous>, transform_indices = @transform_12, window_bounds = array<i64: 32, 16>}, {pipeline_mode = #tpu.pipeline_mode<synchronous>, transform_indices = @transform_13, window_bounds = array<i64: 1, 16>}, {transform_indices = @transform_14, window_bounds = array<i64: 8, 16>}]} {
    %c0_i32 = arith.constant 0 : i32
    %0 = arith.cmpi eq, %arg1, %c0_i32 : i32
    %1 = arith.extui %0 : i1 to i32
    %c0_i32_0 = arith.constant 0 : i32
    %2 = arith.cmpi ne, %1, %c0_i32_0 : i32
    scf.if %2 {
      %cst_29 = arith.constant 0.000000e+00 : f32
      %40 = vector.broadcast %cst_29 : f32 to vector<8x16xf32>
      %c0_30 = arith.constant 0 : index
      %c0_31 = arith.constant 0 : index
      %41 = vector.load %arg17[%c0_30, %c0_31] : memref<8x16xf32, #tpu.memory_space<vmem>>, vector<8x16xf32>
      tpu.vector_store %arg17[%c0_30, %c0_31], %40 {strides = array<i32>} : memref<8x16xf32, #tpu.memory_space<vmem>>, vector<8x16xf32>,
      %cst_32 = arith.constant 0.000000e+00 : f32
      %42 = vector.broadcast %cst_32 : f32 to vector<8x1xf32>
      %c0_33 = arith.constant 0 : index
      %c0_34 = arith.constant 0 : index
      %43 = vector.load %arg18[%c0_33, %c0_34] : memref<8x1xf32, #tpu.memory_space<vmem>>, vector<8x1xf32>
      tpu.vector_store %arg18[%c0_33, %c0_34], %42 {strides = array<i32>} : memref<8x1xf32, #tpu.memory_space<vmem>>, vector<8x1xf32>,
      %cst_35 = arith.constant 0.000000e+00 : f32
      %44 = vector.broadcast %cst_35 : f32 to vector<8x16xf32>
      %c0_36 = arith.constant 0 : index
      %c0_37 = arith.constant 0 : index
      %45 = vector.load %arg19[%c0_36, %c0_37] : memref<8x16xf32, #tpu.memory_space<vmem>>, vector<8x16xf32>
      tpu.vector_store %arg19[%c0_36, %c0_37], %44 {strides = array<i32>} : memref<8x16xf32, #tpu.memory_space<vmem>>, vector<8x16xf32>,
      %cst_38 = arith.constant 0.000000e+00 : f32
      %46 = vector.broadcast %cst_38 : f32 to vector<8x1xf32>
      %c0_39 = arith.constant 0 : index
      %c0_40 = arith.constant 0 : index
      %47 = vector.load %arg20[%c0_39, %c0_40] : memref<8x1xf32, #tpu.memory_space<vmem>>, vector<8x1xf32>
      tpu.vector_store %arg20[%c0_39, %c0_40], %46 {strides = array<i32>} : memref<8x1xf32, #tpu.memory_space<vmem>>, vector<8x1xf32>,
    } else {
    }
    %3 = tpu.iota {dimensions = array<i32: 0>} : vector<8x128xi32>
    %c8_i32 = arith.constant 8 : i32
    %4 = arith.muli %arg0, %c8_i32 : i32
    %5 = vector.broadcast %4 : i32 to vector<8x128xi32>
    %6 = arith.addi %3, %5 : vector<8x128xi32>
    %c0 = arith.constant 0 : index
    %c0_1 = arith.constant 0 : index
    %7 = vector.load %arg3[%c0, %c0_1] : memref<1x128xi32, #tpu.memory_space<vmem>>, vector<1x128xi32>
    %8 = vector.broadcast %7 : vector<1x128xi32> to vector<8x128xi32>
    %9 = arith.cmpi eq, %8, %6 : vector<8x128xi32>
    %10 = arith.extui %9 : vector<8x128xi1> to vector<8x128xi32>
    %11 = arith.sitofp %10 : vector<8x128xi32> to vector<8x128xf32>
    %c0_2 = arith.constant 0 : index
    %c0_3 = arith.constant 0 : index
    %12 = vector.load %arg17[%c0_2, %c0_3] : memref<8x16xf32, #tpu.memory_space<vmem>>, vector<8x16xf32>
    %c0_4 = arith.constant 0 : index
    %c0_5 = arith.constant 0 : index
    %13 = vector.load %arg2[%c0_4, %c0_5] : memref<128x16xf32, #tpu.memory_space<vmem>>, vector<128x16xf32>
    %cst = arith.constant dense<0.000000e+00> : vector<8x16xf32>
    %14 = tpu.matmul %11, %13, %cst {dimension_numbers = #tpu.dot_dimension_numbers<[1], [0], [0], [1], [0, 0, 1, 1], [], []>} : vector<8x128xf32>, vector<128x16xf32>, vector<8x16xf32> -> vector<8x16xf32>
    %15 = arith.addf %12, %14 : vector<8x16xf32>
    %c0_6 = arith.constant 0 : index
    %c0_7 = arith.constant 0 : index
    %16 = vector.load %arg17[%c0_6, %c0_7] : memref<8x16xf32, #tpu.memory_space<vmem>>, vector<8x16xf32>
    tpu.vector_store %arg17[%c0_6, %c0_7], %15 {strides = array<i32>} : memref<8x16xf32, #tpu.memory_space<vmem>>, vector<8x16xf32>,
    %c0_8 = arith.constant 0 : index
    %c0_9 = arith.constant 0 : index
    %17 = vector.load %arg18[%c0_8, %c0_9] : memref<8x1xf32, #tpu.memory_space<vmem>>, vector<8x1xf32>
    %cst_10 = arith.constant dense<0.000000e+00> : vector<8xf32>
    %18 = vector.multi_reduction <add>, %11, %cst_10 [1] : vector<8x128xf32> to vector<8xf32>
    %19 = vector.shape_cast %18 : vector<8xf32> to vector<8x1xf32>
    %20 = arith.addf %17, %19 : vector<8x1xf32>
    %c0_11 = arith.constant 0 : index
    %c0_12 = arith.constant 0 : index
    %21 = vector.load %arg18[%c0_11, %c0_12] : memref<8x1xf32, #tpu.memory_space<vmem>>, vector<8x1xf32>
    tpu.vector_store %arg18[%c0_11, %c0_12], %20 {strides = array<i32>} : memref<8x1xf32, #tpu.memory_space<vmem>>, vector<8x1xf32>,
    %c0_13 = arith.constant 0 : index
    %c0_14 = arith.constant 0 : index
    %22 = vector.load %arg5[%c0_13, %c0_14] : memref<1x128xi32, #tpu.memory_space<vmem>>, vector<1x128xi32>
    %23 = vector.broadcast %22 : vector<1x128xi32> to vector<8x128xi32>
    %24 = arith.cmpi eq, %23, %6 : vector<8x128xi32>
    %25 = arith.extui %24 : vector<8x128xi1> to vector<8x128xi32>
    %26 = arith.sitofp %25 : vector<8x128xi32> to vector<8x128xf32>
    %c0_15 = arith.constant 0 : index
    %c0_16 = arith.constant 0 : index
    %27 = vector.load %arg19[%c0_15, %c0_16] : memref<8x16xf32, #tpu.memory_space<vmem>>, vector<8x16xf32>
    %c0_17 = arith.constant 0 : index
    %c0_18 = arith.constant 0 : index
    %28 = vector.load %arg4[%c0_17, %c0_18] : memref<128x16xf32, #tpu.memory_space<vmem>>, vector<128x16xf32>
    %cst_19 = arith.constant dense<0.000000e+00> : vector<8x16xf32>
    %29 = tpu.matmul %26, %28, %cst_19 {dimension_numbers = #tpu.dot_dimension_numbers<[1], [0], [0], [1], [0, 0, 1, 1], [], []>} : vector<8x128xf32>, vector<128x16xf32>, vector<8x16xf32> -> vector<8x16xf32>
    %30 = arith.addf %27, %29 : vector<8x16xf32>
    %c0_20 = arith.constant 0 : index
    %c0_21 = arith.constant 0 : index
    %31 = vector.load %arg19[%c0_20, %c0_21] : memref<8x16xf32, #tpu.memory_space<vmem>>, vector<8x16xf32>
    tpu.vector_store %arg19[%c0_20, %c0_21], %30 {strides = array<i32>} : memref<8x16xf32, #tpu.memory_space<vmem>>, vector<8x16xf32>,
    %c0_22 = arith.constant 0 : index
    %c0_23 = arith.constant 0 : index
    %32 = vector.load %arg20[%c0_22, %c0_23] : memref<8x1xf32, #tpu.memory_space<vmem>>, vector<8x1xf32>
    %cst_24 = arith.constant dense<0.000000e+00> : vector<8xf32>
    %33 = vector.multi_reduction <add>, %26, %cst_24 [1] : vector<8x128xf32> to vector<8xf32>
    %34 = vector.shape_cast %33 : vector<8xf32> to vector<8x1xf32>
    %35 = arith.addf %32, %34 : vector<8x1xf32>
    %c0_25 = arith.constant 0 : index
    %c0_26 = arith.constant 0 : index
    %36 = vector.load %arg20[%c0_25, %c0_26] : memref<8x1xf32, #tpu.memory_space<vmem>>, vector<8x1xf32>
    tpu.vector_store %arg20[%c0_25, %c0_26], %35 {strides = array<i32>} : memref<8x1xf32, #tpu.memory_space<vmem>>, vector<8x1xf32>,
    %c0_i32_27 = arith.constant 0 : i32
    %37 = arith.cmpi eq, %arg1, %c0_i32_27 : i32
    %38 = arith.extui %37 : i1 to i32
    %c0_i32_28 = arith.constant 0 : i32
    %39 = arith.cmpi ne, %38, %c0_i32_28 : i32
    scf.if %39 {
      %c0_29 = arith.constant 0 : index
      %c0_30 = arith.constant 0 : index
      %40 = vector.load %arg17[%c0_29, %c0_30] : memref<8x16xf32, #tpu.memory_space<vmem>>, vector<8x16xf32>
      %c0_31 = arith.constant 0 : index
      %c0_32 = arith.constant 0 : index
      %41 = vector.load %arg18[%c0_31, %c0_32] : memref<8x1xf32, #tpu.memory_space<vmem>>, vector<8x1xf32>
      %cst_33 = arith.constant 1.000000e+00 : f32
      %42 = vector.broadcast %cst_33 : f32 to vector<8x1xf32>
      %43 = arith.maximumf %41, %42 : vector<8x1xf32>
      %44 = vector.broadcast %43 : vector<8x1xf32> to vector<8x16xf32>
      %45 = arith.divf %40, %44 : vector<8x16xf32>
      %c0_34 = arith.constant 0 : index
      %c0_35 = arith.constant 0 : index
      %46 = vector.load %arg19[%c0_34, %c0_35] : memref<8x16xf32, #tpu.memory_space<vmem>>, vector<8x16xf32>
      %c0_36 = arith.constant 0 : index
      %c0_37 = arith.constant 0 : index
      %47 = vector.load %arg20[%c0_36, %c0_37] : memref<8x1xf32, #tpu.memory_space<vmem>>, vector<8x1xf32>
      %cst_38 = arith.constant 1.000000e+00 : f32
      %48 = vector.broadcast %cst_38 : f32 to vector<8x1xf32>
      %49 = arith.maximumf %47, %48 : vector<8x1xf32>
      %50 = vector.broadcast %49 : vector<8x1xf32> to vector<8x16xf32>
      %51 = arith.divf %46, %50 : vector<8x16xf32>
      %c0_39 = arith.constant 0 : index
      %c0_40 = arith.constant 0 : index
      %52 = vector.load %arg8[%c0_39, %c0_40] : memref<16x32xf32, #tpu.memory_space<vmem>>, vector<16x32xf32>
      %cst_41 = arith.constant dense<0.000000e+00> : vector<8x32xf32>
      %53 = tpu.matmul %45, %52, %cst_41 {dimension_numbers = #tpu.dot_dimension_numbers<[1], [0], [0], [1], [0, 0, 1, 1], [], []>} : vector<8x16xf32>, vector<16x32xf32>, vector<8x32xf32> -> vector<8x32xf32>
      %c0_42 = arith.constant 0 : index
      %c0_43 = arith.constant 0 : index
      %54 = vector.load %arg9[%c0_42, %c0_43] : memref<16x32xf32, #tpu.memory_space<vmem>>, vector<16x32xf32>
      %cst_44 = arith.constant dense<0.000000e+00> : vector<8x32xf32>
      %55 = tpu.matmul %51, %54, %cst_44 {dimension_numbers = #tpu.dot_dimension_numbers<[1], [0], [0], [1], [0, 0, 1, 1], [], []>} : vector<8x16xf32>, vector<16x32xf32>, vector<8x32xf32> -> vector<8x32xf32>
      %56 = arith.addf %53, %55 : vector<8x32xf32>
      %c0_45 = arith.constant 0 : index
      %c0_46 = arith.constant 0 : index
      %57 = vector.load %arg6[%c0_45, %c0_46] : memref<8x16xf32, #tpu.memory_space<vmem>>, vector<8x16xf32>
      %c0_47 = arith.constant 0 : index
      %c0_48 = arith.constant 0 : index
      %58 = vector.load %arg10[%c0_47, %c0_48] : memref<16x32xf32, #tpu.memory_space<vmem>>, vector<16x32xf32>
      %cst_49 = arith.constant dense<0.000000e+00> : vector<8x32xf32>
      %59 = tpu.matmul %57, %58, %cst_49 {dimension_numbers = #tpu.dot_dimension_numbers<[1], [0], [0], [1], [0, 0, 1, 1], [], []>} : vector<8x16xf32>, vector<16x32xf32>, vector<8x32xf32> -> vector<8x32xf32>
      %60 = arith.addf %56, %59 : vector<8x32xf32>
      %c0_50 = arith.constant 0 : index
      %c0_51 = arith.constant 0 : index
      %61 = vector.load %arg11[%c0_50, %c0_51] : memref<1x32xf32, #tpu.memory_space<vmem>>, vector<1x32xf32>
      %62 = vector.broadcast %61 : vector<1x32xf32> to vector<8x32xf32>
      %63 = arith.addf %60, %62 : vector<8x32xf32>
      %cst_52 = arith.constant 0.000000e+00 : f32
      %64 = vector.broadcast %cst_52 : f32 to vector<8x32xf32>
      %65 = arith.maximumf %63, %64 : vector<8x32xf32>
      %c0_53 = arith.constant 0 : index
      %c0_54 = arith.constant 0 : index
      %66 = vector.load %arg12[%c0_53, %c0_54] : memref<32x32xf32, #tpu.memory_space<vmem>>, vector<32x32xf32>
      %cst_55 = arith.constant dense<0.000000e+00> : vector<8x32xf32>
      %67 = tpu.matmul %65, %66, %cst_55 {dimension_numbers = #tpu.dot_dimension_numbers<[1], [0], [0], [1], [0, 0, 1, 1], [], []>} : vector<8x32xf32>, vector<32x32xf32>, vector<8x32xf32> -> vector<8x32xf32>
      %c0_56 = arith.constant 0 : index
      %c0_57 = arith.constant 0 : index
      %68 = vector.load %arg13[%c0_56, %c0_57] : memref<1x32xf32, #tpu.memory_space<vmem>>, vector<1x32xf32>
      %69 = vector.broadcast %68 : vector<1x32xf32> to vector<8x32xf32>
      %70 = arith.addf %67, %69 : vector<8x32xf32>
      %cst_58 = arith.constant 0.000000e+00 : f32
      %71 = vector.broadcast %cst_58 : f32 to vector<8x32xf32>
      %72 = arith.maximumf %70, %71 : vector<8x32xf32>
      %c0_59 = arith.constant 0 : index
      %c0_60 = arith.constant 0 : index
      %73 = vector.load %arg14[%c0_59, %c0_60] : memref<32x16xf32, #tpu.memory_space<vmem>>, vector<32x16xf32>
      %cst_61 = arith.constant dense<0.000000e+00> : vector<8x16xf32>
      %74 = tpu.matmul %72, %73, %cst_61 {dimension_numbers = #tpu.dot_dimension_numbers<[1], [0], [0], [1], [0, 0, 1, 1], [], []>} : vector<8x32xf32>, vector<32x16xf32>, vector<8x16xf32> -> vector<8x16xf32>
      %c0_62 = arith.constant 0 : index
      %c0_63 = arith.constant 0 : index
      %75 = vector.load %arg15[%c0_62, %c0_63] : memref<1x16xf32, #tpu.memory_space<vmem>>, vector<1x16xf32>
      %76 = vector.broadcast %75 : vector<1x16xf32> to vector<8x16xf32>
      %77 = arith.addf %74, %76 : vector<8x16xf32>
      %cst_64 = arith.constant 0.000000e+00 : f32
      %78 = vector.broadcast %cst_64 : f32 to vector<8x16xf32>
      %79 = arith.maximumf %77, %78 : vector<8x16xf32>
      %c0_65 = arith.constant 0 : index
      %c0_66 = arith.constant 0 : index
      %80 = vector.load %arg7[%c0_65, %c0_66] : memref<8x16xf32, #tpu.memory_space<vmem>>, vector<8x16xf32>
      %81 = arith.addf %79, %80 : vector<8x16xf32>
      %c0_67 = arith.constant 0 : index
      %c0_68 = arith.constant 0 : index
      %82 = vector.load %arg16[%c0_67, %c0_68] : memref<8x16xf32, #tpu.memory_space<vmem>>, vector<8x16xf32>
      tpu.vector_store %arg16[%c0_67, %c0_68], %81 {strides = array<i32>} : memref<8x16xf32, #tpu.memory_space<vmem>>, vector<8x16xf32>,
    } else {
    }
    return
  }
  func.func @transform_0(%arg0: i32, %arg1: i32) -> (i32, i32) {
    %c0_i32 = arith.constant 0 : i32
    %c0_i32_0 = arith.constant 0 : i32
    return %arg1, %c0_i32 : i32, i32
  }
  func.func @transform_1(%arg0: i32, %arg1: i32) -> (i32, i32) {
    %c0_i32 = arith.constant 0 : i32
    %c0_i32_0 = arith.constant 0 : i32
    return %c0_i32, %arg1 : i32, i32
  }
  func.func @transform_2(%arg0: i32, %arg1: i32) -> (i32, i32) {
    %c0_i32 = arith.constant 0 : i32
    %c0_i32_0 = arith.constant 0 : i32
    return %arg1, %c0_i32 : i32, i32
  }
  func.func @transform_3(%arg0: i32, %arg1: i32) -> (i32, i32) {
    %c0_i32 = arith.constant 0 : i32
    %c0_i32_0 = arith.constant 0 : i32
    return %c0_i32, %arg1 : i32, i32
  }
  func.func @transform_4(%arg0: i32, %arg1: i32) -> (i32, i32) {
    %c0_i32 = arith.constant 0 : i32
    %c0_i32_0 = arith.constant 0 : i32
    return %arg0, %c0_i32 : i32, i32
  }
  func.func @transform_5(%arg0: i32, %arg1: i32) -> (i32, i32) {
    %c0_i32 = arith.constant 0 : i32
    %c0_i32_0 = arith.constant 0 : i32
    return %arg0, %c0_i32 : i32, i32
  }
  func.func @transform_6(%arg0: i32, %arg1: i32) -> (i32, i32) {
    %c0_i32 = arith.constant 0 : i32
    %c0_i32_0 = arith.constant 0 : i32
    %c0_i32_1 = arith.constant 0 : i32
    return %c0_i32, %c0_i32_0 : i32, i32
  }
  func.func @transform_7(%arg0: i32, %arg1: i32) -> (i32, i32) {
    %c0_i32 = arith.constant 0 : i32
    %c0_i32_0 = arith.constant 0 : i32
    %c0_i32_1 = arith.constant 0 : i32
    return %c0_i32, %c0_i32_0 : i32, i32
  }
  func.func @transform_8(%arg0: i32, %arg1: i32) -> (i32, i32) {
    %c0_i32 = arith.constant 0 : i32
    %c0_i32_0 = arith.constant 0 : i32
    %c0_i32_1 = arith.constant 0 : i32
    return %c0_i32, %c0_i32_0 : i32, i32
  }
  func.func @transform_9(%arg0: i32, %arg1: i32) -> (i32, i32) {
    %c0_i32 = arith.constant 0 : i32
    %c0_i32_0 = arith.constant 0 : i32
    %c0_i32_1 = arith.constant 0 : i32
    return %c0_i32, %c0_i32_0 : i32, i32
  }
  func.func @transform_10(%arg0: i32, %arg1: i32) -> (i32, i32) {
    %c0_i32 = arith.constant 0 : i32
    %c0_i32_0 = arith.constant 0 : i32
    %c0_i32_1 = arith.constant 0 : i32
    return %c0_i32, %c0_i32_0 : i32, i32
  }
  func.func @transform_11(%arg0: i32, %arg1: i32) -> (i32, i32) {
    %c0_i32 = arith.constant 0 : i32
    %c0_i32_0 = arith.constant 0 : i32
    %c0_i32_1 = arith.constant 0 : i32
    return %c0_i32, %c0_i32_0 : i32, i32
  }
  func.func @transform_12(%arg0: i32, %arg1: i32) -> (i32, i32) {
    %c0_i32 = arith.constant 0 : i32
    %c0_i32_0 = arith.constant 0 : i32
    %c0_i32_1 = arith.constant 0 : i32
    return %c0_i32, %c0_i32_0 : i32, i32
  }
  func.func @transform_13(%arg0: i32, %arg1: i32) -> (i32, i32) {
    %c0_i32 = arith.constant 0 : i32
    %c0_i32_0 = arith.constant 0 : i32
    %c0_i32_1 = arith.constant 0 : i32
    return %c0_i32, %c0_i32_0 : i32, i32
  }
  func.func @transform_14(%arg0: i32, %arg1: i32) -> (i32, i32) {
    %c0_i32 = arith.constant 0 : i32
    %c0_i32_0 = arith.constant 0 : i32
    return %arg0, %c0_i32 : i32, i32
  }
}

</mosaic_0001>

<llo_original>
// kernel: megnet_block_forward.8
$region0: #{megnet_block_forward.8}
  #allocation0 [shape = 'u32[]', space=smem, size = 0x4, offset = 0x4, fixed_abs, tag = 'smem constant byte address 0x4 - core index']
  #allocation1 [shape = 'u32[72,128]{1,0:T(1,128)}', space=vmem, size = 0x9000, scoped, tag = 'internal scratch']
  %s0 = inlined_call_operand.vmem [shape: f32[8,4], index: 0, kind: input, shape index: {}]
  %s1 = inlined_call_operand.vmem [shape: f32[4,32], index: 1, kind: input, shape index: {}]
  %s2 = inlined_call_operand.vmem [shape: f32[1,32], index: 2, kind: input, shape index: {}]
  %s3 = inlined_call_operand.vmem [shape: f32[32,16], index: 3, kind: input, shape index: {}]
  %s4 = inlined_call_operand.vmem [shape: f32[1,16], index: 4, kind: input, shape index: {}]
  %s5 = inlined_call_operand.vmem [shape: f32[8,16], index: 5, kind: output, shape index: {}]
  %s6 = sld [smem:[#allocation0]]
  $region30: #{megnet_block_forward.8} parent=0
    _
  %s8 = ssub.s32 1, %s6
  %s9 = scalar_select 0, %s8, %s6
  // Predicated region
  $region2: #{megnet_block_forward.8} parent=0 // pred_check
    _
  $region3: #{megnet_block_forward.8} parent=0 // pred_check_branch
    %11 = sbr.rel (0) target = $region5
  $region4: #{megnet_block_forward.8} parent=0 // pred_region
    _
  $region5: #{megnet_block_forward.8} parent=0 // pred_fallthru
    _
  // Predicated region
  $region6: #{megnet_block_forward.8} parent=0 // pred_check
    _
  $region7: #{megnet_block_forward.8} parent=0 // pred_check_branch
    %13 = sbr.rel (0) target = $region9
  $region8: #{megnet_block_forward.8} parent=0 // pred_region
    _
  $region9: #{megnet_block_forward.8} parent=0 // pred_fallthru
    _
  // Predicated region
  $region10: #{megnet_block_forward.8} parent=0 // pred_check
    _
  $region11: #{megnet_block_forward.8} parent=0 // pred_check_branch
    %15 = sbr.rel (0) target = $region13
  $region12: #{megnet_block_forward.8} parent=0 // pred_region
    _
  $region13: #{megnet_block_forward.8} parent=0 // pred_fallthru
    _
  // Predicated region
  $region14: #{megnet_block_forward.8} parent=0 // pred_check
    _
  $region15: #{megnet_block_forward.8} parent=0 // pred_check_branch
    %17 = sbr.rel (0) target = $region17
  $region16: #{megnet_block_forward.8} parent=0 // pred_region
    _
  $region17: #{megnet_block_forward.8} parent=0 // pred_fallthru
    _
  // Predicated region
  $region18: #{megnet_block_forward.8} parent=0 // pred_check
    _
  $region19: #{megnet_block_forward.8} parent=0 // pred_check_branch
    %19 = sbr.rel (0) target = $region21
  $region20: #{megnet_block_forward.8} parent=0 // pred_region
    _
  $region21: #{megnet_block_forward.8} parent=0 // pred_fallthru
    _
  %v20 = vld [vmem:[%s0] sm:$0xff]
  %v21 = vld [vmem:[%s1] sm:$0xf]
  %v22 = vld [vmem:[%s2] sm:$0x1]
  %v24 = vperm.slane %v22, 0
  %vm26 = vcmask 31744
  %v28 = vsel %vm26, %v20, 0
  %vm30 = vcmask 1043456
  %v32 = vsel %vm30, %v21, 0
  %34 = vmatpush.msra.mxu0 0.0
  %35 = vmatpush.msra.mxu0 0.0
  %36 = vmatpush.msra.mxu0 0.0
  %37 = vmatpush.msra.mxu0 0.0
  %38 = vmatpush.msra.mxu0 0.0
  %39 = vmatpush.msra.mxu0 0.0
  %40 = vmatpush.msra.mxu0 0.0
  %41 = vmatpush.msra.mxu0 0.0
  %42 = vmatpush.msra.mxu0 0.0
  %43 = vmatpush.msra.mxu0 0.0
  %44 = vmatpush.msra.mxu0 0.0
  %45 = vmatpush.msra.mxu0 0.0
  %46 = vmatpush.msra.mxu0 0.0
  %47 = vmatpush.msra.mxu0 0.0
  %48 = vmatpush.msra.mxu0 0.0
  %49 = vmatpush.msra.mxu0 %v32
  %50 = vmatmul.f32.gmra.mxu0 %v28
  %v51 = vpop.f32.mrf.mxu0
  %v52 = vadd.f32 %v24, %v51
  %53 = vdwg.mxu0
  %v54 = vmax.f32 %v52, 0.0
  %v55 = vld [vmem:[%s3] sm:$0xff]
  %v56 = vld [vmem:[%s3 + $0x8] sm:$0xff]
  %v57 = vld [vmem:[%s3 + $0x10] sm:$0xff]
  %v58 = vld [vmem:[%s3 + $0x18] sm:$0xff]
  %v59 = vld [vmem:[%s4] sm:$0x1]
  %v61 = vperm.slane %v59, 0
  %vm63 = vcmask 261120
  %v65 = vsel %vm63, %v54, 0
  %67 = vmatpush.msra.mxu0 0.0
  %68 = vmatpush.msra.mxu0 0.0
  %69 = vmatpush.msra.mxu0 0.0
  %70 = vmatpush.msra.mxu0 0.0
  %71 = vmatpush.msra.mxu0 0.0
  %72 = vmatpush.msra.mxu0 0.0
  %73 = vmatpush.msra.mxu0 0.0
  %74 = vmatpush.msra.mxu0 0.0
  %75 = vmatpush.msra.mxu0 0.0
  %76 = vmatpush.msra.mxu0 0.0
  %77 = vmatpush.msra.mxu0 0.0
  %78 = vmatpush.msra.mxu0 0.0
  %79 = vmatpush.msra.mxu0 %v58
  %80 = vmatpush.msra.mxu0 %v57
  %81 = vmatpush.msra.mxu0 %v56
  %82 = vmatpush.msra.mxu0 %v55
  %83 = vmatmul.f32.gmra.mxu0 %v65
  %v84 = vpop.f32.mrf.mxu0
  %v85 = vadd.f32 %v61, %v84
  %86 = vdwg.mxu0
  %v87 = vmax.f32 %v85, 0.0
  %vm88 = vcmask 130048
  %89 = vst.msk [vmem:[%s5] sm:$0xff] %vm88, %v87
  // Predicated region
  $region22: #{megnet_block_forward.8} parent=0 // pred_check
    _
  $region23: #{megnet_block_forward.8} parent=0 // pred_check_branch
    %91 = sbr.rel (0) target = $region25
  $region24: #{megnet_block_forward.8} parent=0 // pred_region
    _
  $region25: #{megnet_block_forward.8} parent=0 // pred_fallthru
    _
  // Predicated region
  $region26: #{megnet_block_forward.8} parent=0 // pred_check
    _
  $region27: #{megnet_block_forward.8} parent=0 // pred_check_branch
    %93 = sbr.rel (0) target = $region29
  $region28: #{megnet_block_forward.8} parent=0 // pred_region
    _
  $region29: #{megnet_block_forward.8} parent=0 // pred_fallthru
    _

// kernel: megnet_block_forward.7
$region0: #{megnet_block_forward.7}
  #allocation0 [shape = 'u32[]', space=smem, size = 0x4, offset = 0x4, fixed_abs, tag = 'smem constant byte address 0x4 - core index']
  #allocation1 [shape = 'u32[72,128]{1,0:T(1,128)}', space=vmem, size = 0x9000, scoped, tag = 'internal scratch']
  %s0 = inlined_call_operand.vmem [shape: f32[128,16], index: 0, kind: input, shape index: {}]
  %s1 = inlined_call_operand.vmem [shape: f32[16,32], index: 1, kind: input, shape index: {}]
  %s2 = inlined_call_operand.vmem [shape: f32[1,32], index: 2, kind: input, shape index: {}]
  %s3 = inlined_call_operand.vmem [shape: f32[32,16], index: 3, kind: input, shape index: {}]
  %s4 = inlined_call_operand.vmem [shape: f32[1,16], index: 4, kind: input, shape index: {}]
  %s5 = inlined_call_operand.vmem [shape: f32[128,16], index: 5, kind: output, shape index: {}]
  %s6 = sld [smem:[#allocation0]]
  $region30: #{megnet_block_forward.7} parent=0
    _
  %s8 = ssub.s32 1, %s6
  %s9 = scalar_select 0, %s8, %s6
  // Predicated region
  $region2: #{megnet_block_forward.7} parent=0 // pred_check
    _
  $region3: #{megnet_block_forward.7} parent=0 // pred_check_branch
    %11 = sbr.rel (0) target = $region5
  $region4: #{megnet_block_forward.7} parent=0 // pred_region
    _
  $region5: #{megnet_block_forward.7} parent=0 // pred_fallthru
    _
  // Predicated region
  $region6: #{megnet_block_forward.7} parent=0 // pred_check
    _
  $region7: #{megnet_block_forward.7} parent=0 // pred_check_branch
    %13 = sbr.rel (0) target = $region9
  $region8: #{megnet_block_forward.7} parent=0 // pred_region
    _
  $region9: #{megnet_block_forward.7} parent=0 // pred_fallthru
    _
  // Predicated region
  $region10: #{megnet_block_forward.7} parent=0 // pred_check
    _
  $region11: #{megnet_block_forward.7} parent=0 // pred_check_branch
    %15 = sbr.rel (0) target = $region13
  $region12: #{megnet_block_forward.7} parent=0 // pred_region
    _
  $region13: #{megnet_block_forward.7} parent=0 // pred_fallthru
    _
  // Predicated region
  $region14: #{megnet_block_forward.7} parent=0 // pred_check
    _
  $region15: #{megnet_block_forward.7} parent=0 // pred_check_branch
    %17 = sbr.rel (0) target = $region17
  $region16: #{megnet_block_forward.7} parent=0 // pred_region
    _
  $region17: #{megnet_block_forward.7} parent=0 // pred_fallthru
    _
  // Predicated region
  $region18: #{megnet_block_forward.7} parent=0 // pred_check
    _
  $region19: #{megnet_block_forward.7} parent=0 // pred_check_branch
    %19 = sbr.rel (0) target = $region21
  $region20: #{megnet_block_forward.7} parent=0 // pred_region
    _
  $region21: #{megnet_block_forward.7} parent=0 // pred_fallthru
    _
  %v20 = vld [vmem:[%s0] sm:$0xff]
  %v21 = vld [vmem:[%s0 + $0x8] sm:$0xff]
  %v22 = vld [vmem:[%s0 + $0x10] sm:$0xff]
  %v23 = vld [vmem:[%s0 + $0x18] sm:$0xff]
  %v24 = vld [vmem:[%s0 + $0x20] sm:$0xff]
  %v25 = vld [vmem:[%s0 + $0x28] sm:$0xff]
  %v26 = vld [vmem:[%s0 + $0x30] sm:$0xff]
  %v27 = vld [vmem:[%s0 + $0x38] sm:$0xff]
  %v28 = vld [vmem:[%s0 + $0x40] sm:$0xff]
  %v29 = vld [vmem:[%s0 + $0x48] sm:$0xff]
  %v30 = vld [vmem:[%s0 + $0x50] sm:$0xff]
  %v31 = vld [vmem:[%s0 + $0x58] sm:$0xff]
  %v32 = vld [vmem:[%s0 + $0x60] sm:$0xff]
  %v33 = vld [vmem:[%s0 + $0x68] sm:$0xff]
  %v34 = vld [vmem:[%s0 + $0x70] sm:$0xff]
  %v35 = vld [vmem:[%s0 + $0x78] sm:$0xff]
  %v36 = vld [vmem:[%s1] sm:$0xff]
  %v37 = vld [vmem:[%s1 + $0x8] sm:$0xff]
  %v38 = vld [vmem:[%s2] sm:$0x1]
  %v40 = vperm.slane %v38, 0
  %vm42 = vcmask 130048
  %v44 = vsel %vm42, %v20, 0
  %v47 = vsel %vm42, %v21, 0
  %v50 = vsel %vm42, %v22, 0
  %v53 = vsel %vm42, %v23, 0
  %v56 = vsel %vm42, %v24, 0
  %v59 = vsel %vm42, %v25, 0
  %v62 = vsel %vm42, %v26, 0
  %v65 = vsel %vm42, %v27, 0
  %v68 = vsel %vm42, %v28, 0
  %v71 = vsel %vm42, %v29, 0
  %v74 = vsel %vm42, %v30, 0
  %v77 = vsel %vm42, %v31, 0
  %v80 = vsel %vm42, %v32, 0
  %v83 = vsel %vm42, %v33, 0
  %v86 = vsel %vm42, %v34, 0
  %v89 = vsel %vm42, %v35, 0
  %91 = vmatpush.msra.mxu0 0.0
  %92 = vmatpush.msra.mxu0 0.0
  %93 = vmatpush.msra.mxu0 0.0
  %94 = vmatpush.msra.mxu0 0.0
  %95 = vmatpush.msra.mxu0 0.0
  %96 = vmatpush.msra.mxu0 0.0
  %97 = vmatpush.msra.mxu0 0.0
  %98 = vmatpush.msra.mxu0 0.0
  %99 = vmatpush.msra.mxu0 0.0
  %100 = vmatpush.msra.mxu0 0.0
  %101 = vmatpush.msra.mxu0 0.0
  %102 = vmatpush.msra.mxu0 0.0
  %103 = vmatpush.msra.mxu0 0.0
  %104 = vmatpush.msra.mxu0 0.0
  %105 = vmatpush.msra.mxu0 %v37
  %106 = vmatpush.msra.mxu0 %v36
  %107 = vmatmul.f32.gmra.mxu0 %v44
  %v108 = vpop.f32.mrf.mxu0
  %v109 = vadd.f32 %v40, %v108
  %110 = vmatmul.f32.gmra.mxu0 %v47
  %v111 = vpop.f32.mrf.mxu0
  %v112 = vadd.f32 %v40, %v111
  %113 = vmatmul.f32.gmra.mxu0 %v50
  %v114 = vpop.f32.mrf.mxu0
  %v115 = vadd.f32 %v40, %v114
  %116 = vmatmul.f32.gmra.mxu0 %v53
  %v117 = vpop.f32.mrf.mxu0
  %v118 = vadd.f32 %v40, %v117
  %119 = vmatmul.f32.gmra.mxu0 %v56
  %v120 = vpop.f32.mrf.mxu0
  %v121 = vadd.f32 %v40, %v120
  %122 = vmatmul.f32.gmra.mxu0 %v59
  %v123 = vpop.f32.mrf.mxu0
  %v124 = vadd.f32 %v40, %v123
  %125 = vmatmul.f32.gmra.mxu0 %v62
  %v126 = vpop.f32.mrf.mxu0
  %v127 = vadd.f32 %v40, %v126
  %128 = vmatmul.f32.gmra.mxu0 %v65
  %v129 = vpop.f32.mrf.mxu0
  %v130 = vadd.f32 %v40, %v129
  %131 = vmatmul.f32.gmra.mxu0 %v68
  %v132 = vpop.f32.mrf.mxu0
  %v133 = vadd.f32 %v40, %v132
  %134 = vmatmul.f32.gmra.mxu0 %v71
  %v135 = vpop.f32.mrf.mxu0
  %v136 = vadd.f32 %v40, %v135
  %137 = vmatmul.f32.gmra.mxu0 %v74
  %v138 = vpop.f32.mrf.mxu0
  %v139 = vadd.f32 %v40, %v138
  %140 = vmatmul.f32.gmra.mxu0 %v77
  %v141 = vpop.f32.mrf.mxu0
  %v142 = vadd.f32 %v40, %v141
  %143 = vmatmul.f32.gmra.mxu0 %v80
  %v144 = vpop.f32.mrf.mxu0
  %v145 = vadd.f32 %v40, %v144
  %146 = vmatmul.f32.gmra.mxu0 %v83
  %v147 = vpop.f32.mrf.mxu0
  %v148 = vadd.f32 %v40, %v147
  %149 = vmatmul.f32.gmra.mxu0 %v86
  %v150 = vpop.f32.mrf.mxu0
  %v151 = vadd.f32 %v40, %v150
  %152 = vmatmul.f32.gmra.mxu0 %v89
  %v153 = vpop.f32.mrf.mxu0
  %v154 = vadd.f32 %v40, %v153
  %155 = vdwg.mxu0
  %v156 = vmax.f32 %v109, 0.0
  %v157 = vmax.f32 %v112, 0.0
  %v158 = vmax.f32 %v115, 0.0
  %v159 = vmax.f32 %v118, 0.0
  %v160 = vmax.f32 %v121, 0.0
  %v161 = vmax.f32 %v124, 0.0
  %v162 = vmax.f32 %v127, 0.0
  %v163 = vmax.f32 %v130, 0.0
  %v164 = vmax.f32 %v133, 0.0
  %v165 = vmax.f32 %v136, 0.0
  %v166 = vmax.f32 %v139, 0.0
  %v167 = vmax.f32 %v142, 0.0
  %v168 = vmax.f32 %v145, 0.0
  %v169 = vmax.f32 %v148, 0.0
  %v170 = vmax.f32 %v151, 0.0
  %v171 = vmax.f32 %v154, 0.0
  %v172 = vld [vmem:[%s3] sm:$0xff]
  %v173 = vld [vmem:[%s3 + $0x8] sm:$0xff]
  %v174 = vld [vmem:[%s3 + $0x10] sm:$0xff]
  %v175 = vld [vmem:[%s3 + $0x18] sm:$0xff]
  %v176 = vld [vmem:[%s4] sm:$0x1]
  %v178 = vperm.slane %v176, 0
  %vm180 = vcmask 261120
  %v182 = vsel %vm180, %v156, 0
  %v185 = vsel %vm180, %v157, 0
  %v188 = vsel %vm180, %v158, 0
  %v191 = vsel %vm180, %v159, 0
  %v194 = vsel %vm180, %v160, 0
  %v197 = vsel %vm180, %v161, 0
  %v200 = vsel %vm180, %v162, 0
  %v203 = vsel %vm180, %v163, 0
  %v206 = vsel %vm180, %v164, 0
  %v209 = vsel %vm180, %v165, 0
  %v212 = vsel %vm180, %v166, 0
  %v215 = vsel %vm180, %v167, 0
  %v218 = vsel %vm180, %v168, 0
  %v221 = vsel %vm180, %v169, 0
  %v224 = vsel %vm180, %v170, 0
  %v227 = vsel %vm180, %v171, 0
  %229 = vmatpush.msra.mxu0 0.0
  %230 = vmatpush.msra.mxu0 0.0
  %231 = vmatpush.msra.mxu0 0.0
  %232 = vmatpush.msra.mxu0 0.0
  %233 = vmatpush.msra.mxu0 0.0
  %234 = vmatpush.msra.mxu0 0.0
  %235 = vmatpush.msra.mxu0 0.0
  %236 = vmatpush.msra.mxu0 0.0
  %237 = vmatpush.msra.mxu0 0.0
  %238 = vmatpush.msra.mxu0 0.0
  %239 = vmatpush.msra.mxu0 0.0
  %240 = vmatpush.msra.mxu0 0.0
  %241 = vmatpush.msra.mxu0 %v175
  %242 = vmatpush.msra.mxu0 %v174
  %243 = vmatpush.msra.mxu0 %v173
  %244 = vmatpush.msra.mxu0 %v172
  %245 = vmatmul.f32.gmra.mxu0 %v182
  %v246 = vpop.f32.mrf.mxu0
  %v247 = vadd.f32 %v178, %v246
  %248 = vmatmul.f32.gmra.mxu0 %v185
  %v249 = vpop.f32.mrf.mxu0
  %v250 = vadd.f32 %v178, %v249
  %251 = vmatmul.f32.gmra.mxu0 %v188
  %v252 = vpop.f32.mrf.mxu0
  %v253 = vadd.f32 %v178, %v252
  %254 = vmatmul.f32.gmra.mxu0 %v191
  %v255 = vpop.f32.mrf.mxu0
  %v256 = vadd.f32 %v178, %v255
  %257 = vmatmul.f32.gmra.mxu0 %v194
  %v258 = vpop.f32.mrf.mxu0
  %v259 = vadd.f32 %v178, %v258
  %260 = vmatmul.f32.gmra.mxu0 %v197
  %v261 = vpop.f32.mrf.mxu0
  %v262 = vadd.f32 %v178, %v261
  %263 = vmatmul.f32.gmra.mxu0 %v200
  %v264 = vpop.f32.mrf.mxu0
  %v265 = vadd.f32 %v178, %v264
  %266 = vmatmul.f32.gmra.mxu0 %v203
  %v267 = vpop.f32.mrf.mxu0
  %v268 = vadd.f32 %v178, %v267
  %269 = vmatmul.f32.gmra.mxu0 %v206
  %v270 = vpop.f32.mrf.mxu0
  %v271 = vadd.f32 %v178, %v270
  %272 = vmatmul.f32.gmra.mxu0 %v209
  %v273 = vpop.f32.mrf.mxu0
  %v274 = vadd.f32 %v178, %v273
  %275 = vmatmul.f32.gmra.mxu0 %v212
  %v276 = vpop.f32.mrf.mxu0
  %v277 = vadd.f32 %v178, %v276
  %278 = vmatmul.f32.gmra.mxu0 %v215
  %v279 = vpop.f32.mrf.mxu0
  %v280 = vadd.f32 %v178, %v279
  %281 = vmatmul.f32.gmra.mxu0 %v218
  %v282 = vpop.f32.mrf.mxu0
  %v283 = vadd.f32 %v178, %v282
  %284 = vmatmul.f32.gmra.mxu0 %v221
  %v285 = vpop.f32.mrf.mxu0
  %v286 = vadd.f32 %v178, %v285
  %287 = vmatmul.f32.gmra.mxu0 %v224
  %v288 = vpop.f32.mrf.mxu0
  %v289 = vadd.f32 %v178, %v288
  %290 = vmatmul.f32.gmra.mxu0 %v227
  %v291 = vpop.f32.mrf.mxu0
  %v292 = vadd.f32 %v178, %v291
  %293 = vdwg.mxu0
  %v294 = vmax.f32 %v247, 0.0
  %v295 = vmax.f32 %v250, 0.0
  %v296 = vmax.f32 %v253, 0.0
  %v297 = vmax.f32 %v256, 0.0
  %v298 = vmax.f32 %v259, 0.0
  %v299 = vmax.f32 %v262, 0.0
  %v300 = vmax.f32 %v265, 0.0
  %v301 = vmax.f32 %v268, 0.0
  %v302 = vmax.f32 %v271, 0.0
  %v303 = vmax.f32 %v274, 0.0
  %v304 = vmax.f32 %v277, 0.0
  %v305 = vmax.f32 %v280, 0.0
  %v306 = vmax.f32 %v283, 0.0
  %v307 = vmax.f32 %v286, 0.0
  %v308 = vmax.f32 %v289, 0.0
  %v309 = vmax.f32 %v292, 0.0
  %310 = vst.msk [vmem:[%s5] sm:$0xff] %vm42, %v294
  %311 = vst.msk [vmem:[%s5 + $0x8] sm:$0xff] %vm42, %v295
  %312 = vst.msk [vmem:[%s5 + $0x10] sm:$0xff] %vm42, %v296
  %313 = vst.msk [vmem:[%s5 + $0x18] sm:$0xff] %vm42, %v297
  %314 = vst.msk [vmem:[%s5 + $0x20] sm:$0xff] %vm42, %v298
  %315 = vst.msk [vmem:[%s5 + $0x28] sm:$0xff] %vm42, %v299
  %316 = vst.msk [vmem:[%s5 + $0x30] sm:$0xff] %vm42, %v300
  %317 = vst.msk [vmem:[%s5 + $0x38] sm:$0xff] %vm42, %v301
  %318 = vst.msk [vmem:[%s5 + $0x40] sm:$0xff] %vm42, %v302
  %319 = vst.msk [vmem:[%s5 + $0x48] sm:$0xff] %vm42, %v303
  %320 = vst.msk [vmem:[%s5 + $0x50] sm:$0xff] %vm42, %v304
  %321 = vst.msk [vmem:[%s5 + $0x58] sm:$0xff] %vm42, %v305
  %322 = vst.msk [vmem:[%s5 + $0x60] sm:$0xff] %vm42, %v306
  %323 = vst.msk [vmem:[%s5 + $0x68] sm:$0xff] %vm42, %v307
  %324 = vst.msk [vmem:[%s5 + $0x70] sm:$0xff] %vm42, %v308
  %325 = vst.msk [vmem:[%s5 + $0x78] sm:$0xff] %vm42, %v309
  // Predicated region
  $region22: #{megnet_block_forward.7} parent=0 // pred_check
    _
  $region23: #{megnet_block_forward.7} parent=0 // pred_check_branch
    %327 = sbr.rel (0) target = $region25
  $region24: #{megnet_block_forward.7} parent=0 // pred_region
    _
  $region25: #{megnet_block_forward.7} parent=0 // pred_fallthru
    _
  // Predicated region
  $region26: #{megnet_block_forward.7} parent=0 // pred_check
    _
  $region27: #{megnet_block_forward.7} parent=0 // pred_check_branch
    %329 = sbr.rel (0) target = $region29
  $region28: #{megnet_block_forward.7} parent=0 // pred_region
    _
  $region29: #{megnet_block_forward.7} parent=0 // pred_fallthru
    _

// kernel: megnet_block_forward.6
$region0: #{megnet_block_forward.6}
  #allocation0 [shape = 'u32[]', space=smem, size = 0x4, offset = 0x4, fixed_abs, tag = 'smem constant byte address 0x4 - core index']
  #allocation1 [shape = 'u32[72,128]{1,0:T(1,128)}', space=vmem, size = 0x9000, scoped, tag = 'internal scratch']
  %s0 = inlined_call_operand.vmem [shape: f32[128,8], index: 0, kind: input, shape index: {}]
  %s1 = inlined_call_operand.vmem [shape: f32[8,32], index: 1, kind: input, shape index: {}]
  %s2 = inlined_call_operand.vmem [shape: f32[1,32], index: 2, kind: input, shape index: {}]
  %s3 = inlined_call_operand.vmem [shape: f32[32,16], index: 3, kind: input, shape index: {}]
  %s4 = inlined_call_operand.vmem [shape: f32[1,16], index: 4, kind: input, shape index: {}]
  %s5 = inlined_call_operand.vmem [shape: f32[128,16], index: 5, kind: output, shape index: {}]
  %s6 = sld [smem:[#allocation0]]
  $region30: #{megnet_block_forward.6} parent=0
    _
  %s8 = ssub.s32 1, %s6
  %s9 = scalar_select 0, %s8, %s6
  // Predicated region
  $region2: #{megnet_block_forward.6} parent=0 // pred_check
    _
  $region3: #{megnet_block_forward.6} parent=0 // pred_check_branch
    %11 = sbr.rel (0) target = $region5
  $region4: #{megnet_block_forward.6} parent=0 // pred_region
    _
  $region5: #{megnet_block_forward.6} parent=0 // pred_fallthru
    _
  // Predicated region
  $region6: #{megnet_block_forward.6} parent=0 // pred_check
    _
  $region7: #{megnet_block_forward.6} parent=0 // pred_check_branch
    %13 = sbr.rel (0) target = $region9
  $region8: #{megnet_block_forward.6} parent=0 // pred_region
    _
  $region9: #{megnet_block_forward.6} parent=0 // pred_fallthru
    _
  // Predicated region
  $region10: #{megnet_block_forward.6} parent=0 // pred_check
    _
  $region11: #{megnet_block_forward.6} parent=0 // pred_check_branch
    %15 = sbr.rel (0) target = $region13
  $region12: #{megnet_block_forward.6} parent=0 // pred_region
    _
  $region13: #{megnet_block_forward.6} parent=0 // pred_fallthru
    _
  // Predicated region
  $region14: #{megnet_block_forward.6} parent=0 // pred_check
    _
  $region15: #{megnet_block_forward.6} parent=0 // pred_check_branch
    %17 = sbr.rel (0) target = $region17
  $region16: #{megnet_block_forward.6} parent=0 // pred_region
    _
  $region17: #{megnet_block_forward.6} parent=0 // pred_fallthru
    _
  // Predicated region
  $region18: #{megnet_block_forward.6} parent=0 // pred_check
    _
  $region19: #{megnet_block_forward.6} parent=0 // pred_check_branch
    %19 = sbr.rel (0) target = $region21
  $region20: #{megnet_block_forward.6} parent=0 // pred_region
    _
  $region21: #{megnet_block_forward.6} parent=0 // pred_fallthru
    _
  %v20 = vld [vmem:[%s0] sm:$0xff]
  %v21 = vld [vmem:[%s0 + $0x8] sm:$0xff]
  %v22 = vld [vmem:[%s0 + $0x10] sm:$0xff]
  %v23 = vld [vmem:[%s0 + $0x18] sm:$0xff]
  %v24 = vld [vmem:[%s0 + $0x20] sm:$0xff]
  %v25 = vld [vmem:[%s0 + $0x28] sm:$0xff]
  %v26 = vld [vmem:[%s0 + $0x30] sm:$0xff]
  %v27 = vld [vmem:[%s0 + $0x38] sm:$0xff]
  %v28 = vld [vmem:[%s0 + $0x40] sm:$0xff]
  %v29 = vld [vmem:[%s0 + $0x48] sm:$0xff]
  %v30 = vld [vmem:[%s0 + $0x50] sm:$0xff]
  %v31 = vld [vmem:[%s0 + $0x58] sm:$0xff]
  %v32 = vld [vmem:[%s0 + $0x60] sm:$0xff]
  %v33 = vld [vmem:[%s0 + $0x68] sm:$0xff]
  %v34 = vld [vmem:[%s0 + $0x70] sm:$0xff]
  %v35 = vld [vmem:[%s0 + $0x78] sm:$0xff]
  %v36 = vld [vmem:[%s1] sm:$0xff]
  %v37 = vld [vmem:[%s2] sm:$0x1]
  %v39 = vperm.slane %v37, 0
  %vm41 = vcmask 64512
  %v43 = vsel %vm41, %v20, 0
  %v46 = vsel %vm41, %v21, 0
  %v49 = vsel %vm41, %v22, 0
  %v52 = vsel %vm41, %v23, 0
  %v55 = vsel %vm41, %v24, 0
  %v58 = vsel %vm41, %v25, 0
  %v61 = vsel %vm41, %v26, 0
  %v64 = vsel %vm41, %v27, 0
  %v67 = vsel %vm41, %v28, 0
  %v70 = vsel %vm41, %v29, 0
  %v73 = vsel %vm41, %v30, 0
  %v76 = vsel %vm41, %v31, 0
  %v79 = vsel %vm41, %v32, 0
  %v82 = vsel %vm41, %v33, 0
  %v85 = vsel %vm41, %v34, 0
  %v88 = vsel %vm41, %v35, 0
  %90 = vmatpush.msra.mxu0 0.0
  %91 = vmatpush.msra.mxu0 0.0
  %92 = vmatpush.msra.mxu0 0.0
  %93 = vmatpush.msra.mxu0 0.0
  %94 = vmatpush.msra.mxu0 0.0
  %95 = vmatpush.msra.mxu0 0.0
  %96 = vmatpush.msra.mxu0 0.0
  %97 = vmatpush.msra.mxu0 0.0
  %98 = vmatpush.msra.mxu0 0.0
  %99 = vmatpush.msra.mxu0 0.0
  %100 = vmatpush.msra.mxu0 0.0
  %101 = vmatpush.msra.mxu0 0.0
  %102 = vmatpush.msra.mxu0 0.0
  %103 = vmatpush.msra.mxu0 0.0
  %104 = vmatpush.msra.mxu0 0.0
  %105 = vmatpush.msra.mxu0 %v36
  %106 = vmatmul.f32.gmra.mxu0 %v43
  %v107 = vpop.f32.mrf.mxu0
  %v108 = vadd.f32 %v39, %v107
  %109 = vmatmul.f32.gmra.mxu0 %v46
  %v110 = vpop.f32.mrf.mxu0
  %v111 = vadd.f32 %v39, %v110
  %112 = vmatmul.f32.gmra.mxu0 %v49
  %v113 = vpop.f32.mrf.mxu0
  %v114 = vadd.f32 %v39, %v113
  %115 = vmatmul.f32.gmra.mxu0 %v52
  %v116 = vpop.f32.mrf.mxu0
  %v117 = vadd.f32 %v39, %v116
  %118 = vmatmul.f32.gmra.mxu0 %v55
  %v119 = vpop.f32.mrf.mxu0
  %v120 = vadd.f32 %v39, %v119
  %121 = vmatmul.f32.gmra.mxu0 %v58
  %v122 = vpop.f32.mrf.mxu0
  %v123 = vadd.f32 %v39, %v122
  %124 = vmatmul.f32.gmra.mxu0 %v61
  %v125 = vpop.f32.mrf.mxu0
  %v126 = vadd.f32 %v39, %v125
  %127 = vmatmul.f32.gmra.mxu0 %v64
  %v128 = vpop.f32.mrf.mxu0
  %v129 = vadd.f32 %v39, %v128
  %130 = vmatmul.f32.gmra.mxu0 %v67
  %v131 = vpop.f32.mrf.mxu0
  %v132 = vadd.f32 %v39, %v131
  %133 = vmatmul.f32.gmra.mxu0 %v70
  %v134 = vpop.f32.mrf.mxu0
  %v135 = vadd.f32 %v39, %v134
  %136 = vmatmul.f32.gmra.mxu0 %v73
  %v137 = vpop.f32.mrf.mxu0
  %v138 = vadd.f32 %v39, %v137
  %139 = vmatmul.f32.gmra.mxu0 %v76
  %v140 = vpop.f32.mrf.mxu0
  %v141 = vadd.f32 %v39, %v140
  %142 = vmatmul.f32.gmra.mxu0 %v79
  %v143 = vpop.f32.mrf.mxu0
  %v144 = vadd.f32 %v39, %v143
  %145 = vmatmul.f32.gmra.mxu0 %v82
  %v146 = vpop.f32.mrf.mxu0
  %v147 = vadd.f32 %v39, %v146
  %148 = vmatmul.f32.gmra.mxu0 %v85
  %v149 = vpop.f32.mrf.mxu0
  %v150 = vadd.f32 %v39, %v149
  %151 = vmatmul.f32.gmra.mxu0 %v88
  %v152 = vpop.f32.mrf.mxu0
  %v153 = vadd.f32 %v39, %v152
  %154 = vdwg.mxu0
  %v155 = vmax.f32 %v108, 0.0
  %v156 = vmax.f32 %v111, 0.0
  %v157 = vmax.f32 %v114, 0.0
  %v158 = vmax.f32 %v117, 0.0
  %v159 = vmax.f32 %v120, 0.0
  %v160 = vmax.f32 %v123, 0.0
  %v161 = vmax.f32 %v126, 0.0
  %v162 = vmax.f32 %v129, 0.0
  %v163 = vmax.f32 %v132, 0.0
  %v164 = vmax.f32 %v135, 0.0
  %v165 = vmax.f32 %v138, 0.0
  %v166 = vmax.f32 %v141, 0.0
  %v167 = vmax.f32 %v144, 0.0
  %v168 = vmax.f32 %v147, 0.0
  %v169 = vmax.f32 %v150, 0.0
  %v170 = vmax.f32 %v153, 0.0
  %v171 = vld [vmem:[%s3] sm:$0xff]
  %v172 = vld [vmem:[%s3 + $0x8] sm:$0xff]
  %v173 = vld [vmem:[%s3 + $0x10] sm:$0xff]
  %v174 = vld [vmem:[%s3 + $0x18] sm:$0xff]
  %v175 = vld [vmem:[%s4] sm:$0x1]
  %v177 = vperm.slane %v175, 0
  %vm179 = vcmask 261120
  %v181 = vsel %vm179, %v155, 0
  %v184 = vsel %vm179, %v156, 0
  %v187 = vsel %vm179, %v157, 0
  %v190 = vsel %vm179, %v158, 0
  %v193 = vsel %vm179, %v159, 0
  %v196 = vsel %vm179, %v160, 0
  %v199 = vsel %vm179, %v161, 0
  %v202 = vsel %vm179, %v162, 0
  %v205 = vsel %vm179, %v163, 0
  %v208 = vsel %vm179, %v164, 0
  %v211 = vsel %vm179, %v165, 0
  %v214 = vsel %vm179, %v166, 0
  %v217 = vsel %vm179, %v167, 0
  %v220 = vsel %vm179, %v168, 0
  %v223 = vsel %vm179, %v169, 0
  %v226 = vsel %vm179, %v170, 0
  %228 = vmatpush.msra.mxu0 0.0
  %229 = vmatpush.msra.mxu0 0.0
  %230 = vmatpush.msra.mxu0 0.0
  %231 = vmatpush.msra.mxu0 0.0
  %232 = vmatpush.msra.mxu0 0.0
  %233 = vmatpush.msra.mxu0 0.0
  %234 = vmatpush.msra.mxu0 0.0
  %235 = vmatpush.msra.mxu0 0.0
  %236 = vmatpush.msra.mxu0 0.0
  %237 = vmatpush.msra.mxu0 0.0
  %238 = vmatpush.msra.mxu0 0.0
  %239 = vmatpush.msra.mxu0 0.0
  %240 = vmatpush.msra.mxu0 %v174
  %241 = vmatpush.msra.mxu0 %v173
  %242 = vmatpush.msra.mxu0 %v172
  %243 = vmatpush.msra.mxu0 %v171
  %244 = vmatmul.f32.gmra.mxu0 %v181
  %v245 = vpop.f32.mrf.mxu0
  %v246 = vadd.f32 %v177, %v245
  %247 = vmatmul.f32.gmra.mxu0 %v184
  %v248 = vpop.f32.mrf.mxu0
  %v249 = vadd.f32 %v177, %v248
  %250 = vmatmul.f32.gmra.mxu0 %v187
  %v251 = vpop.f32.mrf.mxu0
  %v252 = vadd.f32 %v177, %v251
  %253 = vmatmul.f32.gmra.mxu0 %v190
  %v254 = vpop.f32.mrf.mxu0
  %v255 = vadd.f32 %v177, %v254
  %256 = vmatmul.f32.gmra.mxu0 %v193
  %v257 = vpop.f32.mrf.mxu0
  %v258 = vadd.f32 %v177, %v257
  %259 = vmatmul.f32.gmra.mxu0 %v196
  %v260 = vpop.f32.mrf.mxu0
  %v261 = vadd.f32 %v177, %v260
  %262 = vmatmul.f32.gmra.mxu0 %v199
  %v263 = vpop.f32.mrf.mxu0
  %v264 = vadd.f32 %v177, %v263
  %265 = vmatmul.f32.gmra.mxu0 %v202
  %v266 = vpop.f32.mrf.mxu0
  %v267 = vadd.f32 %v177, %v266
  %268 = vmatmul.f32.gmra.mxu0 %v205
  %v269 = vpop.f32.mrf.mxu0
  %v270 = vadd.f32 %v177, %v269
  %271 = vmatmul.f32.gmra.mxu0 %v208
  %v272 = vpop.f32.mrf.mxu0
  %v273 = vadd.f32 %v177, %v272
  %274 = vmatmul.f32.gmra.mxu0 %v211
  %v275 = vpop.f32.mrf.mxu0
  %v276 = vadd.f32 %v177, %v275
  %277 = vmatmul.f32.gmra.mxu0 %v214
  %v278 = vpop.f32.mrf.mxu0
  %v279 = vadd.f32 %v177, %v278
  %280 = vmatmul.f32.gmra.mxu0 %v217
  %v281 = vpop.f32.mrf.mxu0
  %v282 = vadd.f32 %v177, %v281
  %283 = vmatmul.f32.gmra.mxu0 %v220
  %v284 = vpop.f32.mrf.mxu0
  %v285 = vadd.f32 %v177, %v284
  %286 = vmatmul.f32.gmra.mxu0 %v223
  %v287 = vpop.f32.mrf.mxu0
  %v288 = vadd.f32 %v177, %v287
  %289 = vmatmul.f32.gmra.mxu0 %v226
  %v290 = vpop.f32.mrf.mxu0
  %v291 = vadd.f32 %v177, %v290
  %292 = vdwg.mxu0
  %v293 = vmax.f32 %v246, 0.0
  %v294 = vmax.f32 %v249, 0.0
  %v295 = vmax.f32 %v252, 0.0
  %v296 = vmax.f32 %v255, 0.0
  %v297 = vmax.f32 %v258, 0.0
  %v298 = vmax.f32 %v261, 0.0
  %v299 = vmax.f32 %v264, 0.0
  %v300 = vmax.f32 %v267, 0.0
  %v301 = vmax.f32 %v270, 0.0
  %v302 = vmax.f32 %v273, 0.0
  %v303 = vmax.f32 %v276, 0.0
  %v304 = vmax.f32 %v279, 0.0
  %v305 = vmax.f32 %v282, 0.0
  %v306 = vmax.f32 %v285, 0.0
  %v307 = vmax.f32 %v288, 0.0
  %v308 = vmax.f32 %v291, 0.0
  %vm309 = vcmask 130048
  %310 = vst.msk [vmem:[%s5] sm:$0xff] %vm309, %v293
  %311 = vst.msk [vmem:[%s5 + $0x8] sm:$0xff] %vm309, %v294
  %312 = vst.msk [vmem:[%s5 + $0x10] sm:$0xff] %vm309, %v295
  %313 = vst.msk [vmem:[%s5 + $0x18] sm:$0xff] %vm309, %v296
  %314 = vst.msk [vmem:[%s5 + $0x20] sm:$0xff] %vm309, %v297
  %315 = vst.msk [vmem:[%s5 + $0x28] sm:$0xff] %vm309, %v298
  %316 = vst.msk [vmem:[%s5 + $0x30] sm:$0xff] %vm309, %v299
  %317 = vst.msk [vmem:[%s5 + $0x38] sm:$0xff] %vm309, %v300
  %318 = vst.msk [vmem:[%s5 + $0x40] sm:$0xff] %vm309, %v301
  %319 = vst.msk [vmem:[%s5 + $0x48] sm:$0xff] %vm309, %v302
  %320 = vst.msk [vmem:[%s5 + $0x50] sm:$0xff] %vm309, %v303
  %321 = vst.msk [vmem:[%s5 + $0x58] sm:$0xff] %vm309, %v304
  %322 = vst.msk [vmem:[%s5 + $0x60] sm:$0xff] %vm309, %v305
  %323 = vst.msk [vmem:[%s5 + $0x68] sm:$0xff] %vm309, %v306
  %324 = vst.msk [vmem:[%s5 + $0x70] sm:$0xff] %vm309, %v307
  %325 = vst.msk [vmem:[%s5 + $0x78] sm:$0xff] %vm309, %v308
  // Predicated region
  $region22: #{megnet_block_forward.6} parent=0 // pred_check
    _
  $region23: #{megnet_block_forward.6} parent=0 // pred_check_branch
    %327 = sbr.rel (0) target = $region25
  $region24: #{megnet_block_forward.6} parent=0 // pred_region
    _
  $region25: #{megnet_block_forward.6} parent=0 // pred_fallthru
    _
  // Predicated region
  $region26: #{megnet_block_forward.6} parent=0 // pred_check
    _
  $region27: #{megnet_block_forward.6} parent=0 // pred_check_branch
    %329 = sbr.rel (0) target = $region29
  $region28: #{megnet_block_forward.6} parent=0 // pred_region
    _
  $region29: #{megnet_block_forward.6} parent=0 // pred_fallthru
    _

// kernel: megnet_block_forward.9
$region0: #{megnet_block_forward.9}
  #allocation0 [shape = 'u32[]', space=smem, size = 0x4, offset = 0x4, fixed_abs, tag = 'smem constant byte address 0x4 - core index']
  #allocation1 [shape = 'u32[72,128]{1,0:T(1,128)}', space=vmem, size = 0x9000, scoped, tag = 'internal scratch']
  %s0 = inlined_call_operand.vmem [shape: f32[128,16], index: 0, kind: input, shape index: {}]
  %s1 = inlined_call_operand.vmem [shape: f32[128,16], index: 1, kind: input, shape index: {}]
  %s2 = inlined_call_operand.vmem [shape: f32[128,16], index: 2, kind: input, shape index: {}, may-alias: {2,4}]
  %s3 = inlined_call_operand.vmem [shape: f32[128,16], index: 3, kind: input, shape index: {}]
  %s4 = inlined_call_operand.vmem [shape: f32[128,16], index: 4, kind: input, shape index: {}, may-alias: {2,4}]
  %s5 = inlined_call_operand.vmem [shape: f32[16,32], index: 5, kind: input, shape index: {}]
  %s6 = inlined_call_operand.vmem [shape: f32[16,32], index: 6, kind: input, shape index: {}]
  %s7 = inlined_call_operand.vmem [shape: f32[16,32], index: 7, kind: input, shape index: {}]
  %s8 = inlined_call_operand.vmem [shape: f32[16,32], index: 8, kind: input, shape index: {}]
  %s9 = inlined_call_operand.vmem [shape: f32[1,32], index: 9, kind: input, shape index: {}]
  %s10 = inlined_call_operand.vmem [shape: f32[32,32], index: 10, kind: input, shape index: {}]
  %s11 = inlined_call_operand.vmem [shape: f32[1,32], index: 11, kind: input, shape index: {}]
  %s12 = inlined_call_operand.vmem [shape: f32[32,16], index: 12, kind: input, shape index: {}]
  %s13 = inlined_call_operand.vmem [shape: f32[1,16], index: 13, kind: input, shape index: {}]
  %s14 = inlined_call_operand.vmem [shape: f32[128,16], index: 14, kind: output, shape index: {0}]
  %s15 = inlined_call_operand.vmem [shape: f32[128,16], index: 15, kind: output, shape index: {1}]
  %16 = xla_tuple %s14, %s15
  %s17 = sld [smem:[#allocation0]]
  $region74: #{megnet_block_forward.9} parent=0
    _
  %s19 = ssub.s32 1, %s17
  %s20 = scalar_select 0, %s19, %s17
  // Predicated region
  $region2: #{megnet_block_forward.9} parent=0 // pred_check
    _
  $region3: #{megnet_block_forward.9} parent=0 // pred_check_branch
    %22 = sbr.rel (0) target = $region5
  $region4: #{megnet_block_forward.9} parent=0 // pred_region
    _
  $region5: #{megnet_block_forward.9} parent=0 // pred_fallthru
    _
  // Predicated region
  $region6: #{megnet_block_forward.9} parent=0 // pred_check
    _
  $region7: #{megnet_block_forward.9} parent=0 // pred_check_branch
    %24 = sbr.rel (0) target = $region9
  $region8: #{megnet_block_forward.9} parent=0 // pred_region
    _
  $region9: #{megnet_block_forward.9} parent=0 // pred_fallthru
    _
  // Predicated region
  $region10: #{megnet_block_forward.9} parent=0 // pred_check
    _
  $region11: #{megnet_block_forward.9} parent=0 // pred_check_branch
    %26 = sbr.rel (0) target = $region13
  $region12: #{megnet_block_forward.9} parent=0 // pred_region
    _
  $region13: #{megnet_block_forward.9} parent=0 // pred_fallthru
    _
  // Predicated region
  $region14: #{megnet_block_forward.9} parent=0 // pred_check
    _
  $region15: #{megnet_block_forward.9} parent=0 // pred_check_branch
    %28 = sbr.rel (0) target = $region17
  $region16: #{megnet_block_forward.9} parent=0 // pred_region
    _
  $region17: #{megnet_block_forward.9} parent=0 // pred_fallthru
    _
  // Predicated region
  $region18: #{megnet_block_forward.9} parent=0 // pred_check
    _
  $region19: #{megnet_block_forward.9} parent=0 // pred_check_branch
    %30 = sbr.rel (0) target = $region21
  $region20: #{megnet_block_forward.9} parent=0 // pred_region
    _
  $region21: #{megnet_block_forward.9} parent=0 // pred_fallthru
    _
  // Predicated region
  $region22: #{megnet_block_forward.9} parent=0 // pred_check
    _
  $region23: #{megnet_block_forward.9} parent=0 // pred_check_branch
    %32 = sbr.rel (0) target = $region25
  $region24: #{megnet_block_forward.9} parent=0 // pred_region
    _
  $region25: #{megnet_block_forward.9} parent=0 // pred_fallthru
    _
  // Predicated region
  $region26: #{megnet_block_forward.9} parent=0 // pred_check
    _
  $region27: #{megnet_block_forward.9} parent=0 // pred_check_branch
    %34 = sbr.rel (0) target = $region29
  $region28: #{megnet_block_forward.9} parent=0 // pred_region
    _
  $region29: #{megnet_block_forward.9} parent=0 // pred_fallthru
    _
  // Predicated region
  $region30: #{megnet_block_forward.9} parent=0 // pred_check
    _
  $region31: #{megnet_block_forward.9} parent=0 // pred_check_branch
    %36 = sbr.rel (0) target = $region33
  $region32: #{megnet_block_forward.9} parent=0 // pred_region
    _
  $region33: #{megnet_block_forward.9} parent=0 // pred_fallthru
    _
  // Predicated region
  $region34: #{megnet_block_forward.9} parent=0 // pred_check
    _
  $region35: #{megnet_block_forward.9} parent=0 // pred_check_branch
    %38 = sbr.rel (0) target = $region37
  $region36: #{megnet_block_forward.9} parent=0 // pred_region
    _
  $region37: #{megnet_block_forward.9} parent=0 // pred_fallthru
    _
  // Predicated region
  $region38: #{megnet_block_forward.9} parent=0 // pred_check
    _
  $region39: #{megnet_block_forward.9} parent=0 // pred_check_branch
    %40 = sbr.rel (0) target = $region41
  $region40: #{megnet_block_forward.9} parent=0 // pred_region
    _
  $region41: #{megnet_block_forward.9} parent=0 // pred_fallthru
    _
  // Predicated region
  $region42: #{megnet_block_forward.9} parent=0 // pred_check
    _
  $region43: #{megnet_block_forward.9} parent=0 // pred_check_branch
    %42 = sbr.rel (0) target = $region45
  $region44: #{megnet_block_forward.9} parent=0 // pred_region
    _
  $region45: #{megnet_block_forward.9} parent=0 // pred_fallthru
    _
  // Predicated region
  $region46: #{megnet_block_forward.9} parent=0 // pred_check
    _
  $region47: #{megnet_block_forward.9} parent=0 // pred_check_branch
    %44 = sbr.rel (0) target = $region49
  $region48: #{megnet_block_forward.9} parent=0 // pred_region
    _
  $region49: #{megnet_block_forward.9} parent=0 // pred_fallthru
    _
  // Predicated region
  $region50: #{megnet_block_forward.9} parent=0 // pred_check
    _
  $region51: #{megnet_block_forward.9} parent=0 // pred_check_branch
    %46 = sbr.rel (0) target = $region53
  $region52: #{megnet_block_forward.9} parent=0 // pred_region
    _
  $region53: #{megnet_block_forward.9} parent=0 // pred_fallthru
    _
  // Predicated region
  $region54: #{megnet_block_forward.9} parent=0 // pred_check
    _
  $region55: #{megnet_block_forward.9} parent=0 // pred_check_branch
    %48 = sbr.rel (0) target = $region57
  $region56: #{megnet_block_forward.9} parent=0 // pred_region
    _
  $region57: #{megnet_block_forward.9} parent=0 // pred_fallthru
    _
  %v49 = vld [vmem:[%s0] sm:$0xff]
  %v50 = vld [vmem:[%s0 + $0x8] sm:$0xff]
  %v51 = vld [vmem:[%s0 + $0x10] sm:$0xff]
  %v52 = vld [vmem:[%s0 + $0x18] sm:$0xff]
  %v53 = vld [vmem:[%s0 + $0x20] sm:$0xff]
  %v54 = vld [vmem:[%s0 + $0x28] sm:$0xff]
  %v55 = vld [vmem:[%s0 + $0x30] sm:$0xff]
  %v56 = vld [vmem:[%s0 + $0x38] sm:$0xff]
  %v57 = vld [vmem:[%s0 + $0x40] sm:$0xff]
  %v58 = vld [vmem:[%s0 + $0x48] sm:$0xff]
  %v59 = vld [vmem:[%s0 + $0x50] sm:$0xff]
  %v60 = vld [vmem:[%s0 + $0x58] sm:$0xff]
  %v61 = vld [vmem:[%s0 + $0x60] sm:$0xff]
  %v62 = vld [vmem:[%s0 + $0x68] sm:$0xff]
  %v63 = vld [vmem:[%s0 + $0x70] sm:$0xff]
  %v64 = vld [vmem:[%s0 + $0x78] sm:$0xff]
  %v65 = vld [vmem:[%s5] sm:$0xff]
  %v66 = vld [vmem:[%s5 + $0x8] sm:$0xff]
  %v67 = vld [vmem:[%s1] sm:$0xff]
  %v68 = vld [vmem:[%s1 + $0x8] sm:$0xff]
  %v69 = vld [vmem:[%s1 + $0x10] sm:$0xff]
  %v70 = vld [vmem:[%s1 + $0x18] sm:$0xff]
  %v71 = vld [vmem:[%s1 + $0x20] sm:$0xff]
  %v72 = vld [vmem:[%s1 + $0x28] sm:$0xff]
  %v73 = vld [vmem:[%s1 + $0x30] sm:$0xff]
  %v74 = vld [vmem:[%s1 + $0x38] sm:$0xff]
  %v75 = vld [vmem:[%s1 + $0x40] sm:$0xff]
  %v76 = vld [vmem:[%s1 + $0x48] sm:$0xff]
  %v77 = vld [vmem:[%s1 + $0x50] sm:$0xff]
  %v78 = vld [vmem:[%s1 + $0x58] sm:$0xff]
  %v79 = vld [vmem:[%s1 + $0x60] sm:$0xff]
  %v80 = vld [vmem:[%s1 + $0x68] sm:$0xff]
  %v81 = vld [vmem:[%s1 + $0x70] sm:$0xff]
  %v82 = vld [vmem:[%s1 + $0x78] sm:$0xff]
  %v83 = vld [vmem:[%s6] sm:$0xff]
  %v84 = vld [vmem:[%s6 + $0x8] sm:$0xff]
  %vm85 = vcmask 130048
  %v87 = vsel %vm85, %v67, 0
  %v90 = vsel %vm85, %v68, 0
  %v93 = vsel %vm85, %v69, 0
  %v96 = vsel %vm85, %v70, 0
  %v99 = vsel %vm85, %v71, 0
  %v102 = vsel %vm85, %v72, 0
  %v105 = vsel %vm85, %v73, 0
  %v108 = vsel %vm85, %v74, 0
  %v111 = vsel %vm85, %v75, 0
  %v114 = vsel %vm85, %v76, 0
  %v117 = vsel %vm85, %v77, 0
  %v120 = vsel %vm85, %v78, 0
  %v123 = vsel %vm85, %v79, 0
  %v126 = vsel %vm85, %v80, 0
  %v129 = vsel %vm85, %v81, 0
  %v132 = vsel %vm85, %v82, 0
  %134 = vmatpush.msra.mxu0 0.0
  %135 = vmatpush.msra.mxu0 0.0
  %136 = vmatpush.msra.mxu0 0.0
  %137 = vmatpush.msra.mxu0 0.0
  %138 = vmatpush.msra.mxu0 0.0
  %139 = vmatpush.msra.mxu0 0.0
  %140 = vmatpush.msra.mxu0 0.0
  %141 = vmatpush.msra.mxu0 0.0
  %142 = vmatpush.msra.mxu0 0.0
  %143 = vmatpush.msra.mxu0 0.0
  %144 = vmatpush.msra.mxu0 0.0
  %145 = vmatpush.msra.mxu0 0.0
  %146 = vmatpush.msra.mxu0 0.0
  %147 = vmatpush.msra.mxu0 0.0
  %148 = vmatpush.msra.mxu0 %v84
  %149 = vmatpush.msra.mxu0 %v83
  %150 = vmatmul.f32.gmra.mxu0 %v87
  %v151 = vpop.f32.mrf.mxu0
  %v152 = vadd.f32 0.0, %v151
  %153 = vmatmul.f32.gmra.mxu0 %v90
  %v154 = vpop.f32.mrf.mxu0
  %v155 = vadd.f32 0.0, %v154
  %156 = vmatmul.f32.gmra.mxu0 %v93
  %v157 = vpop.f32.mrf.mxu0
  %v158 = vadd.f32 0.0, %v157
  %159 = vmatmul.f32.gmra.mxu0 %v96
  %v160 = vpop.f32.mrf.mxu0
  %v161 = vadd.f32 0.0, %v160
  %162 = vmatmul.f32.gmra.mxu0 %v99
  %v163 = vpop.f32.mrf.mxu0
  %v164 = vadd.f32 0.0, %v163
  %165 = vmatmul.f32.gmra.mxu0 %v102
  %v166 = vpop.f32.mrf.mxu0
  %v167 = vadd.f32 0.0, %v166
  %168 = vmatmul.f32.gmra.mxu0 %v105
  %v169 = vpop.f32.mrf.mxu0
  %v170 = vadd.f32 0.0, %v169
  %171 = vmatmul.f32.gmra.mxu0 %v108
  %v172 = vpop.f32.mrf.mxu0
  %v173 = vadd.f32 0.0, %v172
  %174 = vmatmul.f32.gmra.mxu0 %v111
  %v175 = vpop.f32.mrf.mxu0
  %v176 = vadd.f32 0.0, %v175
  %177 = vmatmul.f32.gmra.mxu0 %v114
  %v178 = vpop.f32.mrf.mxu0
  %v179 = vadd.f32 0.0, %v178
  %180 = vmatmul.f32.gmra.mxu0 %v117
  %v181 = vpop.f32.mrf.mxu0
  %v182 = vadd.f32 0.0, %v181
  %183 = vmatmul.f32.gmra.mxu0 %v120
  %v184 = vpop.f32.mrf.mxu0
  %v185 = vadd.f32 0.0, %v184
  %186 = vmatmul.f32.gmra.mxu0 %v123
  %v187 = vpop.f32.mrf.mxu0
  %v188 = vadd.f32 0.0, %v187
  %189 = vmatmul.f32.gmra.mxu0 %v126
  %v190 = vpop.f32.mrf.mxu0
  %v191 = vadd.f32 0.0, %v190
  %192 = vmatmul.f32.gmra.mxu0 %v129
  %v193 = vpop.f32.mrf.mxu0
  %v194 = vadd.f32 0.0, %v193
  %195 = vmatmul.f32.gmra.mxu0 %v132
  %v196 = vpop.f32.mrf.mxu0
  %v197 = vadd.f32 0.0, %v196
  %198 = vdwg.mxu0
  %v200 = vsel %vm85, %v49, 0
  %v203 = vsel %vm85, %v50, 0
  %v206 = vsel %vm85, %v51, 0
  %v209 = vsel %vm85, %v52, 0
  %v212 = vsel %vm85, %v53, 0
  %v215 = vsel %vm85, %v54, 0
  %v218 = vsel %vm85, %v55, 0
  %v221 = vsel %vm85, %v56, 0
  %v224 = vsel %vm85, %v57, 0
  %v227 = vsel %vm85, %v58, 0
  %v230 = vsel %vm85, %v59, 0
  %v233 = vsel %vm85, %v60, 0
  %v236 = vsel %vm85, %v61, 0
  %v239 = vsel %vm85, %v62, 0
  %v242 = vsel %vm85, %v63, 0
  %v245 = vsel %vm85, %v64, 0
  %247 = vmatpush.msra.mxu0 0.0
  %248 = vmatpush.msra.mxu0 0.0
  %249 = vmatpush.msra.mxu0 0.0
  %250 = vmatpush.msra.mxu0 0.0
  %251 = vmatpush.msra.mxu0 0.0
  %252 = vmatpush.msra.mxu0 0.0
  %253 = vmatpush.msra.mxu0 0.0
  %254 = vmatpush.msra.mxu0 0.0
  %255 = vmatpush.msra.mxu0 0.0
  %256 = vmatpush.msra.mxu0 0.0
  %257 = vmatpush.msra.mxu0 0.0
  %258 = vmatpush.msra.mxu0 0.0
  %259 = vmatpush.msra.mxu0 0.0
  %260 = vmatpush.msra.mxu0 0.0
  %261 = vmatpush.msra.mxu0 %v66
  %262 = vmatpush.msra.mxu0 %v65
  %263 = vmatmul.f32.gmra.mxu0 %v200
  %v264 = vpop.f32.mrf.mxu0
  %v265 = vadd.f32 %v152, %v264
  %266 = vmatmul.f32.gmra.mxu0 %v203
  %v267 = vpop.f32.mrf.mxu0
  %v268 = vadd.f32 %v155, %v267
  %269 = vmatmul.f32.gmra.mxu0 %v206
  %v270 = vpop.f32.mrf.mxu0
  %v271 = vadd.f32 %v158, %v270
  %272 = vmatmul.f32.gmra.mxu0 %v209
  %v273 = vpop.f32.mrf.mxu0
  %v274 = vadd.f32 %v161, %v273
  %275 = vmatmul.f32.gmra.mxu0 %v212
  %v276 = vpop.f32.mrf.mxu0
  %v277 = vadd.f32 %v164, %v276
  %278 = vmatmul.f32.gmra.mxu0 %v215
  %v279 = vpop.f32.mrf.mxu0
  %v280 = vadd.f32 %v167, %v279
  %281 = vmatmul.f32.gmra.mxu0 %v218
  %v282 = vpop.f32.mrf.mxu0
  %v283 = vadd.f32 %v170, %v282
  %284 = vmatmul.f32.gmra.mxu0 %v221
  %v285 = vpop.f32.mrf.mxu0
  %v286 = vadd.f32 %v173, %v285
  %287 = vmatmul.f32.gmra.mxu0 %v224
  %v288 = vpop.f32.mrf.mxu0
  %v289 = vadd.f32 %v176, %v288
  %290 = vmatmul.f32.gmra.mxu0 %v227
  %v291 = vpop.f32.mrf.mxu0
  %v292 = vadd.f32 %v179, %v291
  %293 = vmatmul.f32.gmra.mxu0 %v230
  %v294 = vpop.f32.mrf.mxu0
  %v295 = vadd.f32 %v182, %v294
  %296 = vmatmul.f32.gmra.mxu0 %v233
  %v297 = vpop.f32.mrf.mxu0
  %v298 = vadd.f32 %v185, %v297
  %299 = vmatmul.f32.gmra.mxu0 %v236
  %v300 = vpop.f32.mrf.mxu0
  %v301 = vadd.f32 %v188, %v300
  %302 = vmatmul.f32.gmra.mxu0 %v239
  %v303 = vpop.f32.mrf.mxu0
  %v304 = vadd.f32 %v191, %v303
  %305 = vmatmul.f32.gmra.mxu0 %v242
  %v306 = vpop.f32.mrf.mxu0
  %v307 = vadd.f32 %v194, %v306
  %308 = vmatmul.f32.gmra.mxu0 %v245
  %v309 = vpop.f32.mrf.mxu0
  %v310 = vadd.f32 %v197, %v309
  %311 = vdwg.mxu0
  %v312 = vld [vmem:[%s2] sm:$0xff]
  %v313 = vld [vmem:[%s2 + $0x8] sm:$0xff]
  %v314 = vld [vmem:[%s2 + $0x10] sm:$0xff]
  %v315 = vld [vmem:[%s2 + $0x18] sm:$0xff]
  %v316 = vld [vmem:[%s2 + $0x20] sm:$0xff]
  %v317 = vld [vmem:[%s2 + $0x28] sm:$0xff]
  %v318 = vld [vmem:[%s2 + $0x30] sm:$0xff]
  %v319 = vld [vmem:[%s2 + $0x38] sm:$0xff]
  %v320 = vld [vmem:[%s2 + $0x40] sm:$0xff]
  %v321 = vld [vmem:[%s2 + $0x48] sm:$0xff]
  %v322 = vld [vmem:[%s2 + $0x50] sm:$0xff]
  %v323 = vld [vmem:[%s2 + $0x58] sm:$0xff]
  %v324 = vld [vmem:[%s2 + $0x60] sm:$0xff]
  %v325 = vld [vmem:[%s2 + $0x68] sm:$0xff]
  %v326 = vld [vmem:[%s2 + $0x70] sm:$0xff]
  %v327 = vld [vmem:[%s2 + $0x78] sm:$0xff]
  %v328 = vld [vmem:[%s7] sm:$0xff]
  %v329 = vld [vmem:[%s7 + $0x8] sm:$0xff]
  %v331 = vsel %vm85, %v312, 0
  %v334 = vsel %vm85, %v313, 0
  %v337 = vsel %vm85, %v314, 0
  %v340 = vsel %vm85, %v315, 0
  %v343 = vsel %vm85, %v316, 0
  %v346 = vsel %vm85, %v317, 0
  %v349 = vsel %vm85, %v318, 0
  %v352 = vsel %vm85, %v319, 0
  %v355 = vsel %vm85, %v320, 0
  %v358 = vsel %vm85, %v321, 0
  %v361 = vsel %vm85, %v322, 0
  %v364 = vsel %vm85, %v323, 0
  %v367 = vsel %vm85, %v324, 0
  %v370 = vsel %vm85, %v325, 0
  %v373 = vsel %vm85, %v326, 0
  %v376 = vsel %vm85, %v327, 0
  %378 = vmatpush.msra.mxu0 0.0
  %379 = vmatpush.msra.mxu0 0.0
  %380 = vmatpush.msra.mxu0 0.0
  %381 = vmatpush.msra.mxu0 0.0
  %382 = vmatpush.msra.mxu0 0.0
  %383 = vmatpush.msra.mxu0 0.0
  %384 = vmatpush.msra.mxu0 0.0
  %385 = vmatpush.msra.mxu0 0.0
  %386 = vmatpush.msra.mxu0 0.0
  %387 = vmatpush.msra.mxu0 0.0
  %388 = vmatpush.msra.mxu0 0.0
  %389 = vmatpush.msra.mxu0 0.0
  %390 = vmatpush.msra.mxu0 0.0
  %391 = vmatpush.msra.mxu0 0.0
  %392 = vmatpush.msra.mxu0 %v329
  %393 = vmatpush.msra.mxu0 %v328
  %394 = vmatmul.f32.gmra.mxu0 %v331
  %v395 = vpop.f32.mrf.mxu0
  %v396 = vadd.f32 0.0, %v395
  %397 = vmatmul.f32.gmra.mxu0 %v334
  %v398 = vpop.f32.mrf.mxu0
  %v399 = vadd.f32 0.0, %v398
  %400 = vmatmul.f32.gmra.mxu0 %v337
  %v401 = vpop.f32.mrf.mxu0
  %v402 = vadd.f32 0.0, %v401
  %403 = vmatmul.f32.gmra.mxu0 %v340
  %v404 = vpop.f32.mrf.mxu0
  %v405 = vadd.f32 0.0, %v404
  %406 = vmatmul.f32.gmra.mxu0 %v343
  %v407 = vpop.f32.mrf.mxu0
  %v408 = vadd.f32 0.0, %v407
  %409 = vmatmul.f32.gmra.mxu0 %v346
  %v410 = vpop.f32.mrf.mxu0
  %v411 = vadd.f32 0.0, %v410
  %412 = vmatmul.f32.gmra.mxu0 %v349
  %v413 = vpop.f32.mrf.mxu0
  %v414 = vadd.f32 0.0, %v413
  %415 = vmatmul.f32.gmra.mxu0 %v352
  %v416 = vpop.f32.mrf.mxu0
  %v417 = vadd.f32 0.0, %v416
  %418 = vmatmul.f32.gmra.mxu0 %v355
  %v419 = vpop.f32.mrf.mxu0
  %v420 = vadd.f32 0.0, %v419
  %421 = vmatmul.f32.gmra.mxu0 %v358
  %v422 = vpop.f32.mrf.mxu0
  %v423 = vadd.f32 0.0, %v422
  %424 = vmatmul.f32.gmra.mxu0 %v361
  %v425 = vpop.f32.mrf.mxu0
  %v426 = vadd.f32 0.0, %v425
  %427 = vmatmul.f32.gmra.mxu0 %v364
  %v428 = vpop.f32.mrf.mxu0
  %v429 = vadd.f32 0.0, %v428
  %430 = vmatmul.f32.gmra.mxu0 %v367
  %v431 = vpop.f32.mrf.mxu0
  %v432 = vadd.f32 0.0, %v431
  %433 = vmatmul.f32.gmra.mxu0 %v370
  %v434 = vpop.f32.mrf.mxu0
  %v435 = vadd.f32 0.0, %v434
  %436 = vmatmul.f32.gmra.mxu0 %v373
  %v437 = vpop.f32.mrf.mxu0
  %v438 = vadd.f32 0.0, %v437
  %439 = vmatmul.f32.gmra.mxu0 %v376
  %v440 = vpop.f32.mrf.mxu0
  %v441 = vadd.f32 0.0, %v440
  %442 = vdwg.mxu0
  %v443 = vadd.f32 %v265, %v396
  %v444 = vadd.f32 %v268, %v399
  %v445 = vadd.f32 %v271, %v402
  %v446 = vadd.f32 %v274, %v405
  %v447 = vadd.f32 %v277, %v408
  %v448 = vadd.f32 %v280, %v411
  %v449 = vadd.f32 %v283, %v414
  %v450 = vadd.f32 %v286, %v417
  %v451 = vadd.f32 %v289, %v420
  %v452 = vadd.f32 %v292, %v423
  %v453 = vadd.f32 %v295, %v426
  %v454 = vadd.f32 %v298, %v429
  %v455 = vadd.f32 %v301, %v432
  %v456 = vadd.f32 %v304, %v435
  %v457 = vadd.f32 %v307, %v438
  %v458 = vadd.f32 %v310, %v441
  %v459 = vld [vmem:[%s3] sm:$0xff]
  %v460 = vld [vmem:[%s3 + $0x8] sm:$0xff]
  %v461 = vld [vmem:[%s3 + $0x10] sm:$0xff]
  %v462 = vld [vmem:[%s3 + $0x18] sm:$0xff]
  %v463 = vld [vmem:[%s3 + $0x20] sm:$0xff]
  %v464 = vld [vmem:[%s3 + $0x28] sm:$0xff]
  %v465 = vld [vmem:[%s3 + $0x30] sm:$0xff]
  %v466 = vld [vmem:[%s3 + $0x38] sm:$0xff]
  %v467 = vld [vmem:[%s3 + $0x40] sm:$0xff]
  %v468 = vld [vmem:[%s3 + $0x48] sm:$0xff]
  %v469 = vld [vmem:[%s3 + $0x50] sm:$0xff]
  %v470 = vld [vmem:[%s3 + $0x58] sm:$0xff]
  %v471 = vld [vmem:[%s3 + $0x60] sm:$0xff]
  %v472 = vld [vmem:[%s3 + $0x68] sm:$0xff]
  %v473 = vld [vmem:[%s3 + $0x70] sm:$0xff]
  %v474 = vld [vmem:[%s3 + $0x78] sm:$0xff]
  %v475 = vld [vmem:[%s8] sm:$0xff]
  %v476 = vld [vmem:[%s8 + $0x8] sm:$0xff]
  %v478 = vsel %vm85, %v459, 0
  %v481 = vsel %vm85, %v460, 0
  %v484 = vsel %vm85, %v461, 0
  %v487 = vsel %vm85, %v462, 0
  %v490 = vsel %vm85, %v463, 0
  %v493 = vsel %vm85, %v464, 0
  %v496 = vsel %vm85, %v465, 0
  %v499 = vsel %vm85, %v466, 0
  %v502 = vsel %vm85, %v467, 0
  %v505 = vsel %vm85, %v468, 0
  %v508 = vsel %vm85, %v469, 0
  %v511 = vsel %vm85, %v470, 0
  %v514 = vsel %vm85, %v471, 0
  %v517 = vsel %vm85, %v472, 0
  %v520 = vsel %vm85, %v473, 0
  %v523 = vsel %vm85, %v474, 0
  %525 = vmatpush.msra.mxu0 0.0
  %526 = vmatpush.msra.mxu0 0.0
  %527 = vmatpush.msra.mxu0 0.0
  %528 = vmatpush.msra.mxu0 0.0
  %529 = vmatpush.msra.mxu0 0.0
  %530 = vmatpush.msra.mxu0 0.0
  %531 = vmatpush.msra.mxu0 0.0
  %532 = vmatpush.msra.mxu0 0.0
  %533 = vmatpush.msra.mxu0 0.0
  %534 = vmatpush.msra.mxu0 0.0
  %535 = vmatpush.msra.mxu0 0.0
  %536 = vmatpush.msra.mxu0 0.0
  %537 = vmatpush.msra.mxu0 0.0
  %538 = vmatpush.msra.mxu0 0.0
  %539 = vmatpush.msra.mxu0 %v476
  %540 = vmatpush.msra.mxu0 %v475
  %541 = vmatmul.f32.gmra.mxu0 %v478
  %v542 = vpop.f32.mrf.mxu0
  %v543 = vadd.f32 0.0, %v542
  %544 = vmatmul.f32.gmra.mxu0 %v481
  %v545 = vpop.f32.mrf.mxu0
  %v546 = vadd.f32 0.0, %v545
  %547 = vmatmul.f32.gmra.mxu0 %v484
  %v548 = vpop.f32.mrf.mxu0
  %v549 = vadd.f32 0.0, %v548
  %550 = vmatmul.f32.gmra.mxu0 %v487
  %v551 = vpop.f32.mrf.mxu0
  %v552 = vadd.f32 0.0, %v551
  %553 = vmatmul.f32.gmra.mxu0 %v490
  %v554 = vpop.f32.mrf.mxu0
  %v555 = vadd.f32 0.0, %v554
  %556 = vmatmul.f32.gmra.mxu0 %v493
  %v557 = vpop.f32.mrf.mxu0
  %v558 = vadd.f32 0.0, %v557
  %559 = vmatmul.f32.gmra.mxu0 %v496
  %v560 = vpop.f32.mrf.mxu0
  %v561 = vadd.f32 0.0, %v560
  %562 = vmatmul.f32.gmra.mxu0 %v499
  %v563 = vpop.f32.mrf.mxu0
  %v564 = vadd.f32 0.0, %v563
  %565 = vmatmul.f32.gmra.mxu0 %v502
  %v566 = vpop.f32.mrf.mxu0
  %v567 = vadd.f32 0.0, %v566
  %568 = vmatmul.f32.gmra.mxu0 %v505
  %v569 = vpop.f32.mrf.mxu0
  %v570 = vadd.f32 0.0, %v569
  %571 = vmatmul.f32.gmra.mxu0 %v508
  %v572 = vpop.f32.mrf.mxu0
  %v573 = vadd.f32 0.0, %v572
  %574 = vmatmul.f32.gmra.mxu0 %v511
  %v575 = vpop.f32.mrf.mxu0
  %v576 = vadd.f32 0.0, %v575
  %577 = vmatmul.f32.gmra.mxu0 %v514
  %v578 = vpop.f32.mrf.mxu0
  %v579 = vadd.f32 0.0, %v578
  %580 = vmatmul.f32.gmra.mxu0 %v517
  %v581 = vpop.f32.mrf.mxu0
  %v582 = vadd.f32 0.0, %v581
  %583 = vmatmul.f32.gmra.mxu0 %v520
  %v584 = vpop.f32.mrf.mxu0
  %v585 = vadd.f32 0.0, %v584
  %586 = vmatmul.f32.gmra.mxu0 %v523
  %v587 = vpop.f32.mrf.mxu0
  %v588 = vadd.f32 0.0, %v587
  %589 = vdwg.mxu0
  %v590 = vadd.f32 %v443, %v543
  %v591 = vadd.f32 %v444, %v546
  %v592 = vadd.f32 %v445, %v549
  %v593 = vadd.f32 %v446, %v552
  %v594 = vadd.f32 %v447, %v555
  %v595 = vadd.f32 %v448, %v558
  %v596 = vadd.f32 %v449, %v561
  %v597 = vadd.f32 %v450, %v564
  %v598 = vadd.f32 %v451, %v567
  %v599 = vadd.f32 %v452, %v570
  %v600 = vadd.f32 %v453, %v573
  %v601 = vadd.f32 %v454, %v576
  %v602 = vadd.f32 %v455, %v579
  %v603 = vadd.f32 %v456, %v582
  %v604 = vadd.f32 %v457, %v585
  %v605 = vadd.f32 %v458, %v588
  %v606 = vld [vmem:[%s9] sm:$0x1]
  %v608 = vperm.slane %v606, 0
  %v610 = vadd.f32 %v590, %v608
  %v611 = vadd.f32 %v591, %v608
  %v612 = vadd.f32 %v592, %v608
  %v613 = vadd.f32 %v593, %v608
  %v614 = vadd.f32 %v594, %v608
  %v615 = vadd.f32 %v595, %v608
  %v616 = vadd.f32 %v596, %v608
  %v617 = vadd.f32 %v597, %v608
  %v618 = vadd.f32 %v598, %v608
  %v619 = vadd.f32 %v599, %v608
  %v620 = vadd.f32 %v600, %v608
  %v621 = vadd.f32 %v601, %v608
  %v622 = vadd.f32 %v602, %v608
  %v623 = vadd.f32 %v603, %v608
  %v624 = vadd.f32 %v604, %v608
  %v625 = vadd.f32 %v605, %v608
  %v626 = vmax.f32 %v610, 0.0
  %v627 = vmax.f32 %v611, 0.0
  %v628 = vmax.f32 %v612, 0.0
  %v629 = vmax.f32 %v613, 0.0
  %v630 = vmax.f32 %v614, 0.0
  %v631 = vmax.f32 %v615, 0.0
  %v632 = vmax.f32 %v616, 0.0
  %v633 = vmax.f32 %v617, 0.0
  %v634 = vmax.f32 %v618, 0.0
  %v635 = vmax.f32 %v619, 0.0
  %v636 = vmax.f32 %v620, 0.0
  %v637 = vmax.f32 %v621, 0.0
  %v638 = vmax.f32 %v622, 0.0
  %v639 = vmax.f32 %v623, 0.0
  %v640 = vmax.f32 %v624, 0.0
  %v641 = vmax.f32 %v625, 0.0
  %v642 = vld [vmem:[%s10] sm:$0xff]
  %v643 = vld [vmem:[%s10 + $0x8] sm:$0xff]
  %v644 = vld [vmem:[%s10 + $0x10] sm:$0xff]
  %v645 = vld [vmem:[%s10 + $0x18] sm:$0xff]
  %v646 = vld [vmem:[%s11] sm:$0x1]
  %v648 = vperm.slane %v646, 0
  %vm650 = vcmask 261120
  %v652 = vsel %vm650, %v626, 0
  %v655 = vsel %vm650, %v627, 0
  %v658 = vsel %vm650, %v628, 0
  %v661 = vsel %vm650, %v629, 0
  %v664 = vsel %vm650, %v630, 0
  %v667 = vsel %vm650, %v631, 0
  %v670 = vsel %vm650, %v632, 0
  %v673 = vsel %vm650, %v633, 0
  %v676 = vsel %vm650, %v634, 0
  %v679 = vsel %vm650, %v635, 0
  %v682 = vsel %vm650, %v636, 0
  %v685 = vsel %vm650, %v637, 0
  %v688 = vsel %vm650, %v638, 0
  %v691 = vsel %vm650, %v639, 0
  %v694 = vsel %vm650, %v640, 0
  %v697 = vsel %vm650, %v641, 0
  %699 = vmatpush.msra.mxu0 0.0
  %700 = vmatpush.msra.mxu0 0.0
  %701 = vmatpush.msra.mxu0 0.0
  %702 = vmatpush.msra.mxu0 0.0
  %703 = vmatpush.msra.mxu0 0.0
  %704 = vmatpush.msra.mxu0 0.0
  %705 = vmatpush.msra.mxu0 0.0
  %706 = vmatpush.msra.mxu0 0.0
  %707 = vmatpush.msra.mxu0 0.0
  %708 = vmatpush.msra.mxu0 0.0
  %709 = vmatpush.msra.mxu0 0.0
  %710 = vmatpush.msra.mxu0 0.0
  %711 = vmatpush.msra.mxu0 %v645
  %712 = vmatpush.msra.mxu0 %v644
  %713 = vmatpush.msra.mxu0 %v643
  %714 = vmatpush.msra.mxu0 %v642
  %715 = vmatmul.f32.gmra.mxu0 %v652
  %v716 = vpop.f32.mrf.mxu0
  %v717 = vadd.f32 %v648, %v716
  %718 = vmatmul.f32.gmra.mxu0 %v655
  %v719 = vpop.f32.mrf.mxu0
  %v720 = vadd.f32 %v648, %v719
  %721 = vmatmul.f32.gmra.mxu0 %v658
  %v722 = vpop.f32.mrf.mxu0
  %v723 = vadd.f32 %v648, %v722
  %724 = vmatmul.f32.gmra.mxu0 %v661
  %v725 = vpop.f32.mrf.mxu0
  %v726 = vadd.f32 %v648, %v725
  %727 = vmatmul.f32.gmra.mxu0 %v664
  %v728 = vpop.f32.mrf.mxu0
  %v729 = vadd.f32 %v648, %v728
  %730 = vmatmul.f32.gmra.mxu0 %v667
  %v731 = vpop.f32.mrf.mxu0
  %v732 = vadd.f32 %v648, %v731
  %733 = vmatmul.f32.gmra.mxu0 %v670
  %v734 = vpop.f32.mrf.mxu0
  %v735 = vadd.f32 %v648, %v734
  %736 = vmatmul.f32.gmra.mxu0 %v673
  %v737 = vpop.f32.mrf.mxu0
  %v738 = vadd.f32 %v648, %v737
  %739 = vmatmul.f32.gmra.mxu0 %v676
  %v740 = vpop.f32.mrf.mxu0
  %v741 = vadd.f32 %v648, %v740
  %742 = vmatmul.f32.gmra.mxu0 %v679
  %v743 = vpop.f32.mrf.mxu0
  %v744 = vadd.f32 %v648, %v743
  %745 = vmatmul.f32.gmra.mxu0 %v682
  %v746 = vpop.f32.mrf.mxu0
  %v747 = vadd.f32 %v648, %v746
  %748 = vmatmul.f32.gmra.mxu0 %v685
  %v749 = vpop.f32.mrf.mxu0
  %v750 = vadd.f32 %v648, %v749
  %751 = vmatmul.f32.gmra.mxu0 %v688
  %v752 = vpop.f32.mrf.mxu0
  %v753 = vadd.f32 %v648, %v752
  %754 = vmatmul.f32.gmra.mxu0 %v691
  %v755 = vpop.f32.mrf.mxu0
  %v756 = vadd.f32 %v648, %v755
  %757 = vmatmul.f32.gmra.mxu0 %v694
  %v758 = vpop.f32.mrf.mxu0
  %v759 = vadd.f32 %v648, %v758
  %760 = vmatmul.f32.gmra.mxu0 %v697
  %v761 = vpop.f32.mrf.mxu0
  %v762 = vadd.f32 %v648, %v761
  %763 = vdwg.mxu0
  %v764 = vmax.f32 %v717, 0.0
  %v765 = vmax.f32 %v720, 0.0
  %v766 = vmax.f32 %v723, 0.0
  %v767 = vmax.f32 %v726, 0.0
  %v768 = vmax.f32 %v729, 0.0
  %v769 = vmax.f32 %v732, 0.0
  %v770 = vmax.f32 %v735, 0.0
  %v771 = vmax.f32 %v738, 0.0
  %v772 = vmax.f32 %v741, 0.0
  %v773 = vmax.f32 %v744, 0.0
  %v774 = vmax.f32 %v747, 0.0
  %v775 = vmax.f32 %v750, 0.0
  %v776 = vmax.f32 %v753, 0.0
  %v777 = vmax.f32 %v756, 0.0
  %v778 = vmax.f32 %v759, 0.0
  %v779 = vmax.f32 %v762, 0.0
  %v780 = vld [vmem:[%s12] sm:$0xff]
  %v781 = vld [vmem:[%s12 + $0x8] sm:$0xff]
  %v782 = vld [vmem:[%s12 + $0x10] sm:$0xff]
  %v783 = vld [vmem:[%s12 + $0x18] sm:$0xff]
  %v784 = vld [vmem:[%s13] sm:$0x1]
  %v786 = vperm.slane %v784, 0
  %v789 = vsel %vm650, %v764, 0
  %v792 = vsel %vm650, %v765, 0
  %v795 = vsel %vm650, %v766, 0
  %v798 = vsel %vm650, %v767, 0
  %v801 = vsel %vm650, %v768, 0
  %v804 = vsel %vm650, %v769, 0
  %v807 = vsel %vm650, %v770, 0
  %v810 = vsel %vm650, %v771, 0
  %v813 = vsel %vm650, %v772, 0
  %v816 = vsel %vm650, %v773, 0
  %v819 = vsel %vm650, %v774, 0
  %v822 = vsel %vm650, %v775, 0
  %v825 = vsel %vm650, %v776, 0
  %v828 = vsel %vm650, %v777, 0
  %v831 = vsel %vm650, %v778, 0
  %v834 = vsel %vm650, %v779, 0
  %836 = vmatpush.msra.mxu0 0.0
  %837 = vmatpush.msra.mxu0 0.0
  %838 = vmatpush.msra.mxu0 0.0
  %839 = vmatpush.msra.mxu0 0.0
  %840 = vmatpush.msra.mxu0 0.0
  %841 = vmatpush.msra.mxu0 0.0
  %842 = vmatpush.msra.mxu0 0.0
  %843 = vmatpush.msra.mxu0 0.0
  %844 = vmatpush.msra.mxu0 0.0
  %845 = vmatpush.msra.mxu0 0.0
  %846 = vmatpush.msra.mxu0 0.0
  %847 = vmatpush.msra.mxu0 0.0
  %848 = vmatpush.msra.mxu0 %v783
  %849 = vmatpush.msra.mxu0 %v782
  %850 = vmatpush.msra.mxu0 %v781
  %851 = vmatpush.msra.mxu0 %v780
  %852 = vmatmul.f32.gmra.mxu0 %v789
  %v853 = vpop.f32.mrf.mxu0
  %v854 = vadd.f32 %v786, %v853
  %855 = vmatmul.f32.gmra.mxu0 %v792
  %v856 = vpop.f32.mrf.mxu0
  %v857 = vadd.f32 %v786, %v856
  %858 = vmatmul.f32.gmra.mxu0 %v795
  %v859 = vpop.f32.mrf.mxu0
  %v860 = vadd.f32 %v786, %v859
  %861 = vmatmul.f32.gmra.mxu0 %v798
  %v862 = vpop.f32.mrf.mxu0
  %v863 = vadd.f32 %v786, %v862
  %864 = vmatmul.f32.gmra.mxu0 %v801
  %v865 = vpop.f32.mrf.mxu0
  %v866 = vadd.f32 %v786, %v865
  %867 = vmatmul.f32.gmra.mxu0 %v804
  %v868 = vpop.f32.mrf.mxu0
  %v869 = vadd.f32 %v786, %v868
  %870 = vmatmul.f32.gmra.mxu0 %v807
  %v871 = vpop.f32.mrf.mxu0
  %v872 = vadd.f32 %v786, %v871
  %873 = vmatmul.f32.gmra.mxu0 %v810
  %v874 = vpop.f32.mrf.mxu0
  %v875 = vadd.f32 %v786, %v874
  %876 = vmatmul.f32.gmra.mxu0 %v813
  %v877 = vpop.f32.mrf.mxu0
  %v878 = vadd.f32 %v786, %v877
  %879 = vmatmul.f32.gmra.mxu0 %v816
  %v880 = vpop.f32.mrf.mxu0
  %v881 = vadd.f32 %v786, %v880
  %882 = vmatmul.f32.gmra.mxu0 %v819
  %v883 = vpop.f32.mrf.mxu0
  %v884 = vadd.f32 %v786, %v883
  %885 = vmatmul.f32.gmra.mxu0 %v822
  %v886 = vpop.f32.mrf.mxu0
  %v887 = vadd.f32 %v786, %v886
  %888 = vmatmul.f32.gmra.mxu0 %v825
  %v889 = vpop.f32.mrf.mxu0
  %v890 = vadd.f32 %v786, %v889
  %891 = vmatmul.f32.gmra.mxu0 %v828
  %v892 = vpop.f32.mrf.mxu0
  %v893 = vadd.f32 %v786, %v892
  %894 = vmatmul.f32.gmra.mxu0 %v831
  %v895 = vpop.f32.mrf.mxu0
  %v896 = vadd.f32 %v786, %v895
  %897 = vmatmul.f32.gmra.mxu0 %v834
  %v898 = vpop.f32.mrf.mxu0
  %v899 = vadd.f32 %v786, %v898
  %900 = vdwg.mxu0
  %v901 = vmax.f32 %v854, 0.0
  %v902 = vmax.f32 %v857, 0.0
  %v903 = vmax.f32 %v860, 0.0
  %v904 = vmax.f32 %v863, 0.0
  %v905 = vmax.f32 %v866, 0.0
  %v906 = vmax.f32 %v869, 0.0
  %v907 = vmax.f32 %v872, 0.0
  %v908 = vmax.f32 %v875, 0.0
  %v909 = vmax.f32 %v878, 0.0
  %v910 = vmax.f32 %v881, 0.0
  %v911 = vmax.f32 %v884, 0.0
  %v912 = vmax.f32 %v887, 0.0
  %v913 = vmax.f32 %v890, 0.0
  %v914 = vmax.f32 %v893, 0.0
  %v915 = vmax.f32 %v896, 0.0
  %v916 = vmax.f32 %v899, 0.0
  %917 = vst.msk [vmem:[%s14] sm:$0xff] %vm85, %v901
  %918 = vst.msk [vmem:[%s14 + $0x8] sm:$0xff] %vm85, %v902
  %919 = vst.msk [vmem:[%s14 + $0x10] sm:$0xff] %vm85, %v903
  %920 = vst.msk [vmem:[%s14 + $0x18] sm:$0xff] %vm85, %v904
  %921 = vst.msk [vmem:[%s14 + $0x20] sm:$0xff] %vm85, %v905
  %922 = vst.msk [vmem:[%s14 + $0x28] sm:$0xff] %vm85, %v906
  %923 = vst.msk [vmem:[%s14 + $0x30] sm:$0xff] %vm85, %v907
  %924 = vst.msk [vmem:[%s14 + $0x38] sm:$0xff] %vm85, %v908
  %925 = vst.msk [vmem:[%s14 + $0x40] sm:$0xff] %vm85, %v909
  %926 = vst.msk [vmem:[%s14 + $0x48] sm:$0xff] %vm85, %v910
  %927 = vst.msk [vmem:[%s14 + $0x50] sm:$0xff] %vm85, %v911
  %928 = vst.msk [vmem:[%s14 + $0x58] sm:$0xff] %vm85, %v912
  %929 = vst.msk [vmem:[%s14 + $0x60] sm:$0xff] %vm85, %v913
  %930 = vst.msk [vmem:[%s14 + $0x68] sm:$0xff] %vm85, %v914
  %931 = vst.msk [vmem:[%s14 + $0x70] sm:$0xff] %vm85, %v915
  %932 = vst.msk [vmem:[%s14 + $0x78] sm:$0xff] %vm85, %v916
  %v933 = vld [vmem:[%s4] sm:$0xff]
  %v934 = vld [vmem:[%s4 + $0x8] sm:$0xff]
  %v935 = vld [vmem:[%s4 + $0x10] sm:$0xff]
  %v936 = vld [vmem:[%s4 + $0x18] sm:$0xff]
  %v937 = vld [vmem:[%s4 + $0x20] sm:$0xff]
  %v938 = vld [vmem:[%s4 + $0x28] sm:$0xff]
  %v939 = vld [vmem:[%s4 + $0x30] sm:$0xff]
  %v940 = vld [vmem:[%s4 + $0x38] sm:$0xff]
  %v941 = vld [vmem:[%s4 + $0x40] sm:$0xff]
  %v942 = vld [vmem:[%s4 + $0x48] sm:$0xff]
  %v943 = vld [vmem:[%s4 + $0x50] sm:$0xff]
  %v944 = vld [vmem:[%s4 + $0x58] sm:$0xff]
  %v945 = vld [vmem:[%s4 + $0x60] sm:$0xff]
  %v946 = vld [vmem:[%s4 + $0x68] sm:$0xff]
  %v947 = vld [vmem:[%s4 + $0x70] sm:$0xff]
  %v948 = vld [vmem:[%s4 + $0x78] sm:$0xff]
  %v949 = vadd.f32 %v901, %v933
  %v950 = vadd.f32 %v902, %v934
  %v951 = vadd.f32 %v903, %v935
  %v952 = vadd.f32 %v904, %v936
  %v953 = vadd.f32 %v905, %v937
  %v954 = vadd.f32 %v906, %v938
  %v955 = vadd.f32 %v907, %v939
  %v956 = vadd.f32 %v908, %v940
  %v957 = vadd.f32 %v909, %v941
  %v958 = vadd.f32 %v910, %v942
  %v959 = vadd.f32 %v911, %v943
  %v960 = vadd.f32 %v912, %v944
  %v961 = vadd.f32 %v913, %v945
  %v962 = vadd.f32 %v914, %v946
  %v963 = vadd.f32 %v915, %v947
  %v964 = vadd.f32 %v916, %v948
  %965 = vst.msk [vmem:[%s15] sm:$0xff] %vm85, %v949
  %966 = vst.msk [vmem:[%s15 + $0x8] sm:$0xff] %vm85, %v950
  %967 = vst.msk [vmem:[%s15 + $0x10] sm:$0xff] %vm85, %v951
  %968 = vst.msk [vmem:[%s15 + $0x18] sm:$0xff] %vm85, %v952
  %969 = vst.msk [vmem:[%s15 + $0x20] sm:$0xff] %vm85, %v953
  %970 = vst.msk [vmem:[%s15 + $0x28] sm:$0xff] %vm85, %v954
  %971 = vst.msk [vmem:[%s15 + $0x30] sm:$0xff] %vm85, %v955
  %972 = vst.msk [vmem:[%s15 + $0x38] sm:$0xff] %vm85, %v956
  %973 = vst.msk [vmem:[%s15 + $0x40] sm:$0xff] %vm85, %v957
  %974 = vst.msk [vmem:[%s15 + $0x48] sm:$0xff] %vm85, %v958
  %975 = vst.msk [vmem:[%s15 + $0x50] sm:$0xff] %vm85, %v959
  %976 = vst.msk [vmem:[%s15 + $0x58] sm:$0xff] %vm85, %v960
  %977 = vst.msk [vmem:[%s15 + $0x60] sm:$0xff] %vm85, %v961
  %978 = vst.msk [vmem:[%s15 + $0x68] sm:$0xff] %vm85, %v962
  %979 = vst.msk [vmem:[%s15 + $0x70] sm:$0xff] %vm85, %v963
  %980 = vst.msk [vmem:[%s15 + $0x78] sm:$0xff] %vm85, %v964
  // Predicated region
  $region58: #{megnet_block_forward.9} parent=0 // pred_check
    _
  $region59: #{megnet_block_forward.9} parent=0 // pred_check_branch
    %982 = sbr.rel (0) target = $region61
  $region60: #{megnet_block_forward.9} parent=0 // pred_region
    _
  $region61: #{megnet_block_forward.9} parent=0 // pred_fallthru
    _
  // Predicated region
  $region62: #{megnet_block_forward.9} parent=0 // pred_check
    _
  $region63: #{megnet_block_forward.9} parent=0 // pred_check_branch
    %984 = sbr.rel (0) target = $region65
  $region64: #{megnet_block_forward.9} parent=0 // pred_region
    _
  $region65: #{megnet_block_forward.9} parent=0 // pred_fallthru
    _
  // Predicated region
  $region66: #{megnet_block_forward.9} parent=0 // pred_check
    _
  $region67: #{megnet_block_forward.9} parent=0 // pred_check_branch
    %986 = sbr.rel (0) target = $region69
  $region68: #{megnet_block_forward.9} parent=0 // pred_region
    _
  $region69: #{megnet_block_forward.9} parent=0 // pred_fallthru
    _
  // Predicated region
  $region70: #{megnet_block_forward.9} parent=0 // pred_check
    _
  $region71: #{megnet_block_forward.9} parent=0 // pred_check_branch
    %988 = sbr.rel (0) target = $region73
  $region72: #{megnet_block_forward.9} parent=0 // pred_region
    _
  $region73: #{megnet_block_forward.9} parent=0 // pred_fallthru
    _

// kernel: megnet_block_forward.11
$region0: #{megnet_block_forward.11}
  #allocation0 [shape = 'u32[]', space=smem, size = 0x4, offset = 0x4, fixed_abs, tag = 'smem constant byte address 0x4 - core index']
  #allocation1 [shape = 'u32[72,128]{1,0:T(1,128)}', space=vmem, size = 0x9000, scoped, tag = 'internal scratch']
  #allocation2 [shape = 'f32[8,16]{1,0:T(8,128)}', space=vmem, size = 0x1000, scoped, tag = 'scratch operand']
  #allocation3 [shape = 'f32[8,1]{1,0:T(8,128)}', space=vmem, size = 0x1000, scoped, tag = 'scratch operand']
  #allocation4 [shape = 'f32[8,16]{1,0:T(8,128)}', space=vmem, size = 0x1000, scoped, tag = 'scratch operand']
  #allocation5 [shape = 'f32[8,1]{1,0:T(8,128)}', space=vmem, size = 0x1000, scoped, tag = 'scratch operand']
  %s0 = inlined_call_operand.vmem [shape: f32[128,16], index: 0, kind: input, shape index: {}]
  %s1 = inlined_call_operand.vmem [shape: s32[1,128], index: 1, kind: input, shape index: {}]
  %s2 = inlined_call_operand.vmem [shape: f32[128,16], index: 2, kind: input, shape index: {}]
  %s3 = inlined_call_operand.vmem [shape: s32[1,128], index: 3, kind: input, shape index: {}]
  %s4 = inlined_call_operand.vmem [shape: f32[8,16], index: 4, kind: input, shape index: {}, may-alias: {4,5}]
  %s5 = inlined_call_operand.vmem [shape: f32[8,16], index: 5, kind: input, shape index: {}, may-alias: {4,5}]
  %s6 = inlined_call_operand.vmem [shape: f32[16,32], index: 6, kind: input, shape index: {}]
  %s7 = inlined_call_operand.vmem [shape: f32[16,32], index: 7, kind: input, shape index: {}]
  %s8 = inlined_call_operand.vmem [shape: f32[16,32], index: 8, kind: input, shape index: {}]
  %s9 = inlined_call_operand.vmem [shape: f32[1,32], index: 9, kind: input, shape index: {}]
  %s10 = inlined_call_operand.vmem [shape: f32[32,32], index: 10, kind: input, shape index: {}]
  %s11 = inlined_call_operand.vmem [shape: f32[1,32], index: 11, kind: input, shape index: {}]
  %s12 = inlined_call_operand.vmem [shape: f32[32,16], index: 12, kind: input, shape index: {}]
  %s13 = inlined_call_operand.vmem [shape: f32[1,16], index: 13, kind: input, shape index: {}]
  %s14 = inlined_call_operand.vmem [shape: f32[8,16], index: 14, kind: output, shape index: {}]
  %s15 = sld [smem:[#allocation0]]
  $region74: #{megnet_block_forward.11} parent=0
    _
  %s17 = ssub.s32 1, %s15
  %s18 = scalar_select 0, %s17, %s15
  // Predicated region
  $region2: #{megnet_block_forward.11} parent=0 // pred_check
    _
  $region3: #{megnet_block_forward.11} parent=0 // pred_check_branch
    %20 = sbr.rel (0) target = $region5
  $region4: #{megnet_block_forward.11} parent=0 // pred_region
    _
  $region5: #{megnet_block_forward.11} parent=0 // pred_fallthru
    _
  // Predicated region
  $region6: #{megnet_block_forward.11} parent=0 // pred_check
    _
  $region7: #{megnet_block_forward.11} parent=0 // pred_check_branch
    %22 = sbr.rel (0) target = $region9
  $region8: #{megnet_block_forward.11} parent=0 // pred_region
    _
  $region9: #{megnet_block_forward.11} parent=0 // pred_fallthru
    _
  // Predicated region
  $region10: #{megnet_block_forward.11} parent=0 // pred_check
    _
  $region11: #{megnet_block_forward.11} parent=0 // pred_check_branch
    %24 = sbr.rel (0) target = $region13
  $region12: #{megnet_block_forward.11} parent=0 // pred_region
    _
  $region13: #{megnet_block_forward.11} parent=0 // pred_fallthru
    _
  // Predicated region
  $region14: #{megnet_block_forward.11} parent=0 // pred_check
    _
  $region15: #{megnet_block_forward.11} parent=0 // pred_check_branch
    %26 = sbr.rel (0) target = $region17
  $region16: #{megnet_block_forward.11} parent=0 // pred_region
    _
  $region17: #{megnet_block_forward.11} parent=0 // pred_fallthru
    _
  // Predicated region
  $region18: #{megnet_block_forward.11} parent=0 // pred_check
    _
  $region19: #{megnet_block_forward.11} parent=0 // pred_check_branch
    %28 = sbr.rel (0) target = $region21
  $region20: #{megnet_block_forward.11} parent=0 // pred_region
    _
  $region21: #{megnet_block_forward.11} parent=0 // pred_fallthru
    _
  // Predicated region
  $region22: #{megnet_block_forward.11} parent=0 // pred_check
    _
  $region23: #{megnet_block_forward.11} parent=0 // pred_check_branch
    %30 = sbr.rel (0) target = $region25
  $region24: #{megnet_block_forward.11} parent=0 // pred_region
    _
  $region25: #{megnet_block_forward.11} parent=0 // pred_fallthru
    _
  // Predicated region
  $region26: #{megnet_block_forward.11} parent=0 // pred_check
    _
  $region27: #{megnet_block_forward.11} parent=0 // pred_check_branch
    %32 = sbr.rel (0) target = $region29
  $region28: #{megnet_block_forward.11} parent=0 // pred_region
    _
  $region29: #{megnet_block_forward.11} parent=0 // pred_fallthru
    _
  // Predicated region
  $region30: #{megnet_block_forward.11} parent=0 // pred_check
    _
  $region31: #{megnet_block_forward.11} parent=0 // pred_check_branch
    %34 = sbr.rel (0) target = $region33
  $region32: #{megnet_block_forward.11} parent=0 // pred_region
    _
  $region33: #{megnet_block_forward.11} parent=0 // pred_fallthru
    _
  // Predicated region
  $region34: #{megnet_block_forward.11} parent=0 // pred_check
    _
  $region35: #{megnet_block_forward.11} parent=0 // pred_check_branch
    %36 = sbr.rel (0) target = $region37
  $region36: #{megnet_block_forward.11} parent=0 // pred_region
    _
  $region37: #{megnet_block_forward.11} parent=0 // pred_fallthru
    _
  // Predicated region
  $region38: #{megnet_block_forward.11} parent=0 // pred_check
    _
  $region39: #{megnet_block_forward.11} parent=0 // pred_check_branch
    %38 = sbr.rel (0) target = $region41
  $region40: #{megnet_block_forward.11} parent=0 // pred_region
    _
  $region41: #{megnet_block_forward.11} parent=0 // pred_fallthru
    _
  // Predicated region
  $region42: #{megnet_block_forward.11} parent=0 // pred_check
    _
  $region43: #{megnet_block_forward.11} parent=0 // pred_check_branch
    %40 = sbr.rel (0) target = $region45
  $region44: #{megnet_block_forward.11} parent=0 // pred_region
    _
  $region45: #{megnet_block_forward.11} parent=0 // pred_fallthru
    _
  // Predicated region
  $region46: #{megnet_block_forward.11} parent=0 // pred_check
    _
  $region47: #{megnet_block_forward.11} parent=0 // pred_check_branch
    %42 = sbr.rel (0) target = $region49
  $region48: #{megnet_block_forward.11} parent=0 // pred_region
    _
  $region49: #{megnet_block_forward.11} parent=0 // pred_fallthru
    _
  // Predicated region
  $region50: #{megnet_block_forward.11} parent=0 // pred_check
    _
  $region51: #{megnet_block_forward.11} parent=0 // pred_check_branch
    %44 = sbr.rel (0) target = $region53
  $region52: #{megnet_block_forward.11} parent=0 // pred_region
    _
  $region53: #{megnet_block_forward.11} parent=0 // pred_fallthru
    _
  // Predicated region
  $region54: #{megnet_block_forward.11} parent=0 // pred_check
    _
  $region55: #{megnet_block_forward.11} parent=0 // pred_check_branch
    %46 = sbr.rel (0) target = $region57
  $region56: #{megnet_block_forward.11} parent=0 // pred_region
    _
  $region57: #{megnet_block_forward.11} parent=0 // pred_fallthru
    _
  %p47 = scmp.eq.s32.totalorder 0, 0
  // Predicated region
  $region58: #{megnet_block_forward.11} parent=0 // pred_check
    %p48 = pneg %p47
  $region59: #{megnet_block_forward.11} parent=0 // pred_check_branch
    %50 = sbr.rel (%p48) target = $region61
  $region60: #{megnet_block_forward.11} parent=0 // pred_region
    %vm51 = vcmask 130048
    %52 = vst.msk [vmem:[#allocation2] sm:$0xff] %vm51, 0.0
    %vm53 = vcmask 7168
    %54 = vst.msk [vmem:[#allocation3] sm:$0xff] %vm53, 0.0
    %55 = vst.msk [vmem:[#allocation4] sm:$0xff] %vm51, 0.0
    %56 = vst.msk [vmem:[#allocation5] sm:$0xff] %vm53, 0.0
  $region61: #{megnet_block_forward.11} parent=0 // pred_fallthru
    _
  %v57 = vlaneseq
  %v58 = vshrl.u32 %v57, 7
  %s59 = smul.u32 0, 8
  %v60 = vstv %s59
  %v61 = vadd.s32 %v58, %v60
  %v62 = vld [vmem:[%s1] sm:$0x1]
  %v63 = vperm.slane %v62, 0
  %vm64 = vcmp.eq.s32.totalorder %v63, %v61
  %v65 = vsel %vm64, 1, 0
  %v66 = vcvt.s32.f32 %v65
  %v67 = vld [vmem:[#allocation2] sm:$0xff]
  %v68 = vld [vmem:[%s0] sm:$0xff]
  %v69 = vld [vmem:[%s0 + $0x8] sm:$0xff]
  %v70 = vld [vmem:[%s0 + $0x10] sm:$0xff]
  %v71 = vld [vmem:[%s0 + $0x18] sm:$0xff]
  %v72 = vld [vmem:[%s0 + $0x20] sm:$0xff]
  %v73 = vld [vmem:[%s0 + $0x28] sm:$0xff]
  %v74 = vld [vmem:[%s0 + $0x30] sm:$0xff]
  %v75 = vld [vmem:[%s0 + $0x38] sm:$0xff]
  %v76 = vld [vmem:[%s0 + $0x40] sm:$0xff]
  %v77 = vld [vmem:[%s0 + $0x48] sm:$0xff]
  %v78 = vld [vmem:[%s0 + $0x50] sm:$0xff]
  %v79 = vld [vmem:[%s0 + $0x58] sm:$0xff]
  %v80 = vld [vmem:[%s0 + $0x60] sm:$0xff]
  %v81 = vld [vmem:[%s0 + $0x68] sm:$0xff]
  %v82 = vld [vmem:[%s0 + $0x70] sm:$0xff]
  %v83 = vld [vmem:[%s0 + $0x78] sm:$0xff]
  %84 = vmatpush.msra.mxu0 %v83
  %85 = vmatpush.msra.mxu0 %v82
  %86 = vmatpush.msra.mxu0 %v81
  %87 = vmatpush.msra.mxu0 %v80
  %88 = vmatpush.msra.mxu0 %v79
  %89 = vmatpush.msra.mxu0 %v78
  %90 = vmatpush.msra.mxu0 %v77
  %91 = vmatpush.msra.mxu0 %v76
  %92 = vmatpush.msra.mxu0 %v75
  %93 = vmatpush.msra.mxu0 %v74
  %94 = vmatpush.msra.mxu0 %v73
  %95 = vmatpush.msra.mxu0 %v72
  %96 = vmatpush.msra.mxu0 %v71
  %97 = vmatpush.msra.mxu0 %v70
  %98 = vmatpush.msra.mxu0 %v69
  %99 = vmatpush.msra.mxu0 %v68
  %100 = vmatmul.f32.gmra.mxu0 %v66
  %v101 = vpop.f32.mrf.mxu0
  %v102 = vadd.f32 0.0, %v101
  %103 = vdwg.mxu0
  %v104 = vadd.f32 %v67, %v102
  %vm105 = vcmask 130048
  %106 = vst.msk [vmem:[#allocation2] sm:$0xff] %vm105, %v104
  %v107 = vld [vmem:[#allocation3] sm:$0xff]
  %108 = vadd.xlane.f32.xlu0 %v66
  %v109 = vpop.xlane.xlu0 %108
  %v110 = vadd.f32 %v107, %v109
  %vm111 = vcmask 7168
  %112 = vst.msk [vmem:[#allocation3] sm:$0xff] %vm111, %v110
  %v113 = vld [vmem:[%s3] sm:$0x1]
  %v114 = vperm.slane %v113, 0
  %vm115 = vcmp.eq.s32.totalorder %v114, %v61
  %v116 = vsel %vm115, 1, 0
  %v117 = vcvt.s32.f32 %v116
  %v118 = vld [vmem:[#allocation4] sm:$0xff]
  %v119 = vld [vmem:[%s2] sm:$0xff]
  %v120 = vld [vmem:[%s2 + $0x8] sm:$0xff]
  %v121 = vld [vmem:[%s2 + $0x10] sm:$0xff]
  %v122 = vld [vmem:[%s2 + $0x18] sm:$0xff]
  %v123 = vld [vmem:[%s2 + $0x20] sm:$0xff]
  %v124 = vld [vmem:[%s2 + $0x28] sm:$0xff]
  %v125 = vld [vmem:[%s2 + $0x30] sm:$0xff]
  %v126 = vld [vmem:[%s2 + $0x38] sm:$0xff]
  %v127 = vld [vmem:[%s2 + $0x40] sm:$0xff]
  %v128 = vld [vmem:[%s2 + $0x48] sm:$0xff]
  %v129 = vld [vmem:[%s2 + $0x50] sm:$0xff]
  %v130 = vld [vmem:[%s2 + $0x58] sm:$0xff]
  %v131 = vld [vmem:[%s2 + $0x60] sm:$0xff]
  %v132 = vld [vmem:[%s2 + $0x68] sm:$0xff]
  %v133 = vld [vmem:[%s2 + $0x70] sm:$0xff]
  %v134 = vld [vmem:[%s2 + $0x78] sm:$0xff]
  %135 = vmatpush.msra.mxu0 %v134
  %136 = vmatpush.msra.mxu0 %v133
  %137 = vmatpush.msra.mxu0 %v132
  %138 = vmatpush.msra.mxu0 %v131
  %139 = vmatpush.msra.mxu0 %v130
  %140 = vmatpush.msra.mxu0 %v129
  %141 = vmatpush.msra.mxu0 %v128
  %142 = vmatpush.msra.mxu0 %v127
  %143 = vmatpush.msra.mxu0 %v126
  %144 = vmatpush.msra.mxu0 %v125
  %145 = vmatpush.msra.mxu0 %v124
  %146 = vmatpush.msra.mxu0 %v123
  %147 = vmatpush.msra.mxu0 %v122
  %148 = vmatpush.msra.mxu0 %v121
  %149 = vmatpush.msra.mxu0 %v120
  %150 = vmatpush.msra.mxu0 %v119
  %151 = vmatmul.f32.gmra.mxu0 %v117
  %v152 = vpop.f32.mrf.mxu0
  %v153 = vadd.f32 0.0, %v152
  %154 = vdwg.mxu0
  %v155 = vadd.f32 %v118, %v153
  %156 = vst.msk [vmem:[#allocation4] sm:$0xff] %vm105, %v155
  %v157 = vld [vmem:[#allocation5] sm:$0xff]
  %158 = vadd.xlane.f32.xlu0 %v117
  %v159 = vpop.xlane.xlu0 %158
  %v160 = vadd.f32 %v157, %v159
  %161 = vst.msk [vmem:[#allocation5] sm:$0xff] %vm111, %v160
  // Predicated region
  $region62: #{megnet_block_forward.11} parent=0 // pred_check
    %p162 = pneg %p47
  $region63: #{megnet_block_forward.11} parent=0 // pred_check_branch
    %164 = sbr.rel (%p162) target = $region65
  $region64: #{megnet_block_forward.11} parent=0 // pred_region
    %v165 = vld [vmem:[#allocation2] sm:$0xff]
    %v166 = vld [vmem:[#allocation3] sm:$0xff]
    %v167 = vmax.f32 %v166, 1.0
    %169 = vset.pattern.permute.xlu0 0
    %170 = vperm.xlu0 %169, %v167
    %v171 = vpop.permute.xlu0 %170
    %v173 = vrcp.pop %v171
    %v174 = vmul.f32 %v171, %v173
    %v175 = vsub.f32 1.0, %v174
    %v176 = vmul.f32 %v173, %v175
    %v177 = vadd.f32 %v173, %v176
    %vm178 = vweird.f32 %v171
    %vm179 = vweird.f32 %v173
    %vm180 = vmor %vm178, %vm179
    %v181 = vsel %vm180, %v173, %v177
    %v182 = vand.u32 2147483647, %v171
    %vm183 = vcmp.eq.f32.partialorder %v182, 8.507059e+37
    %v184 = vand.u32 %v171, 2147483648
    %v185 = vor.u32 1.1754944e-38, %v184
    %v186 = vsel %vm183, %v185, %v181
    %v187 = vmul.f32 %v165, %v186
    %v188 = vld [vmem:[#allocation4] sm:$0xff]
    %v189 = vld [vmem:[#allocation5] sm:$0xff]
    %v190 = vmax.f32 %v189, 1.0
    %192 = vset.pattern.permute.xlu0 0
    %193 = vperm.xlu0 %192, %v190
    %v194 = vpop.permute.xlu0 %193
    %v196 = vrcp.pop %v194
    %v197 = vmul.f32 %v194, %v196
    %v198 = vsub.f32 1.0, %v197
    %v199 = vmul.f32 %v196, %v198
    %v200 = vadd.f32 %v196, %v199
    %vm201 = vweird.f32 %v194
    %vm202 = vweird.f32 %v196
    %vm203 = vmor %vm201, %vm202
    %v204 = vsel %vm203, %v196, %v200
    %v205 = vand.u32 2147483647, %v194
    %vm206 = vcmp.eq.f32.partialorder %v205, 8.507059e+37
    %v207 = vand.u32 %v194, 2147483648
    %v208 = vor.u32 1.1754944e-38, %v207
    %v209 = vsel %vm206, %v208, %v204
    %v210 = vmul.f32 %v188, %v209
    %v211 = vld [vmem:[%s6] sm:$0xff]
    %v212 = vld [vmem:[%s6 + $0x8] sm:$0xff]
    %v213 = vld [vmem:[%s7] sm:$0xff]
    %v214 = vld [vmem:[%s7 + $0x8] sm:$0xff]
    %v216 = vsel %vm105, %v210, 0
    %218 = vmatpush.msra.mxu0 0.0
    %219 = vmatpush.msra.mxu0 0.0
    %220 = vmatpush.msra.mxu0 0.0
    %221 = vmatpush.msra.mxu0 0.0
    %222 = vmatpush.msra.mxu0 0.0
    %223 = vmatpush.msra.mxu0 0.0
    %224 = vmatpush.msra.mxu0 0.0
    %225 = vmatpush.msra.mxu0 0.0
    %226 = vmatpush.msra.mxu0 0.0
    %227 = vmatpush.msra.mxu0 0.0
    %228 = vmatpush.msra.mxu0 0.0
    %229 = vmatpush.msra.mxu0 0.0
    %230 = vmatpush.msra.mxu0 0.0
    %231 = vmatpush.msra.mxu0 0.0
    %232 = vmatpush.msra.mxu0 %v214
    %233 = vmatpush.msra.mxu0 %v213
    %234 = vmatmul.f32.gmra.mxu0 %v216
    %v235 = vpop.f32.mrf.mxu0
    %v236 = vadd.f32 0.0, %v235
    %237 = vdwg.mxu0
    %v239 = vsel %vm105, %v187, 0
    %241 = vmatpush.msra.mxu0 0.0
    %242 = vmatpush.msra.mxu0 0.0
    %243 = vmatpush.msra.mxu0 0.0
    %244 = vmatpush.msra.mxu0 0.0
    %245 = vmatpush.msra.mxu0 0.0
    %246 = vmatpush.msra.mxu0 0.0
    %247 = vmatpush.msra.mxu0 0.0
    %248 = vmatpush.msra.mxu0 0.0
    %249 = vmatpush.msra.mxu0 0.0
    %250 = vmatpush.msra.mxu0 0.0
    %251 = vmatpush.msra.mxu0 0.0
    %252 = vmatpush.msra.mxu0 0.0
    %253 = vmatpush.msra.mxu0 0.0
    %254 = vmatpush.msra.mxu0 0.0
    %255 = vmatpush.msra.mxu0 %v212
    %256 = vmatpush.msra.mxu0 %v211
    %257 = vmatmul.f32.gmra.mxu0 %v239
    %v258 = vpop.f32.mrf.mxu0
    %v259 = vadd.f32 %v236, %v258
    %260 = vdwg.mxu0
    %v261 = vld [vmem:[%s4] sm:$0xff]
    %v262 = vld [vmem:[%s8] sm:$0xff]
    %v263 = vld [vmem:[%s8 + $0x8] sm:$0xff]
    %v265 = vsel %vm105, %v261, 0
    %267 = vmatpush.msra.mxu0 0.0
    %268 = vmatpush.msra.mxu0 0.0
    %269 = vmatpush.msra.mxu0 0.0
    %270 = vmatpush.msra.mxu0 0.0
    %271 = vmatpush.msra.mxu0 0.0
    %272 = vmatpush.msra.mxu0 0.0
    %273 = vmatpush.msra.mxu0 0.0
    %274 = vmatpush.msra.mxu0 0.0
    %275 = vmatpush.msra.mxu0 0.0
    %276 = vmatpush.msra.mxu0 0.0
    %277 = vmatpush.msra.mxu0 0.0
    %278 = vmatpush.msra.mxu0 0.0
    %279 = vmatpush.msra.mxu0 0.0
    %280 = vmatpush.msra.mxu0 0.0
    %281 = vmatpush.msra.mxu0 %v263
    %282 = vmatpush.msra.mxu0 %v262
    %283 = vmatmul.f32.gmra.mxu0 %v265
    %v284 = vpop.f32.mrf.mxu0
    %v285 = vadd.f32 0.0, %v284
    %286 = vdwg.mxu0
    %v287 = vadd.f32 %v259, %v285
    %v288 = vld [vmem:[%s9] sm:$0x1]
    %v290 = vperm.slane %v288, 0
    %v292 = vadd.f32 %v287, %v290
    %v293 = vmax.f32 %v292, 0.0
    %v294 = vld [vmem:[%s10] sm:$0xff]
    %v295 = vld [vmem:[%s10 + $0x8] sm:$0xff]
    %v296 = vld [vmem:[%s10 + $0x10] sm:$0xff]
    %v297 = vld [vmem:[%s10 + $0x18] sm:$0xff]
    %v298 = vld [vmem:[%s11] sm:$0x1]
    %v300 = vperm.slane %v298, 0
    %vm302 = vcmask 261120
    %v304 = vsel %vm302, %v293, 0
    %306 = vmatpush.msra.mxu0 0.0
    %307 = vmatpush.msra.mxu0 0.0
    %308 = vmatpush.msra.mxu0 0.0
    %309 = vmatpush.msra.mxu0 0.0
    %310 = vmatpush.msra.mxu0 0.0
    %311 = vmatpush.msra.mxu0 0.0
    %312 = vmatpush.msra.mxu0 0.0
    %313 = vmatpush.msra.mxu0 0.0
    %314 = vmatpush.msra.mxu0 0.0
    %315 = vmatpush.msra.mxu0 0.0
    %316 = vmatpush.msra.mxu0 0.0
    %317 = vmatpush.msra.mxu0 0.0
    %318 = vmatpush.msra.mxu0 %v297
    %319 = vmatpush.msra.mxu0 %v296
    %320 = vmatpush.msra.mxu0 %v295
    %321 = vmatpush.msra.mxu0 %v294
    %322 = vmatmul.f32.gmra.mxu0 %v304
    %v323 = vpop.f32.mrf.mxu0
    %v324 = vadd.f32 %v300, %v323
    %325 = vdwg.mxu0
    %v326 = vmax.f32 %v324, 0.0
    %v327 = vld [vmem:[%s12] sm:$0xff]
    %v328 = vld [vmem:[%s12 + $0x8] sm:$0xff]
    %v329 = vld [vmem:[%s12 + $0x10] sm:$0xff]
    %v330 = vld [vmem:[%s12 + $0x18] sm:$0xff]
    %v331 = vld [vmem:[%s13] sm:$0x1]
    %v333 = vperm.slane %v331, 0
    %v336 = vsel %vm302, %v326, 0
    %338 = vmatpush.msra.mxu0 0.0
    %339 = vmatpush.msra.mxu0 0.0
    %340 = vmatpush.msra.mxu0 0.0
    %341 = vmatpush.msra.mxu0 0.0
    %342 = vmatpush.msra.mxu0 0.0
    %343 = vmatpush.msra.mxu0 0.0
    %344 = vmatpush.msra.mxu0 0.0
    %345 = vmatpush.msra.mxu0 0.0
    %346 = vmatpush.msra.mxu0 0.0
    %347 = vmatpush.msra.mxu0 0.0
    %348 = vmatpush.msra.mxu0 0.0
    %349 = vmatpush.msra.mxu0 0.0
    %350 = vmatpush.msra.mxu0 %v330
    %351 = vmatpush.msra.mxu0 %v329
    %352 = vmatpush.msra.mxu0 %v328
    %353 = vmatpush.msra.mxu0 %v327
    %354 = vmatmul.f32.gmra.mxu0 %v336
    %v355 = vpop.f32.mrf.mxu0
    %v356 = vadd.f32 %v333, %v355
    %357 = vdwg.mxu0
    %v358 = vmax.f32 %v356, 0.0
    %v359 = vld [vmem:[%s5] sm:$0xff]
    %v360 = vadd.f32 %v358, %v359
    %361 = vst.msk [vmem:[%s14] sm:$0xff] %vm105, %v360
  $region65: #{megnet_block_forward.11} parent=0 // pred_fallthru
    _
  // Predicated region
  $region66: #{megnet_block_forward.11} parent=0 // pred_check
    _
  $region67: #{megnet_block_forward.11} parent=0 // pred_check_branch
    %363 = sbr.rel (0) target = $region69
  $region68: #{megnet_block_forward.11} parent=0 // pred_region
    _
  $region69: #{megnet_block_forward.11} parent=0 // pred_fallthru
    _
  // Predicated region
  $region70: #{megnet_block_forward.11} parent=0 // pred_check
    _
  $region71: #{megnet_block_forward.11} parent=0 // pred_check_branch
    %365 = sbr.rel (0) target = $region73
  $region72: #{megnet_block_forward.11} parent=0 // pred_region
    _
  $region73: #{megnet_block_forward.11} parent=0 // pred_fallthru
    _

// kernel: megnet_block_forward.10
$region0: #{megnet_block_forward.10}
  #allocation0 [shape = 'u32[]', space=smem, size = 0x4, offset = 0x4, fixed_abs, tag = 'smem constant byte address 0x4 - core index']
  #allocation1 [shape = 'u32[72,128]{1,0:T(1,128)}', space=vmem, size = 0x9000, scoped, tag = 'internal scratch']
  #allocation2 [shape = 'f32[128,16]{1,0:T(8,128)}', space=vmem, size = 0x10000, scoped, tag = 'scratch operand']
  #allocation3 [shape = 'f32[128,1]{1,0:T(8,128)}', space=vmem, size = 0x10000, scoped, tag = 'scratch operand']
  %s0 = inlined_call_operand.vmem [shape: f32[128,16], index: 0, kind: input, shape index: {}]
  %s1 = inlined_call_operand.vmem [shape: s32[1,128], index: 1, kind: input, shape index: {}]
  %s2 = inlined_call_operand.vmem [shape: f32[128,16], index: 2, kind: input, shape index: {}, may-alias: {2,4}]
  %s3 = inlined_call_operand.vmem [shape: f32[128,16], index: 3, kind: input, shape index: {}]
  %s4 = inlined_call_operand.vmem [shape: f32[128,16], index: 4, kind: input, shape index: {}, may-alias: {2,4}]
  %s5 = inlined_call_operand.vmem [shape: f32[16,32], index: 5, kind: input, shape index: {}]
  %s6 = inlined_call_operand.vmem [shape: f32[16,32], index: 6, kind: input, shape index: {}]
  %s7 = inlined_call_operand.vmem [shape: f32[16,32], index: 7, kind: input, shape index: {}]
  %s8 = inlined_call_operand.vmem [shape: f32[1,32], index: 8, kind: input, shape index: {}]
  %s9 = inlined_call_operand.vmem [shape: f32[32,32], index: 9, kind: input, shape index: {}]
  %s10 = inlined_call_operand.vmem [shape: f32[1,32], index: 10, kind: input, shape index: {}]
  %s11 = inlined_call_operand.vmem [shape: f32[32,16], index: 11, kind: input, shape index: {}]
  %s12 = inlined_call_operand.vmem [shape: f32[1,16], index: 12, kind: input, shape index: {}]
  %s13 = inlined_call_operand.vmem [shape: f32[128,16], index: 13, kind: output, shape index: {0}]
  %s14 = inlined_call_operand.vmem [shape: f32[128,16], index: 14, kind: output, shape index: {1}]
  %15 = xla_tuple %s13, %s14
  %s16 = sld [smem:[#allocation0]]
  $region78: #{megnet_block_forward.10} parent=0
    _
  %s18 = ssub.s32 1, %s16
  %s19 = scalar_select 0, %s18, %s16
  // Predicated region
  $region2: #{megnet_block_forward.10} parent=0 // pred_check
    _
  $region3: #{megnet_block_forward.10} parent=0 // pred_check_branch
    %21 = sbr.rel (0) target = $region5
  $region4: #{megnet_block_forward.10} parent=0 // pred_region
    _
  $region5: #{megnet_block_forward.10} parent=0 // pred_fallthru
    _
  // Predicated region
  $region6: #{megnet_block_forward.10} parent=0 // pred_check
    _
  $region7: #{megnet_block_forward.10} parent=0 // pred_check_branch
    %23 = sbr.rel (0) target = $region9
  $region8: #{megnet_block_forward.10} parent=0 // pred_region
    _
  $region9: #{megnet_block_forward.10} parent=0 // pred_fallthru
    _
  // Predicated region
  $region10: #{megnet_block_forward.10} parent=0 // pred_check
    _
  $region11: #{megnet_block_forward.10} parent=0 // pred_check_branch
    %25 = sbr.rel (0) target = $region13
  $region12: #{megnet_block_forward.10} parent=0 // pred_region
    _
  $region13: #{megnet_block_forward.10} parent=0 // pred_fallthru
    _
  // Predicated region
  $region14: #{megnet_block_forward.10} parent=0 // pred_check
    _
  $region15: #{megnet_block_forward.10} parent=0 // pred_check_branch
    %27 = sbr.rel (0) target = $region17
  $region16: #{megnet_block_forward.10} parent=0 // pred_region
    _
  $region17: #{megnet_block_forward.10} parent=0 // pred_fallthru
    _
  // Predicated region
  $region18: #{megnet_block_forward.10} parent=0 // pred_check
    _
  $region19: #{megnet_block_forward.10} parent=0 // pred_check_branch
    %29 = sbr.rel (0) target = $region21
  $region20: #{megnet_block_forward.10} parent=0 // pred_region
    _
  $region21: #{megnet_block_forward.10} parent=0 // pred_fallthru
    _
  // Predicated region
  $region22: #{megnet_block_forward.10} parent=0 // pred_check
    _
  $region23: #{megnet_block_forward.10} parent=0 // pred_check_branch
    %31 = sbr.rel (0) target = $region25
  $region24: #{megnet_block_forward.10} parent=0 // pred_region
    _
  $region25: #{megnet_block_forward.10} parent=0 // pred_fallthru
    _
  // Predicated region
  $region26: #{megnet_block_forward.10} parent=0 // pred_check
    _
  $region27: #{megnet_block_forward.10} parent=0 // pred_check_branch
    %33 = sbr.rel (0) target = $region29
  $region28: #{megnet_block_forward.10} parent=0 // pred_region
    _
  $region29: #{megnet_block_forward.10} parent=0 // pred_fallthru
    _
  // Predicated region
  $region30: #{megnet_block_forward.10} parent=0 // pred_check
    _
  $region31: #{megnet_block_forward.10} parent=0 // pred_check_branch
    %35 = sbr.rel (0) target = $region33
  $region32: #{megnet_block_forward.10} parent=0 // pred_region
    _
  $region33: #{megnet_block_forward.10} parent=0 // pred_fallthru
    _
  // Predicated region
  $region34: #{megnet_block_forward.10} parent=0 // pred_check
    _
  $region35: #{megnet_block_forward.10} parent=0 // pred_check_branch
    %37 = sbr.rel (0) target = $region37
  $region36: #{megnet_block_forward.10} parent=0 // pred_region
    _
  $region37: #{megnet_block_forward.10} parent=0 // pred_fallthru
    _
  // Predicated region
  $region38: #{megnet_block_forward.10} parent=0 // pred_check
    _
  $region39: #{megnet_block_forward.10} parent=0 // pred_check_branch
    %39 = sbr.rel (0) target = $region41
  $region40: #{megnet_block_forward.10} parent=0 // pred_region
    _
  $region41: #{megnet_block_forward.10} parent=0 // pred_fallthru
    _
  // Predicated region
  $region42: #{megnet_block_forward.10} parent=0 // pred_check
    _
  $region43: #{megnet_block_forward.10} parent=0 // pred_check_branch
    %41 = sbr.rel (0) target = $region45
  $region44: #{megnet_block_forward.10} parent=0 // pred_region
    _
  $region45: #{megnet_block_forward.10} parent=0 // pred_fallthru
    _
  // Predicated region
  $region46: #{megnet_block_forward.10} parent=0 // pred_check
    _
  $region47: #{megnet_block_forward.10} parent=0 // pred_check_branch
    %43 = sbr.rel (0) target = $region49
  $region48: #{megnet_block_forward.10} parent=0 // pred_region
    _
  $region49: #{megnet_block_forward.10} parent=0 // pred_fallthru
    _
  // Predicated region
  $region50: #{megnet_block_forward.10} parent=0 // pred_check
    _
  $region51: #{megnet_block_forward.10} parent=0 // pred_check_branch
    %45 = sbr.rel (0) target = $region53
  $region52: #{megnet_block_forward.10} parent=0 // pred_region
    _
  $region53: #{megnet_block_forward.10} parent=0 // pred_fallthru
    _
  %p46 = scmp.eq.s32.totalorder 0, 0
  // Predicated region
  $region54: #{megnet_block_forward.10} parent=0 // pred_check
    %p47 = pneg %p46
  $region55: #{megnet_block_forward.10} parent=0 // pred_check_branch
    %49 = sbr.rel (%p47) target = $region57
  $region56: #{megnet_block_forward.10} parent=0 // pred_region
    %vm50 = vcmask 130048
    %51 = vst.msk [vmem:[#allocation2] sm:$0xff] %vm50, 0.0
    %52 = vst.msk [vmem:[#allocation2 + $0x8] sm:$0xff] %vm50, 0.0
    %53 = vst.msk [vmem:[#allocation2 + $0x10] sm:$0xff] %vm50, 0.0
    %54 = vst.msk [vmem:[#allocation2 + $0x18] sm:$0xff] %vm50, 0.0
    %55 = vst.msk [vmem:[#allocation2 + $0x20] sm:$0xff] %vm50, 0.0
    %56 = vst.msk [vmem:[#allocation2 + $0x28] sm:$0xff] %vm50, 0.0
    %57 = vst.msk [vmem:[#allocation2 + $0x30] sm:$0xff] %vm50, 0.0
    %58 = vst.msk [vmem:[#allocation2 + $0x38] sm:$0xff] %vm50, 0.0
    %59 = vst.msk [vmem:[#allocation2 + $0x40] sm:$0xff] %vm50, 0.0
    %60 = vst.msk [vmem:[#allocation2 + $0x48] sm:$0xff] %vm50, 0.0
    %61 = vst.msk [vmem:[#allocation2 + $0x50] sm:$0xff] %vm50, 0.0
    %62 = vst.msk [vmem:[#allocation2 + $0x58] sm:$0xff] %vm50, 0.0
    %63 = vst.msk [vmem:[#allocation2 + $0x60] sm:$0xff] %vm50, 0.0
    %64 = vst.msk [vmem:[#allocation2 + $0x68] sm:$0xff] %vm50, 0.0
    %65 = vst.msk [vmem:[#allocation2 + $0x70] sm:$0xff] %vm50, 0.0
    %66 = vst.msk [vmem:[#allocation2 + $0x78] sm:$0xff] %vm50, 0.0
    %vm67 = vcmask 7168
    %68 = vst.msk [vmem:[#allocation3] sm:$0xff] %vm67, 0.0
    %69 = vst.msk [vmem:[#allocation3 + $0x8] sm:$0xff] %vm67, 0.0
    %70 = vst.msk [vmem:[#allocation3 + $0x10] sm:$0xff] %vm67, 0.0
    %71 = vst.msk [vmem:[#allocation3 + $0x18] sm:$0xff] %vm67, 0.0
    %72 = vst.msk [vmem:[#allocation3 + $0x20] sm:$0xff] %vm67, 0.0
    %73 = vst.msk [vmem:[#allocation3 + $0x28] sm:$0xff] %vm67, 0.0
    %74 = vst.msk [vmem:[#allocation3 + $0x30] sm:$0xff] %vm67, 0.0
    %75 = vst.msk [vmem:[#allocation3 + $0x38] sm:$0xff] %vm67, 0.0
    %76 = vst.msk [vmem:[#allocation3 + $0x40] sm:$0xff] %vm67, 0.0
    %77 = vst.msk [vmem:[#allocation3 + $0x48] sm:$0xff] %vm67, 0.0
    %78 = vst.msk [vmem:[#allocation3 + $0x50] sm:$0xff] %vm67, 0.0
    %79 = vst.msk [vmem:[#allocation3 + $0x58] sm:$0xff] %vm67, 0.0
    %80 = vst.msk [vmem:[#allocation3 + $0x60] sm:$0xff] %vm67, 0.0
    %81 = vst.msk [vmem:[#allocation3 + $0x68] sm:$0xff] %vm67, 0.0
    %82 = vst.msk [vmem:[#allocation3 + $0x70] sm:$0xff] %vm67, 0.0
    %83 = vst.msk [vmem:[#allocation3 + $0x78] sm:$0xff] %vm67, 0.0
  $region57: #{megnet_block_forward.10} parent=0 // pred_fallthru
    _
  %v84 = vlaneseq
  %v85 = vshrl.u32 %v84, 7
  %v86 = vadd.s32 %v85, 8
  %v87 = vadd.s32 %v85, 16
  %v88 = vadd.s32 %v85, 24
  %v89 = vadd.s32 %v85, 32
  %v90 = vadd.s32 %v85, 40
  %v91 = vadd.s32 %v85, 48
  %v92 = vadd.s32 %v85, 56
  %v93 = vadd.s32 %v85, 64
  %v94 = vadd.s32 %v85, 72
  %v95 = vadd.s32 %v85, 80
  %v96 = vadd.s32 %v85, 88
  %v97 = vadd.s32 %v85, 96
  %v98 = vadd.s32 %v85, 104
  %v99 = vadd.s32 %v85, 112
  %v100 = vadd.s32 %v85, 120
  %s101 = smul.u32 0, 128
  %v102 = vstv %s101
  %v103 = vadd.s32 %v85, %v102
  %v104 = vadd.s32 %v86, %v102
  %v105 = vadd.s32 %v87, %v102
  %v106 = vadd.s32 %v88, %v102
  %v107 = vadd.s32 %v89, %v102
  %v108 = vadd.s32 %v90, %v102
  %v109 = vadd.s32 %v91, %v102
  %v110 = vadd.s32 %v92, %v102
  %v111 = vadd.s32 %v93, %v102
  %v112 = vadd.s32 %v94, %v102
  %v113 = vadd.s32 %v95, %v102
  %v114 = vadd.s32 %v96, %v102
  %v115 = vadd.s32 %v97, %v102
  %v116 = vadd.s32 %v98, %v102
  %v117 = vadd.s32 %v99, %v102
  %v118 = vadd.s32 %v100, %v102
  %v119 = vld [vmem:[%s1] sm:$0x1]
  %v120 = vperm.slane %v119, 0
  %vm121 = vcmp.eq.s32.totalorder %v120, %v103
  %vm122 = vcmp.eq.s32.totalorder %v120, %v104
  %vm123 = vcmp.eq.s32.totalorder %v120, %v105
  %vm124 = vcmp.eq.s32.totalorder %v120, %v106
  %vm125 = vcmp.eq.s32.totalorder %v120, %v107
  %vm126 = vcmp.eq.s32.totalorder %v120, %v108
  %vm127 = vcmp.eq.s32.totalorder %v120, %v109
  %vm128 = vcmp.eq.s32.totalorder %v120, %v110
  %vm129 = vcmp.eq.s32.totalorder %v120, %v111
  %vm130 = vcmp.eq.s32.totalorder %v120, %v112
  %vm131 = vcmp.eq.s32.totalorder %v120, %v113
  %vm132 = vcmp.eq.s32.totalorder %v120, %v114
  %vm133 = vcmp.eq.s32.totalorder %v120, %v115
  %vm134 = vcmp.eq.s32.totalorder %v120, %v116
  %vm135 = vcmp.eq.s32.totalorder %v120, %v117
  %vm136 = vcmp.eq.s32.totalorder %v120, %v118
  %v137 = vsel %vm121, 1, 0
  %v138 = vsel %vm122, 1, 0
  %v139 = vsel %vm123, 1, 0
  %v140 = vsel %vm124, 1, 0
  %v141 = vsel %vm125, 1, 0
  %v142 = vsel %vm126, 1, 0
  %v143 = vsel %vm127, 1, 0
  %v144 = vsel %vm128, 1, 0
  %v145 = vsel %vm129, 1, 0
  %v146 = vsel %vm130, 1, 0
  %v147 = vsel %vm131, 1, 0
  %v148 = vsel %vm132, 1, 0
  %v149 = vsel %vm133, 1, 0
  %v150 = vsel %vm134, 1, 0
  %v151 = vsel %vm135, 1, 0
  %v152 = vsel %vm136, 1, 0
  %v153 = vcvt.s32.f32 %v137
  %v154 = vcvt.s32.f32 %v138
  %v155 = vcvt.s32.f32 %v139
  %v156 = vcvt.s32.f32 %v140
  %v157 = vcvt.s32.f32 %v141
  %v158 = vcvt.s32.f32 %v142
  %v159 = vcvt.s32.f32 %v143
  %v160 = vcvt.s32.f32 %v144
  %v161 = vcvt.s32.f32 %v145
  %v162 = vcvt.s32.f32 %v146
  %v163 = vcvt.s32.f32 %v147
  %v164 = vcvt.s32.f32 %v148
  %v165 = vcvt.s32.f32 %v149
  %v166 = vcvt.s32.f32 %v150
  %v167 = vcvt.s32.f32 %v151
  %v168 = vcvt.s32.f32 %v152
  %v169 = vld [vmem:[#allocation2] sm:$0xff]
  %v170 = vld [vmem:[#allocation2 + $0x8] sm:$0xff]
  %v171 = vld [vmem:[#allocation2 + $0x10] sm:$0xff]
  %v172 = vld [vmem:[#allocation2 + $0x18] sm:$0xff]
  %v173 = vld [vmem:[#allocation2 + $0x20] sm:$0xff]
  %v174 = vld [vmem:[#allocation2 + $0x28] sm:$0xff]
  %v175 = vld [vmem:[#allocation2 + $0x30] sm:$0xff]
  %v176 = vld [vmem:[#allocation2 + $0x38] sm:$0xff]
  %v177 = vld [vmem:[#allocation2 + $0x40] sm:$0xff]
  %v178 = vld [vmem:[#allocation2 + $0x48] sm:$0xff]
  %v179 = vld [vmem:[#allocation2 + $0x50] sm:$0xff]
  %v180 = vld [vmem:[#allocation2 + $0x58] sm:$0xff]
  %v181 = vld [vmem:[#allocation2 + $0x60] sm:$0xff]
  %v182 = vld [vmem:[#allocation2 + $0x68] sm:$0xff]
  %v183 = vld [vmem:[#allocation2 + $0x70] sm:$0xff]
  %v184 = vld [vmem:[#allocation2 + $0x78] sm:$0xff]
  %v185 = vld [vmem:[%s0] sm:$0xff]
  %v186 = vld [vmem:[%s0 + $0x8] sm:$0xff]
  %v187 = vld [vmem:[%s0 + $0x10] sm:$0xff]
  %v188 = vld [vmem:[%s0 + $0x18] sm:$0xff]
  %v189 = vld [vmem:[%s0 + $0x20] sm:$0xff]
  %v190 = vld [vmem:[%s0 + $0x28] sm:$0xff]
  %v191 = vld [vmem:[%s0 + $0x30] sm:$0xff]
  %v192 = vld [vmem:[%s0 + $0x38] sm:$0xff]
  %v193 = vld [vmem:[%s0 + $0x40] sm:$0xff]
  %v194 = vld [vmem:[%s0 + $0x48] sm:$0xff]
  %v195 = vld [vmem:[%s0 + $0x50] sm:$0xff]
  %v196 = vld [vmem:[%s0 + $0x58] sm:$0xff]
  %v197 = vld [vmem:[%s0 + $0x60] sm:$0xff]
  %v198 = vld [vmem:[%s0 + $0x68] sm:$0xff]
  %v199 = vld [vmem:[%s0 + $0x70] sm:$0xff]
  %v200 = vld [vmem:[%s0 + $0x78] sm:$0xff]
  %201 = vmatpush.msra.mxu0 %v200
  %202 = vmatpush.msra.mxu0 %v199
  %203 = vmatpush.msra.mxu0 %v198
  %204 = vmatpush.msra.mxu0 %v197
  %205 = vmatpush.msra.mxu0 %v196
  %206 = vmatpush.msra.mxu0 %v195
  %207 = vmatpush.msra.mxu0 %v194
  %208 = vmatpush.msra.mxu0 %v193
  %209 = vmatpush.msra.mxu0 %v192
  %210 = vmatpush.msra.mxu0 %v191
  %211 = vmatpush.msra.mxu0 %v190
  %212 = vmatpush.msra.mxu0 %v189
  %213 = vmatpush.msra.mxu0 %v188
  %214 = vmatpush.msra.mxu0 %v187
  %215 = vmatpush.msra.mxu0 %v186
  %216 = vmatpush.msra.mxu0 %v185
  %217 = vmatmul.f32.gmra.mxu0 %v153
  %v218 = vpop.f32.mrf.mxu0
  %v219 = vadd.f32 0.0, %v218
  %220 = vmatmul.f32.gmra.mxu0 %v154
  %v221 = vpop.f32.mrf.mxu0
  %v222 = vadd.f32 0.0, %v221
  %223 = vmatmul.f32.gmra.mxu0 %v155
  %v224 = vpop.f32.mrf.mxu0
  %v225 = vadd.f32 0.0, %v224
  %226 = vmatmul.f32.gmra.mxu0 %v156
  %v227 = vpop.f32.mrf.mxu0
  %v228 = vadd.f32 0.0, %v227
  %229 = vmatmul.f32.gmra.mxu0 %v157
  %v230 = vpop.f32.mrf.mxu0
  %v231 = vadd.f32 0.0, %v230
  %232 = vmatmul.f32.gmra.mxu0 %v158
  %v233 = vpop.f32.mrf.mxu0
  %v234 = vadd.f32 0.0, %v233
  %235 = vmatmul.f32.gmra.mxu0 %v159
  %v236 = vpop.f32.mrf.mxu0
  %v237 = vadd.f32 0.0, %v236
  %238 = vmatmul.f32.gmra.mxu0 %v160
  %v239 = vpop.f32.mrf.mxu0
  %v240 = vadd.f32 0.0, %v239
  %241 = vmatmul.f32.gmra.mxu0 %v161
  %v242 = vpop.f32.mrf.mxu0
  %v243 = vadd.f32 0.0, %v242
  %244 = vmatmul.f32.gmra.mxu0 %v162
  %v245 = vpop.f32.mrf.mxu0
  %v246 = vadd.f32 0.0, %v245
  %247 = vmatmul.f32.gmra.mxu0 %v163
  %v248 = vpop.f32.mrf.mxu0
  %v249 = vadd.f32 0.0, %v248
  %250 = vmatmul.f32.gmra.mxu0 %v164
  %v251 = vpop.f32.mrf.mxu0
  %v252 = vadd.f32 0.0, %v251
  %253 = vmatmul.f32.gmra.mxu0 %v165
  %v254 = vpop.f32.mrf.mxu0
  %v255 = vadd.f32 0.0, %v254
  %256 = vmatmul.f32.gmra.mxu0 %v166
  %v257 = vpop.f32.mrf.mxu0
  %v258 = vadd.f32 0.0, %v257
  %259 = vmatmul.f32.gmra.mxu0 %v167
  %v260 = vpop.f32.mrf.mxu0
  %v261 = vadd.f32 0.0, %v260
  %262 = vmatmul.f32.gmra.mxu0 %v168
  %v263 = vpop.f32.mrf.mxu0
  %v264 = vadd.f32 0.0, %v263
  %265 = vdwg.mxu0
  %v266 = vadd.f32 %v169, %v219
  %v267 = vadd.f32 %v170, %v222
  %v268 = vadd.f32 %v171, %v225
  %v269 = vadd.f32 %v172, %v228
  %v270 = vadd.f32 %v173, %v231
  %v271 = vadd.f32 %v174, %v234
  %v272 = vadd.f32 %v175, %v237
  %v273 = vadd.f32 %v176, %v240
  %v274 = vadd.f32 %v177, %v243
  %v275 = vadd.f32 %v178, %v246
  %v276 = vadd.f32 %v179, %v249
  %v277 = vadd.f32 %v180, %v252
  %v278 = vadd.f32 %v181, %v255
  %v279 = vadd.f32 %v182, %v258
  %v280 = vadd.f32 %v183, %v261
  %v281 = vadd.f32 %v184, %v264
  %vm282 = vcmask 130048
  %283 = vst.msk [vmem:[#allocation2] sm:$0xff] %vm282, %v266
  %284 = vst.msk [vmem:[#allocation2 + $0x8] sm:$0xff] %vm282, %v267
  %285 = vst.msk [vmem:[#allocation2 + $0x10] sm:$0xff] %vm282, %v268
  %286 = vst.msk [vmem:[#allocation2 + $0x18] sm:$0xff] %vm282, %v269
  %287 = vst.msk [vmem:[#allocation2 + $0x20] sm:$0xff] %vm282, %v270
  %288 = vst.msk [vmem:[#allocation2 + $0x28] sm:$0xff] %vm282, %v271
  %289 = vst.msk [vmem:[#allocation2 + $0x30] sm:$0xff] %vm282, %v272
  %290 = vst.msk [vmem:[#allocation2 + $0x38] sm:$0xff] %vm282, %v273
  %291 = vst.msk [vmem:[#allocation2 + $0x40] sm:$0xff] %vm282, %v274
  %292 = vst.msk [vmem:[#allocation2 + $0x48] sm:$0xff] %vm282, %v275
  %293 = vst.msk [vmem:[#allocation2 + $0x50] sm:$0xff] %vm282, %v276
  %294 = vst.msk [vmem:[#allocation2 + $0x58] sm:$0xff] %vm282, %v277
  %295 = vst.msk [vmem:[#allocation2 + $0x60] sm:$0xff] %vm282, %v278
  %296 = vst.msk [vmem:[#allocation2 + $0x68] sm:$0xff] %vm282, %v279
  %297 = vst.msk [vmem:[#allocation2 + $0x70] sm:$0xff] %vm282, %v280
  %298 = vst.msk [vmem:[#allocation2 + $0x78] sm:$0xff] %vm282, %v281
  %v299 = vld [vmem:[#allocation3] sm:$0xff]
  %v300 = vld [vmem:[#allocation3 + $0x8] sm:$0xff]
  %v301 = vld [vmem:[#allocation3 + $0x10] sm:$0xff]
  %v302 = vld [vmem:[#allocation3 + $0x18] sm:$0xff]
  %v303 = vld [vmem:[#allocation3 + $0x20] sm:$0xff]
  %v304 = vld [vmem:[#allocation3 + $0x28] sm:$0xff]
  %v305 = vld [vmem:[#allocation3 + $0x30] sm:$0xff]
  %v306 = vld [vmem:[#allocation3 + $0x38] sm:$0xff]
  %v307 = vld [vmem:[#allocation3 + $0x40] sm:$0xff]
  %v308 = vld [vmem:[#allocation3 + $0x48] sm:$0xff]
  %v309 = vld [vmem:[#allocation3 + $0x50] sm:$0xff]
  %v310 = vld [vmem:[#allocation3 + $0x58] sm:$0xff]
  %v311 = vld [vmem:[#allocation3 + $0x60] sm:$0xff]
  %v312 = vld [vmem:[#allocation3 + $0x68] sm:$0xff]
  %v313 = vld [vmem:[#allocation3 + $0x70] sm:$0xff]
  %v314 = vld [vmem:[#allocation3 + $0x78] sm:$0xff]
  %315 = vadd.xlane.f32.xlu0 %v153
  %v316 = vpop.xlane.xlu0 %315
  %317 = vadd.xlane.f32.xlu0 %v154
  %v318 = vpop.xlane.xlu0 %317
  %319 = vadd.xlane.f32.xlu0 %v155
  %v320 = vpop.xlane.xlu0 %319
  %321 = vadd.xlane.f32.xlu0 %v156
  %v322 = vpop.xlane.xlu0 %321
  %323 = vadd.xlane.f32.xlu0 %v157
  %v324 = vpop.xlane.xlu0 %323
  %325 = vadd.xlane.f32.xlu0 %v158
  %v326 = vpop.xlane.xlu0 %325
  %327 = vadd.xlane.f32.xlu0 %v159
  %v328 = vpop.xlane.xlu0 %327
  %329 = vadd.xlane.f32.xlu0 %v160
  %v330 = vpop.xlane.xlu0 %329
  %331 = vadd.xlane.f32.xlu0 %v161
  %v332 = vpop.xlane.xlu0 %331
  %333 = vadd.xlane.f32.xlu0 %v162
  %v334 = vpop.xlane.xlu0 %333
  %335 = vadd.xlane.f32.xlu0 %v163
  %v336 = vpop.xlane.xlu0 %335
  %337 = vadd.xlane.f32.xlu0 %v164
  %v338 = vpop.xlane.xlu0 %337
  %339 = vadd.xlane.f32.xlu0 %v165
  %v340 = vpop.xlane.xlu0 %339
  %341 = vadd.xlane.f32.xlu0 %v166
  %v342 = vpop.xlane.xlu0 %341
  %343 = vadd.xlane.f32.xlu0 %v167
  %v344 = vpop.xlane.xlu0 %343
  %345 = vadd.xlane.f32.xlu0 %v168
  %v346 = vpop.xlane.xlu0 %345
  %v347 = vadd.f32 %v299, %v316
  %v348 = vadd.f32 %v300, %v318
  %v349 = vadd.f32 %v301, %v320
  %v350 = vadd.f32 %v302, %v322
  %v351 = vadd.f32 %v303, %v324
  %v352 = vadd.f32 %v304, %v326
  %v353 = vadd.f32 %v305, %v328
  %v354 = vadd.f32 %v306, %v330
  %v355 = vadd.f32 %v307, %v332
  %v356 = vadd.f32 %v308, %v334
  %v357 = vadd.f32 %v309, %v336
  %v358 = vadd.f32 %v310, %v338
  %v359 = vadd.f32 %v311, %v340
  %v360 = vadd.f32 %v312, %v342
  %v361 = vadd.f32 %v313, %v344
  %v362 = vadd.f32 %v314, %v346
  %vm363 = vcmask 7168
  %364 = vst.msk [vmem:[#allocation3] sm:$0xff] %vm363, %v347
  %365 = vst.msk [vmem:[#allocation3 + $0x8] sm:$0xff] %vm363, %v348
  %366 = vst.msk [vmem:[#allocation3 + $0x10] sm:$0xff] %vm363, %v349
  %367 = vst.msk [vmem:[#allocation3 + $0x18] sm:$0xff] %vm363, %v350
  %368 = vst.msk [vmem:[#allocation3 + $0x20] sm:$0xff] %vm363, %v351
  %369 = vst.msk [vmem:[#allocation3 + $0x28] sm:$0xff] %vm363, %v352
  %370 = vst.msk [vmem:[#allocation3 + $0x30] sm:$0xff] %vm363, %v353
  %371 = vst.msk [vmem:[#allocation3 + $0x38] sm:$0xff] %vm363, %v354
  %372 = vst.msk [vmem:[#allocation3 + $0x40] sm:$0xff] %vm363, %v355
  %373 = vst.msk [vmem:[#allocation3 + $0x48] sm:$0xff] %vm363, %v356
  %374 = vst.msk [vmem:[#allocation3 + $0x50] sm:$0xff] %vm363, %v357
  %375 = vst.msk [vmem:[#allocation3 + $0x58] sm:$0xff] %vm363, %v358
  %376 = vst.msk [vmem:[#allocation3 + $0x60] sm:$0xff] %vm363, %v359
  %377 = vst.msk [vmem:[#allocation3 + $0x68] sm:$0xff] %vm363, %v360
  %378 = vst.msk [vmem:[#allocation3 + $0x70] sm:$0xff] %vm363, %v361
  %379 = vst.msk [vmem:[#allocation3 + $0x78] sm:$0xff] %vm363, %v362
  // Predicated region
  $region58: #{megnet_block_forward.10} parent=0 // pred_check
    %p380 = pneg %p46
  $region59: #{megnet_block_forward.10} parent=0 // pred_check_branch
    %382 = sbr.rel (%p380) target = $region61
  $region60: #{megnet_block_forward.10} parent=0 // pred_region
    %v383 = vld [vmem:[#allocation2] sm:$0xff]
    %v384 = vld [vmem:[#allocation2 + $0x8] sm:$0xff]
    %v385 = vld [vmem:[#allocation2 + $0x10] sm:$0xff]
    %v386 = vld [vmem:[#allocation2 + $0x18] sm:$0xff]
    %v387 = vld [vmem:[#allocation2 + $0x20] sm:$0xff]
    %v388 = vld [vmem:[#allocation2 + $0x28] sm:$0xff]
    %v389 = vld [vmem:[#allocation2 + $0x30] sm:$0xff]
    %v390 = vld [vmem:[#allocation2 + $0x38] sm:$0xff]
    %v391 = vld [vmem:[#allocation2 + $0x40] sm:$0xff]
    %v392 = vld [vmem:[#allocation2 + $0x48] sm:$0xff]
    %v393 = vld [vmem:[#allocation2 + $0x50] sm:$0xff]
    %v394 = vld [vmem:[#allocation2 + $0x58] sm:$0xff]
    %v395 = vld [vmem:[#allocation2 + $0x60] sm:$0xff]
    %v396 = vld [vmem:[#allocation2 + $0x68] sm:$0xff]
    %v397 = vld [vmem:[#allocation2 + $0x70] sm:$0xff]
    %v398 = vld [vmem:[#allocation2 + $0x78] sm:$0xff]
    %v399 = vld [vmem:[#allocation3] sm:$0xff]
    %v400 = vld [vmem:[#allocation3 + $0x8] sm:$0xff]
    %v401 = vld [vmem:[#allocation3 + $0x10] sm:$0xff]
    %v402 = vld [vmem:[#allocation3 + $0x18] sm:$0xff]
    %v403 = vld [vmem:[#allocation3 + $0x20] sm:$0xff]
    %v404 = vld [vmem:[#allocation3 + $0x28] sm:$0xff]
    %v405 = vld [vmem:[#allocation3 + $0x30] sm:$0xff]
    %v406 = vld [vmem:[#allocation3 + $0x38] sm:$0xff]
    %v407 = vld [vmem:[#allocation3 + $0x40] sm:$0xff]
    %v408 = vld [vmem:[#allocation3 + $0x48] sm:$0xff]
    %v409 = vld [vmem:[#allocation3 + $0x50] sm:$0xff]
    %v410 = vld [vmem:[#allocation3 + $0x58] sm:$0xff]
    %v411 = vld [vmem:[#allocation3 + $0x60] sm:$0xff]
    %v412 = vld [vmem:[#allocation3 + $0x68] sm:$0xff]
    %v413 = vld [vmem:[#allocation3 + $0x70] sm:$0xff]
    %v414 = vld [vmem:[#allocation3 + $0x78] sm:$0xff]
    %v415 = vmax.f32 %v399, 1.0
    %v416 = vmax.f32 %v400, 1.0
    %v417 = vmax.f32 %v401, 1.0
    %v418 = vmax.f32 %v402, 1.0
    %v419 = vmax.f32 %v403, 1.0
    %v420 = vmax.f32 %v404, 1.0
    %v421 = vmax.f32 %v405, 1.0
    %v422 = vmax.f32 %v406, 1.0
    %v423 = vmax.f32 %v407, 1.0
    %v424 = vmax.f32 %v408, 1.0
    %v425 = vmax.f32 %v409, 1.0
    %v426 = vmax.f32 %v410, 1.0
    %v427 = vmax.f32 %v411, 1.0
    %v428 = vmax.f32 %v412, 1.0
    %v429 = vmax.f32 %v413, 1.0
    %v430 = vmax.f32 %v414, 1.0
    %432 = vset.pattern.permute.xlu0 0
    %433 = vperm.xlu0 %432, %v415
    %v434 = vpop.permute.xlu0 %433
    %437 = vset.pattern.permute.xlu0 0
    %438 = vperm.xlu0 %437, %v416
    %v439 = vpop.permute.xlu0 %438
    %442 = vset.pattern.permute.xlu0 0
    %443 = vperm.xlu0 %442, %v417
    %v444 = vpop.permute.xlu0 %443
    %447 = vset.pattern.permute.xlu0 0
    %448 = vperm.xlu0 %447, %v418
    %v449 = vpop.permute.xlu0 %448
    %452 = vset.pattern.permute.xlu0 0
    %453 = vperm.xlu0 %452, %v419
    %v454 = vpop.permute.xlu0 %453
    %457 = vset.pattern.permute.xlu0 0
    %458 = vperm.xlu0 %457, %v420
    %v459 = vpop.permute.xlu0 %458
    %462 = vset.pattern.permute.xlu0 0
    %463 = vperm.xlu0 %462, %v421
    %v464 = vpop.permute.xlu0 %463
    %467 = vset.pattern.permute.xlu0 0
    %468 = vperm.xlu0 %467, %v422
    %v469 = vpop.permute.xlu0 %468
    %472 = vset.pattern.permute.xlu0 0
    %473 = vperm.xlu0 %472, %v423
    %v474 = vpop.permute.xlu0 %473
    %477 = vset.pattern.permute.xlu0 0
    %478 = vperm.xlu0 %477, %v424
    %v479 = vpop.permute.xlu0 %478
    %482 = vset.pattern.permute.xlu0 0
    %483 = vperm.xlu0 %482, %v425
    %v484 = vpop.permute.xlu0 %483
    %487 = vset.pattern.permute.xlu0 0
    %488 = vperm.xlu0 %487, %v426
    %v489 = vpop.permute.xlu0 %488
    %492 = vset.pattern.permute.xlu0 0
    %493 = vperm.xlu0 %492, %v427
    %v494 = vpop.permute.xlu0 %493
    %497 = vset.pattern.permute.xlu0 0
    %498 = vperm.xlu0 %497, %v428
    %v499 = vpop.permute.xlu0 %498
    %502 = vset.pattern.permute.xlu0 0
    %503 = vperm.xlu0 %502, %v429
    %v504 = vpop.permute.xlu0 %503
    %507 = vset.pattern.permute.xlu0 0
    %508 = vperm.xlu0 %507, %v430
    %v509 = vpop.permute.xlu0 %508
    %v511 = vrcp.pop %v434
    %v512 = vmul.f32 %v434, %v511
    %v513 = vsub.f32 1.0, %v512
    %v514 = vmul.f32 %v511, %v513
    %v515 = vadd.f32 %v511, %v514
    %vm516 = vweird.f32 %v434
    %vm517 = vweird.f32 %v511
    %vm518 = vmor %vm516, %vm517
    %v519 = vsel %vm518, %v511, %v515
    %v520 = vand.u32 2147483647, %v434
    %vm521 = vcmp.eq.f32.partialorder %v520, 8.507059e+37
    %v522 = vand.u32 %v434, 2147483648
    %v523 = vor.u32 1.1754944e-38, %v522
    %v524 = vsel %vm521, %v523, %v519
    %v525 = vmul.f32 %v383, %v524
    %v526 = vrcp.pop %v439
    %v527 = vmul.f32 %v439, %v526
    %v528 = vsub.f32 1.0, %v527
    %v529 = vmul.f32 %v526, %v528
    %v530 = vadd.f32 %v526, %v529
    %vm531 = vweird.f32 %v439
    %vm532 = vweird.f32 %v526
    %vm533 = vmor %vm531, %vm532
    %v534 = vsel %vm533, %v526, %v530
    %v535 = vand.u32 2147483647, %v439
    %vm536 = vcmp.eq.f32.partialorder %v535, 8.507059e+37
    %v537 = vand.u32 %v439, 2147483648
    %v538 = vor.u32 1.1754944e-38, %v537
    %v539 = vsel %vm536, %v538, %v534
    %v540 = vmul.f32 %v384, %v539
    %v541 = vrcp.pop %v444
    %v542 = vmul.f32 %v444, %v541
    %v543 = vsub.f32 1.0, %v542
    %v544 = vmul.f32 %v541, %v543
    %v545 = vadd.f32 %v541, %v544
    %vm546 = vweird.f32 %v444
    %vm547 = vweird.f32 %v541
    %vm548 = vmor %vm546, %vm547
    %v549 = vsel %vm548, %v541, %v545
    %v550 = vand.u32 2147483647, %v444
    %vm551 = vcmp.eq.f32.partialorder %v550, 8.507059e+37
    %v552 = vand.u32 %v444, 2147483648
    %v553 = vor.u32 1.1754944e-38, %v552
    %v554 = vsel %vm551, %v553, %v549
    %v555 = vmul.f32 %v385, %v554
    %v556 = vrcp.pop %v449
    %v557 = vmul.f32 %v449, %v556
    %v558 = vsub.f32 1.0, %v557
    %v559 = vmul.f32 %v556, %v558
    %v560 = vadd.f32 %v556, %v559
    %vm561 = vweird.f32 %v449
    %vm562 = vweird.f32 %v556
    %vm563 = vmor %vm561, %vm562
    %v564 = vsel %vm563, %v556, %v560
    %v565 = vand.u32 2147483647, %v449
    %vm566 = vcmp.eq.f32.partialorder %v565, 8.507059e+37
    %v567 = vand.u32 %v449, 2147483648
    %v568 = vor.u32 1.1754944e-38, %v567
    %v569 = vsel %vm566, %v568, %v564
    %v570 = vmul.f32 %v386, %v569
    %v571 = vrcp.pop %v454
    %v572 = vmul.f32 %v454, %v571
    %v573 = vsub.f32 1.0, %v572
    %v574 = vmul.f32 %v571, %v573
    %v575 = vadd.f32 %v571, %v574
    %vm576 = vweird.f32 %v454
    %vm577 = vweird.f32 %v571
    %vm578 = vmor %vm576, %vm577
    %v579 = vsel %vm578, %v571, %v575
    %v580 = vand.u32 2147483647, %v454
    %vm581 = vcmp.eq.f32.partialorder %v580, 8.507059e+37
    %v582 = vand.u32 %v454, 2147483648
    %v583 = vor.u32 1.1754944e-38, %v582
    %v584 = vsel %vm581, %v583, %v579
    %v585 = vmul.f32 %v387, %v584
    %v586 = vrcp.pop %v459
    %v587 = vmul.f32 %v459, %v586
    %v588 = vsub.f32 1.0, %v587
    %v589 = vmul.f32 %v586, %v588
    %v590 = vadd.f32 %v586, %v589
    %vm591 = vweird.f32 %v459
    %vm592 = vweird.f32 %v586
    %vm593 = vmor %vm591, %vm592
    %v594 = vsel %vm593, %v586, %v590
    %v595 = vand.u32 2147483647, %v459
    %vm596 = vcmp.eq.f32.partialorder %v595, 8.507059e+37
    %v597 = vand.u32 %v459, 2147483648
    %v598 = vor.u32 1.1754944e-38, %v597
    %v599 = vsel %vm596, %v598, %v594
    %v600 = vmul.f32 %v388, %v599
    %v601 = vrcp.pop %v464
    %v602 = vmul.f32 %v464, %v601
    %v603 = vsub.f32 1.0, %v602
    %v604 = vmul.f32 %v601, %v603
    %v605 = vadd.f32 %v601, %v604
    %vm606 = vweird.f32 %v464
    %vm607 = vweird.f32 %v601
    %vm608 = vmor %vm606, %vm607
    %v609 = vsel %vm608, %v601, %v605
    %v610 = vand.u32 2147483647, %v464
    %vm611 = vcmp.eq.f32.partialorder %v610, 8.507059e+37
    %v612 = vand.u32 %v464, 2147483648
    %v613 = vor.u32 1.1754944e-38, %v612
    %v614 = vsel %vm611, %v613, %v609
    %v615 = vmul.f32 %v389, %v614
    %v616 = vrcp.pop %v469
    %v617 = vmul.f32 %v469, %v616
    %v618 = vsub.f32 1.0, %v617
    %v619 = vmul.f32 %v616, %v618
    %v620 = vadd.f32 %v616, %v619
    %vm621 = vweird.f32 %v469
    %vm622 = vweird.f32 %v616
    %vm623 = vmor %vm621, %vm622
    %v624 = vsel %vm623, %v616, %v620
    %v625 = vand.u32 2147483647, %v469
    %vm626 = vcmp.eq.f32.partialorder %v625, 8.507059e+37
    %v627 = vand.u32 %v469, 2147483648
    %v628 = vor.u32 1.1754944e-38, %v627
    %v629 = vsel %vm626, %v628, %v624
    %v630 = vmul.f32 %v390, %v629
    %v631 = vrcp.pop %v474
    %v632 = vmul.f32 %v474, %v631
    %v633 = vsub.f32 1.0, %v632
    %v634 = vmul.f32 %v631, %v633
    %v635 = vadd.f32 %v631, %v634
    %vm636 = vweird.f32 %v474
    %vm637 = vweird.f32 %v631
    %vm638 = vmor %vm636, %vm637
    %v639 = vsel %vm638, %v631, %v635
    %v640 = vand.u32 2147483647, %v474
    %vm641 = vcmp.eq.f32.partialorder %v640, 8.507059e+37
    %v642 = vand.u32 %v474, 2147483648
    %v643 = vor.u32 1.1754944e-38, %v642
    %v644 = vsel %vm641, %v643, %v639
    %v645 = vmul.f32 %v391, %v644
    %v646 = vrcp.pop %v479
    %v647 = vmul.f32 %v479, %v646
    %v648 = vsub.f32 1.0, %v647
    %v649 = vmul.f32 %v646, %v648
    %v650 = vadd.f32 %v646, %v649
    %vm651 = vweird.f32 %v479
    %vm652 = vweird.f32 %v646
    %vm653 = vmor %vm651, %vm652
    %v654 = vsel %vm653, %v646, %v650
    %v655 = vand.u32 2147483647, %v479
    %vm656 = vcmp.eq.f32.partialorder %v655, 8.507059e+37
    %v657 = vand.u32 %v479, 2147483648
    %v658 = vor.u32 1.1754944e-38, %v657
    %v659 = vsel %vm656, %v658, %v654
    %v660 = vmul.f32 %v392, %v659
    %v661 = vrcp.pop %v484
    %v662 = vmul.f32 %v484, %v661
    %v663 = vsub.f32 1.0, %v662
    %v664 = vmul.f32 %v661, %v663
    %v665 = vadd.f32 %v661, %v664
    %vm666 = vweird.f32 %v484
    %vm667 = vweird.f32 %v661
    %vm668 = vmor %vm666, %vm667
    %v669 = vsel %vm668, %v661, %v665
    %v670 = vand.u32 2147483647, %v484
    %vm671 = vcmp.eq.f32.partialorder %v670, 8.507059e+37
    %v672 = vand.u32 %v484, 2147483648
    %v673 = vor.u32 1.1754944e-38, %v672
    %v674 = vsel %vm671, %v673, %v669
    %v675 = vmul.f32 %v393, %v674
    %v676 = vrcp.pop %v489
    %v677 = vmul.f32 %v489, %v676
    %v678 = vsub.f32 1.0, %v677
    %v679 = vmul.f32 %v676, %v678
    %v680 = vadd.f32 %v676, %v679
    %vm681 = vweird.f32 %v489
    %vm682 = vweird.f32 %v676
    %vm683 = vmor %vm681, %vm682
    %v684 = vsel %vm683, %v676, %v680
    %v685 = vand.u32 2147483647, %v489
    %vm686 = vcmp.eq.f32.partialorder %v685, 8.507059e+37
    %v687 = vand.u32 %v489, 2147483648
    %v688 = vor.u32 1.1754944e-38, %v687
    %v689 = vsel %vm686, %v688, %v684
    %v690 = vmul.f32 %v394, %v689
    %v691 = vrcp.pop %v494
    %v692 = vmul.f32 %v494, %v691
    %v693 = vsub.f32 1.0, %v692
    %v694 = vmul.f32 %v691, %v693
    %v695 = vadd.f32 %v691, %v694
    %vm696 = vweird.f32 %v494
    %vm697 = vweird.f32 %v691
    %vm698 = vmor %vm696, %vm697
    %v699 = vsel %vm698, %v691, %v695
    %v700 = vand.u32 2147483647, %v494
    %vm701 = vcmp.eq.f32.partialorder %v700, 8.507059e+37
    %v702 = vand.u32 %v494, 2147483648
    %v703 = vor.u32 1.1754944e-38, %v702
    %v704 = vsel %vm701, %v703, %v699
    %v705 = vmul.f32 %v395, %v704
    %v706 = vrcp.pop %v499
    %v707 = vmul.f32 %v499, %v706
    %v708 = vsub.f32 1.0, %v707
    %v709 = vmul.f32 %v706, %v708
    %v710 = vadd.f32 %v706, %v709
    %vm711 = vweird.f32 %v499
    %vm712 = vweird.f32 %v706
    %vm713 = vmor %vm711, %vm712
    %v714 = vsel %vm713, %v706, %v710
    %v715 = vand.u32 2147483647, %v499
    %vm716 = vcmp.eq.f32.partialorder %v715, 8.507059e+37
    %v717 = vand.u32 %v499, 2147483648
    %v718 = vor.u32 1.1754944e-38, %v717
    %v719 = vsel %vm716, %v718, %v714
    %v720 = vmul.f32 %v396, %v719
    %v721 = vrcp.pop %v504
    %v722 = vmul.f32 %v504, %v721
    %v723 = vsub.f32 1.0, %v722
    %v724 = vmul.f32 %v721, %v723
    %v725 = vadd.f32 %v721, %v724
    %vm726 = vweird.f32 %v504
    %vm727 = vweird.f32 %v721
    %vm728 = vmor %vm726, %vm727
    %v729 = vsel %vm728, %v721, %v725
    %v730 = vand.u32 2147483647, %v504
    %vm731 = vcmp.eq.f32.partialorder %v730, 8.507059e+37
    %v732 = vand.u32 %v504, 2147483648
    %v733 = vor.u32 1.1754944e-38, %v732
    %v734 = vsel %vm731, %v733, %v729
    %v735 = vmul.f32 %v397, %v734
    %v736 = vrcp.pop %v509
    %v737 = vmul.f32 %v509, %v736
    %v738 = vsub.f32 1.0, %v737
    %v739 = vmul.f32 %v736, %v738
    %v740 = vadd.f32 %v736, %v739
    %vm741 = vweird.f32 %v509
    %vm742 = vweird.f32 %v736
    %vm743 = vmor %vm741, %vm742
    %v744 = vsel %vm743, %v736, %v740
    %v745 = vand.u32 2147483647, %v509
    %vm746 = vcmp.eq.f32.partialorder %v745, 8.507059e+37
    %v747 = vand.u32 %v509, 2147483648
    %v748 = vor.u32 1.1754944e-38, %v747
    %v749 = vsel %vm746, %v748, %v744
    %v750 = vmul.f32 %v398, %v749
    %v751 = vld [vmem:[%s5] sm:$0xff]
    %v752 = vld [vmem:[%s5 + $0x8] sm:$0xff]
    %v753 = vld [vmem:[%s2] sm:$0xff]
    %v754 = vld [vmem:[%s2 + $0x8] sm:$0xff]
    %v755 = vld [vmem:[%s2 + $0x10] sm:$0xff]
    %v756 = vld [vmem:[%s2 + $0x18] sm:$0xff]
    %v757 = vld [vmem:[%s2 + $0x20] sm:$0xff]
    %v758 = vld [vmem:[%s2 + $0x28] sm:$0xff]
    %v759 = vld [vmem:[%s2 + $0x30] sm:$0xff]
    %v760 = vld [vmem:[%s2 + $0x38] sm:$0xff]
    %v761 = vld [vmem:[%s2 + $0x40] sm:$0xff]
    %v762 = vld [vmem:[%s2 + $0x48] sm:$0xff]
    %v763 = vld [vmem:[%s2 + $0x50] sm:$0xff]
    %v764 = vld [vmem:[%s2 + $0x58] sm:$0xff]
    %v765 = vld [vmem:[%s2 + $0x60] sm:$0xff]
    %v766 = vld [vmem:[%s2 + $0x68] sm:$0xff]
    %v767 = vld [vmem:[%s2 + $0x70] sm:$0xff]
    %v768 = vld [vmem:[%s2 + $0x78] sm:$0xff]
    %v769 = vld [vmem:[%s6] sm:$0xff]
    %v770 = vld [vmem:[%s6 + $0x8] sm:$0xff]
    %v772 = vsel %vm282, %v753, 0
    %v775 = vsel %vm282, %v754, 0
    %v778 = vsel %vm282, %v755, 0
    %v781 = vsel %vm282, %v756, 0
    %v784 = vsel %vm282, %v757, 0
    %v787 = vsel %vm282, %v758, 0
    %v790 = vsel %vm282, %v759, 0
    %v793 = vsel %vm282, %v760, 0
    %v796 = vsel %vm282, %v761, 0
    %v799 = vsel %vm282, %v762, 0
    %v802 = vsel %vm282, %v763, 0
    %v805 = vsel %vm282, %v764, 0
    %v808 = vsel %vm282, %v765, 0
    %v811 = vsel %vm282, %v766, 0
    %v814 = vsel %vm282, %v767, 0
    %v817 = vsel %vm282, %v768, 0
    %819 = vmatpush.msra.mxu0 0.0
    %820 = vmatpush.msra.mxu0 0.0
    %821 = vmatpush.msra.mxu0 0.0
    %822 = vmatpush.msra.mxu0 0.0
    %823 = vmatpush.msra.mxu0 0.0
    %824 = vmatpush.msra.mxu0 0.0
    %825 = vmatpush.msra.mxu0 0.0
    %826 = vmatpush.msra.mxu0 0.0
    %827 = vmatpush.msra.mxu0 0.0
    %828 = vmatpush.msra.mxu0 0.0
    %829 = vmatpush.msra.mxu0 0.0
    %830 = vmatpush.msra.mxu0 0.0
    %831 = vmatpush.msra.mxu0 0.0
    %832 = vmatpush.msra.mxu0 0.0
    %833 = vmatpush.msra.mxu0 %v770
    %834 = vmatpush.msra.mxu0 %v769
    %835 = vmatmul.f32.gmra.mxu0 %v772
    %v836 = vpop.f32.mrf.mxu0
    %v837 = vadd.f32 0.0, %v836
    %838 = vmatmul.f32.gmra.mxu0 %v775
    %v839 = vpop.f32.mrf.mxu0
    %v840 = vadd.f32 0.0, %v839
    %841 = vmatmul.f32.gmra.mxu0 %v778
    %v842 = vpop.f32.mrf.mxu0
    %v843 = vadd.f32 0.0, %v842
    %844 = vmatmul.f32.gmra.mxu0 %v781
    %v845 = vpop.f32.mrf.mxu0
    %v846 = vadd.f32 0.0, %v845
    %847 = vmatmul.f32.gmra.mxu0 %v784
    %v848 = vpop.f32.mrf.mxu0
    %v849 = vadd.f32 0.0, %v848
    %850 = vmatmul.f32.gmra.mxu0 %v787
    %v851 = vpop.f32.mrf.mxu0
    %v852 = vadd.f32 0.0, %v851
    %853 = vmatmul.f32.gmra.mxu0 %v790
    %v854 = vpop.f32.mrf.mxu0
    %v855 = vadd.f32 0.0, %v854
    %856 = vmatmul.f32.gmra.mxu0 %v793
    %v857 = vpop.f32.mrf.mxu0
    %v858 = vadd.f32 0.0, %v857
    %859 = vmatmul.f32.gmra.mxu0 %v796
    %v860 = vpop.f32.mrf.mxu0
    %v861 = vadd.f32 0.0, %v860
    %862 = vmatmul.f32.gmra.mxu0 %v799
    %v863 = vpop.f32.mrf.mxu0
    %v864 = vadd.f32 0.0, %v863
    %865 = vmatmul.f32.gmra.mxu0 %v802
    %v866 = vpop.f32.mrf.mxu0
    %v867 = vadd.f32 0.0, %v866
    %868 = vmatmul.f32.gmra.mxu0 %v805
    %v869 = vpop.f32.mrf.mxu0
    %v870 = vadd.f32 0.0, %v869
    %871 = vmatmul.f32.gmra.mxu0 %v808
    %v872 = vpop.f32.mrf.mxu0
    %v873 = vadd.f32 0.0, %v872
    %874 = vmatmul.f32.gmra.mxu0 %v811
    %v875 = vpop.f32.mrf.mxu0
    %v876 = vadd.f32 0.0, %v875
    %877 = vmatmul.f32.gmra.mxu0 %v814
    %v878 = vpop.f32.mrf.mxu0
    %v879 = vadd.f32 0.0, %v878
    %880 = vmatmul.f32.gmra.mxu0 %v817
    %v881 = vpop.f32.mrf.mxu0
    %v882 = vadd.f32 0.0, %v881
    %883 = vdwg.mxu0
    %v885 = vsel %vm282, %v525, 0
    %v888 = vsel %vm282, %v540, 0
    %v891 = vsel %vm282, %v555, 0
    %v894 = vsel %vm282, %v570, 0
    %v897 = vsel %vm282, %v585, 0
    %v900 = vsel %vm282, %v600, 0
    %v903 = vsel %vm282, %v615, 0
    %v906 = vsel %vm282, %v630, 0
    %v909 = vsel %vm282, %v645, 0
    %v912 = vsel %vm282, %v660, 0
    %v915 = vsel %vm282, %v675, 0
    %v918 = vsel %vm282, %v690, 0
    %v921 = vsel %vm282, %v705, 0
    %v924 = vsel %vm282, %v720, 0
    %v927 = vsel %vm282, %v735, 0
    %v930 = vsel %vm282, %v750, 0
    %932 = vmatpush.msra.mxu0 0.0
    %933 = vmatpush.msra.mxu0 0.0
    %934 = vmatpush.msra.mxu0 0.0
    %935 = vmatpush.msra.mxu0 0.0
    %936 = vmatpush.msra.mxu0 0.0
    %937 = vmatpush.msra.mxu0 0.0
    %938 = vmatpush.msra.mxu0 0.0
    %939 = vmatpush.msra.mxu0 0.0
    %940 = vmatpush.msra.mxu0 0.0
    %941 = vmatpush.msra.mxu0 0.0
    %942 = vmatpush.msra.mxu0 0.0
    %943 = vmatpush.msra.mxu0 0.0
    %944 = vmatpush.msra.mxu0 0.0
    %945 = vmatpush.msra.mxu0 0.0
    %946 = vmatpush.msra.mxu0 %v752
    %947 = vmatpush.msra.mxu0 %v751
    %948 = vmatmul.f32.gmra.mxu0 %v885
    %v949 = vpop.f32.mrf.mxu0
    %v950 = vadd.f32 %v837, %v949
    %951 = vmatmul.f32.gmra.mxu0 %v888
    %v952 = vpop.f32.mrf.mxu0
    %v953 = vadd.f32 %v840, %v952
    %954 = vmatmul.f32.gmra.mxu0 %v891
    %v955 = vpop.f32.mrf.mxu0
    %v956 = vadd.f32 %v843, %v955
    %957 = vmatmul.f32.gmra.mxu0 %v894
    %v958 = vpop.f32.mrf.mxu0
    %v959 = vadd.f32 %v846, %v958
    %960 = vmatmul.f32.gmra.mxu0 %v897
    %v961 = vpop.f32.mrf.mxu0
    %v962 = vadd.f32 %v849, %v961
    %963 = vmatmul.f32.gmra.mxu0 %v900
    %v964 = vpop.f32.mrf.mxu0
    %v965 = vadd.f32 %v852, %v964
    %966 = vmatmul.f32.gmra.mxu0 %v903
    %v967 = vpop.f32.mrf.mxu0
    %v968 = vadd.f32 %v855, %v967
    %969 = vmatmul.f32.gmra.mxu0 %v906
    %v970 = vpop.f32.mrf.mxu0
    %v971 = vadd.f32 %v858, %v970
    %972 = vmatmul.f32.gmra.mxu0 %v909
    %v973 = vpop.f32.mrf.mxu0
    %v974 = vadd.f32 %v861, %v973
    %975 = vmatmul.f32.gmra.mxu0 %v912
    %v976 = vpop.f32.mrf.mxu0
    %v977 = vadd.f32 %v864, %v976
    %978 = vmatmul.f32.gmra.mxu0 %v915
    %v979 = vpop.f32.mrf.mxu0
    %v980 = vadd.f32 %v867, %v979
    %981 = vmatmul.f32.gmra.mxu0 %v918
    %v982 = vpop.f32.mrf.mxu0
    %v983 = vadd.f32 %v870, %v982
    %984 = vmatmul.f32.gmra.mxu0 %v921
    %v985 = vpop.f32.mrf.mxu0
    %v986 = vadd.f32 %v873, %v985
    %987 = vmatmul.f32.gmra.mxu0 %v924
    %v988 = vpop.f32.mrf.mxu0
    %v989 = vadd.f32 %v876, %v988
    %990 = vmatmul.f32.gmra.mxu0 %v927
    %v991 = vpop.f32.mrf.mxu0
    %v992 = vadd.f32 %v879, %v991
    %993 = vmatmul.f32.gmra.mxu0 %v930
    %v994 = vpop.f32.mrf.mxu0
    %v995 = vadd.f32 %v882, %v994
    %996 = vdwg.mxu0
    %v997 = vld [vmem:[%s3] sm:$0xff]
    %v998 = vld [vmem:[%s3 + $0x8] sm:$0xff]
    %v999 = vld [vmem:[%s3 + $0x10] sm:$0xff]
    %v1000 = vld [vmem:[%s3 + $0x18] sm:$0xff]
    %v1001 = vld [vmem:[%s3 + $0x20] sm:$0xff]
    %v1002 = vld [vmem:[%s3 + $0x28] sm:$0xff]
    %v1003 = vld [vmem:[%s3 + $0x30] sm:$0xff]
    %v1004 = vld [vmem:[%s3 + $0x38] sm:$0xff]
    %v1005 = vld [vmem:[%s3 + $0x40] sm:$0xff]
    %v1006 = vld [vmem:[%s3 + $0x48] sm:$0xff]
    %v1007 = vld [vmem:[%s3 + $0x50] sm:$0xff]
    %v1008 = vld [vmem:[%s3 + $0x58] sm:$0xff]
    %v1009 = vld [vmem:[%s3 + $0x60] sm:$0xff]
    %v1010 = vld [vmem:[%s3 + $0x68] sm:$0xff]
    %v1011 = vld [vmem:[%s3 + $0x70] sm:$0xff]
    %v1012 = vld [vmem:[%s3 + $0x78] sm:$0xff]
    %v1013 = vld [vmem:[%s7] sm:$0xff]
    %v1014 = vld [vmem:[%s7 + $0x8] sm:$0xff]
    %v1016 = vsel %vm282, %v997, 0
    %v1019 = vsel %vm282, %v998, 0
    %v1022 = vsel %vm282, %v999, 0
    %v1025 = vsel %vm282, %v1000, 0
    %v1028 = vsel %vm282, %v1001, 0
    %v1031 = vsel %vm282, %v1002, 0
    %v1034 = vsel %vm282, %v1003, 0
    %v1037 = vsel %vm282, %v1004, 0
    %v1040 = vsel %vm282, %v1005, 0
    %v1043 = vsel %vm282, %v1006, 0
    %v1046 = vsel %vm282, %v1007, 0
    %v1049 = vsel %vm282, %v1008, 0
    %v1052 = vsel %vm282, %v1009, 0
    %v1055 = vsel %vm282, %v1010, 0
    %v1058 = vsel %vm282, %v1011, 0
    %v1061 = vsel %vm282, %v1012, 0
    %1063 = vmatpush.msra.mxu0 0.0
    %1064 = vmatpush.msra.mxu0 0.0
    %1065 = vmatpush.msra.mxu0 0.0
    %1066 = vmatpush.msra.mxu0 0.0
    %1067 = vmatpush.msra.mxu0 0.0
    %1068 = vmatpush.msra.mxu0 0.0
    %1069 = vmatpush.msra.mxu0 0.0
    %1070 = vmatpush.msra.mxu0 0.0
    %1071 = vmatpush.msra.mxu0 0.0
    %1072 = vmatpush.msra.mxu0 0.0
    %1073 = vmatpush.msra.mxu0 0.0
    %1074 = vmatpush.msra.mxu0 0.0
    %1075 = vmatpush.msra.mxu0 0.0
    %1076 = vmatpush.msra.mxu0 0.0
    %1077 = vmatpush.msra.mxu0 %v1014
    %1078 = vmatpush.msra.mxu0 %v1013
    %1079 = vmatmul.f32.gmra.mxu0 %v1016
    %v1080 = vpop.f32.mrf.mxu0
    %v1081 = vadd.f32 0.0, %v1080
    %1082 = vmatmul.f32.gmra.mxu0 %v1019
    %v1083 = vpop.f32.mrf.mxu0
    %v1084 = vadd.f32 0.0, %v1083
    %1085 = vmatmul.f32.gmra.mxu0 %v1022
    %v1086 = vpop.f32.mrf.mxu0
    %v1087 = vadd.f32 0.0, %v1086
    %1088 = vmatmul.f32.gmra.mxu0 %v1025
    %v1089 = vpop.f32.mrf.mxu0
    %v1090 = vadd.f32 0.0, %v1089
    %1091 = vmatmul.f32.gmra.mxu0 %v1028
    %v1092 = vpop.f32.mrf.mxu0
    %v1093 = vadd.f32 0.0, %v1092
    %1094 = vmatmul.f32.gmra.mxu0 %v1031
    %v1095 = vpop.f32.mrf.mxu0
    %v1096 = vadd.f32 0.0, %v1095
    %1097 = vmatmul.f32.gmra.mxu0 %v1034
    %v1098 = vpop.f32.mrf.mxu0
    %v1099 = vadd.f32 0.0, %v1098
    %1100 = vmatmul.f32.gmra.mxu0 %v1037
    %v1101 = vpop.f32.mrf.mxu0
    %v1102 = vadd.f32 0.0, %v1101
    %1103 = vmatmul.f32.gmra.mxu0 %v1040
    %v1104 = vpop.f32.mrf.mxu0
    %v1105 = vadd.f32 0.0, %v1104
    %1106 = vmatmul.f32.gmra.mxu0 %v1043
    %v1107 = vpop.f32.mrf.mxu0
    %v1108 = vadd.f32 0.0, %v1107
    %1109 = vmatmul.f32.gmra.mxu0 %v1046
    %v1110 = vpop.f32.mrf.mxu0
    %v1111 = vadd.f32 0.0, %v1110
    %1112 = vmatmul.f32.gmra.mxu0 %v1049
    %v1113 = vpop.f32.mrf.mxu0
    %v1114 = vadd.f32 0.0, %v1113
    %1115 = vmatmul.f32.gmra.mxu0 %v1052
    %v1116 = vpop.f32.mrf.mxu0
    %v1117 = vadd.f32 0.0, %v1116
    %1118 = vmatmul.f32.gmra.mxu0 %v1055
    %v1119 = vpop.f32.mrf.mxu0
    %v1120 = vadd.f32 0.0, %v1119
    %1121 = vmatmul.f32.gmra.mxu0 %v1058
    %v1122 = vpop.f32.mrf.mxu0
    %v1123 = vadd.f32 0.0, %v1122
    %1124 = vmatmul.f32.gmra.mxu0 %v1061
    %v1125 = vpop.f32.mrf.mxu0
    %v1126 = vadd.f32 0.0, %v1125
    %1127 = vdwg.mxu0
    %v1128 = vadd.f32 %v950, %v1081
    %v1129 = vadd.f32 %v953, %v1084
    %v1130 = vadd.f32 %v956, %v1087
    %v1131 = vadd.f32 %v959, %v1090
    %v1132 = vadd.f32 %v962, %v1093
    %v1133 = vadd.f32 %v965, %v1096
    %v1134 = vadd.f32 %v968, %v1099
    %v1135 = vadd.f32 %v971, %v1102
    %v1136 = vadd.f32 %v974, %v1105
    %v1137 = vadd.f32 %v977, %v1108
    %v1138 = vadd.f32 %v980, %v1111
    %v1139 = vadd.f32 %v983, %v1114
    %v1140 = vadd.f32 %v986, %v1117
    %v1141 = vadd.f32 %v989, %v1120
    %v1142 = vadd.f32 %v992, %v1123
    %v1143 = vadd.f32 %v995, %v1126
    %v1144 = vld [vmem:[%s8] sm:$0x1]
    %v1146 = vperm.slane %v1144, 0
    %v1148 = vadd.f32 %v1128, %v1146
    %v1149 = vadd.f32 %v1129, %v1146
    %v1150 = vadd.f32 %v1130, %v1146
    %v1151 = vadd.f32 %v1131, %v1146
    %v1152 = vadd.f32 %v1132, %v1146
    %v1153 = vadd.f32 %v1133, %v1146
    %v1154 = vadd.f32 %v1134, %v1146
    %v1155 = vadd.f32 %v1135, %v1146
    %v1156 = vadd.f32 %v1136, %v1146
    %v1157 = vadd.f32 %v1137, %v1146
    %v1158 = vadd.f32 %v1138, %v1146
    %v1159 = vadd.f32 %v1139, %v1146
    %v1160 = vadd.f32 %v1140, %v1146
    %v1161 = vadd.f32 %v1141, %v1146
    %v1162 = vadd.f32 %v1142, %v1146
    %v1163 = vadd.f32 %v1143, %v1146
    %v1164 = vmax.f32 %v1148, 0.0
    %v1165 = vmax.f32 %v1149, 0.0
    %v1166 = vmax.f32 %v1150, 0.0
    %v1167 = vmax.f32 %v1151, 0.0
    %v1168 = vmax.f32 %v1152, 0.0
    %v1169 = vmax.f32 %v1153, 0.0
    %v1170 = vmax.f32 %v1154, 0.0
    %v1171 = vmax.f32 %v1155, 0.0
    %v1172 = vmax.f32 %v1156, 0.0
    %v1173 = vmax.f32 %v1157, 0.0
    %v1174 = vmax.f32 %v1158, 0.0
    %v1175 = vmax.f32 %v1159, 0.0
    %v1176 = vmax.f32 %v1160, 0.0
    %v1177 = vmax.f32 %v1161, 0.0
    %v1178 = vmax.f32 %v1162, 0.0
    %v1179 = vmax.f32 %v1163, 0.0
    %v1180 = vld [vmem:[%s9] sm:$0xff]
    %v1181 = vld [vmem:[%s9 + $0x8] sm:$0xff]
    %v1182 = vld [vmem:[%s9 + $0x10] sm:$0xff]
    %v1183 = vld [vmem:[%s9 + $0x18] sm:$0xff]
    %v1184 = vld [vmem:[%s10] sm:$0x1]
    %v1186 = vperm.slane %v1184, 0
    %vm1188 = vcmask 261120
    %v1190 = vsel %vm1188, %v1164, 0
    %v1193 = vsel %vm1188, %v1165, 0
    %v1196 = vsel %vm1188, %v1166, 0
    %v1199 = vsel %vm1188, %v1167, 0
    %v1202 = vsel %vm1188, %v1168, 0
    %v1205 = vsel %vm1188, %v1169, 0
    %v1208 = vsel %vm1188, %v1170, 0
    %v1211 = vsel %vm1188, %v1171, 0
    %v1214 = vsel %vm1188, %v1172, 0
    %v1217 = vsel %vm1188, %v1173, 0
    %v1220 = vsel %vm1188, %v1174, 0
    %v1223 = vsel %vm1188, %v1175, 0
    %v1226 = vsel %vm1188, %v1176, 0
    %v1229 = vsel %vm1188, %v1177, 0
    %v1232 = vsel %vm1188, %v1178, 0
    %v1235 = vsel %vm1188, %v1179, 0
    %1237 = vmatpush.msra.mxu0 0.0
    %1238 = vmatpush.msra.mxu0 0.0
    %1239 = vmatpush.msra.mxu0 0.0
    %1240 = vmatpush.msra.mxu0 0.0
    %1241 = vmatpush.msra.mxu0 0.0
    %1242 = vmatpush.msra.mxu0 0.0
    %1243 = vmatpush.msra.mxu0 0.0
    %1244 = vmatpush.msra.mxu0 0.0
    %1245 = vmatpush.msra.mxu0 0.0
    %1246 = vmatpush.msra.mxu0 0.0
    %1247 = vmatpush.msra.mxu0 0.0
    %1248 = vmatpush.msra.mxu0 0.0
    %1249 = vmatpush.msra.mxu0 %v1183
    %1250 = vmatpush.msra.mxu0 %v1182
    %1251 = vmatpush.msra.mxu0 %v1181
    %1252 = vmatpush.msra.mxu0 %v1180
    %1253 = vmatmul.f32.gmra.mxu0 %v1190
    %v1254 = vpop.f32.mrf.mxu0
    %v1255 = vadd.f32 %v1186, %v1254
    %1256 = vmatmul.f32.gmra.mxu0 %v1193
    %v1257 = vpop.f32.mrf.mxu0
    %v1258 = vadd.f32 %v1186, %v1257
    %1259 = vmatmul.f32.gmra.mxu0 %v1196
    %v1260 = vpop.f32.mrf.mxu0
    %v1261 = vadd.f32 %v1186, %v1260
    %1262 = vmatmul.f32.gmra.mxu0 %v1199
    %v1263 = vpop.f32.mrf.mxu0
    %v1264 = vadd.f32 %v1186, %v1263
    %1265 = vmatmul.f32.gmra.mxu0 %v1202
    %v1266 = vpop.f32.mrf.mxu0
    %v1267 = vadd.f32 %v1186, %v1266
    %1268 = vmatmul.f32.gmra.mxu0 %v1205
    %v1269 = vpop.f32.mrf.mxu0
    %v1270 = vadd.f32 %v1186, %v1269
    %1271 = vmatmul.f32.gmra.mxu0 %v1208
    %v1272 = vpop.f32.mrf.mxu0
    %v1273 = vadd.f32 %v1186, %v1272
    %1274 = vmatmul.f32.gmra.mxu0 %v1211
    %v1275 = vpop.f32.mrf.mxu0
    %v1276 = vadd.f32 %v1186, %v1275
    %1277 = vmatmul.f32.gmra.mxu0 %v1214
    %v1278 = vpop.f32.mrf.mxu0
    %v1279 = vadd.f32 %v1186, %v1278
    %1280 = vmatmul.f32.gmra.mxu0 %v1217
    %v1281 = vpop.f32.mrf.mxu0
    %v1282 = vadd.f32 %v1186, %v1281
    %1283 = vmatmul.f32.gmra.mxu0 %v1220
    %v1284 = vpop.f32.mrf.mxu0
    %v1285 = vadd.f32 %v1186, %v1284
    %1286 = vmatmul.f32.gmra.mxu0 %v1223
    %v1287 = vpop.f32.mrf.mxu0
    %v1288 = vadd.f32 %v1186, %v1287
    %1289 = vmatmul.f32.gmra.mxu0 %v1226
    %v1290 = vpop.f32.mrf.mxu0
    %v1291 = vadd.f32 %v1186, %v1290
    %1292 = vmatmul.f32.gmra.mxu0 %v1229
    %v1293 = vpop.f32.mrf.mxu0
    %v1294 = vadd.f32 %v1186, %v1293
    %1295 = vmatmul.f32.gmra.mxu0 %v1232
    %v1296 = vpop.f32.mrf.mxu0
    %v1297 = vadd.f32 %v1186, %v1296
    %1298 = vmatmul.f32.gmra.mxu0 %v1235
    %v1299 = vpop.f32.mrf.mxu0
    %v1300 = vadd.f32 %v1186, %v1299
    %1301 = vdwg.mxu0
    %v1302 = vmax.f32 %v1255, 0.0
    %v1303 = vmax.f32 %v1258, 0.0
    %v1304 = vmax.f32 %v1261, 0.0
    %v1305 = vmax.f32 %v1264, 0.0
    %v1306 = vmax.f32 %v1267, 0.0
    %v1307 = vmax.f32 %v1270, 0.0
    %v1308 = vmax.f32 %v1273, 0.0
    %v1309 = vmax.f32 %v1276, 0.0
    %v1310 = vmax.f32 %v1279, 0.0
    %v1311 = vmax.f32 %v1282, 0.0
    %v1312 = vmax.f32 %v1285, 0.0
    %v1313 = vmax.f32 %v1288, 0.0
    %v1314 = vmax.f32 %v1291, 0.0
    %v1315 = vmax.f32 %v1294, 0.0
    %v1316 = vmax.f32 %v1297, 0.0
    %v1317 = vmax.f32 %v1300, 0.0
    %v1318 = vld [vmem:[%s11] sm:$0xff]
    %v1319 = vld [vmem:[%s11 + $0x8] sm:$0xff]
    %v1320 = vld [vmem:[%s11 + $0x10] sm:$0xff]
    %v1321 = vld [vmem:[%s11 + $0x18] sm:$0xff]
    %v1322 = vld [vmem:[%s12] sm:$0x1]
    %v1324 = vperm.slane %v1322, 0
    %v1327 = vsel %vm1188, %v1302, 0
    %v1330 = vsel %vm1188, %v1303, 0
    %v1333 = vsel %vm1188, %v1304, 0
    %v1336 = vsel %vm1188, %v1305, 0
    %v1339 = vsel %vm1188, %v1306, 0
    %v1342 = vsel %vm1188, %v1307, 0
    %v1345 = vsel %vm1188, %v1308, 0
    %v1348 = vsel %vm1188, %v1309, 0
    %v1351 = vsel %vm1188, %v1310, 0
    %v1354 = vsel %vm1188, %v1311, 0
    %v1357 = vsel %vm1188, %v1312, 0
    %v1360 = vsel %vm1188, %v1313, 0
    %v1363 = vsel %vm1188, %v1314, 0
    %v1366 = vsel %vm1188, %v1315, 0
    %v1369 = vsel %vm1188, %v1316, 0
    %v1372 = vsel %vm1188, %v1317, 0
    %1374 = vmatpush.msra.mxu0 0.0
    %1375 = vmatpush.msra.mxu0 0.0
    %1376 = vmatpush.msra.mxu0 0.0
    %1377 = vmatpush.msra.mxu0 0.0
    %1378 = vmatpush.msra.mxu0 0.0
    %1379 = vmatpush.msra.mxu0 0.0
    %1380 = vmatpush.msra.mxu0 0.0
    %1381 = vmatpush.msra.mxu0 0.0
    %1382 = vmatpush.msra.mxu0 0.0
    %1383 = vmatpush.msra.mxu0 0.0
    %1384 = vmatpush.msra.mxu0 0.0
    %1385 = vmatpush.msra.mxu0 0.0
    %1386 = vmatpush.msra.mxu0 %v1321
    %1387 = vmatpush.msra.mxu0 %v1320
    %1388 = vmatpush.msra.mxu0 %v1319
    %1389 = vmatpush.msra.mxu0 %v1318
    %1390 = vmatmul.f32.gmra.mxu0 %v1327
    %v1391 = vpop.f32.mrf.mxu0
    %v1392 = vadd.f32 %v1324, %v1391
    %1393 = vmatmul.f32.gmra.mxu0 %v1330
    %v1394 = vpop.f32.mrf.mxu0
    %v1395 = vadd.f32 %v1324, %v1394
    %1396 = vmatmul.f32.gmra.mxu0 %v1333
    %v1397 = vpop.f32.mrf.mxu0
    %v1398 = vadd.f32 %v1324, %v1397
    %1399 = vmatmul.f32.gmra.mxu0 %v1336
    %v1400 = vpop.f32.mrf.mxu0
    %v1401 = vadd.f32 %v1324, %v1400
    %1402 = vmatmul.f32.gmra.mxu0 %v1339
    %v1403 = vpop.f32.mrf.mxu0
    %v1404 = vadd.f32 %v1324, %v1403
    %1405 = vmatmul.f32.gmra.mxu0 %v1342
    %v1406 = vpop.f32.mrf.mxu0
    %v1407 = vadd.f32 %v1324, %v1406
    %1408 = vmatmul.f32.gmra.mxu0 %v1345
    %v1409 = vpop.f32.mrf.mxu0
    %v1410 = vadd.f32 %v1324, %v1409
    %1411 = vmatmul.f32.gmra.mxu0 %v1348
    %v1412 = vpop.f32.mrf.mxu0
    %v1413 = vadd.f32 %v1324, %v1412
    %1414 = vmatmul.f32.gmra.mxu0 %v1351
    %v1415 = vpop.f32.mrf.mxu0
    %v1416 = vadd.f32 %v1324, %v1415
    %1417 = vmatmul.f32.gmra.mxu0 %v1354
    %v1418 = vpop.f32.mrf.mxu0
    %v1419 = vadd.f32 %v1324, %v1418
    %1420 = vmatmul.f32.gmra.mxu0 %v1357
    %v1421 = vpop.f32.mrf.mxu0
    %v1422 = vadd.f32 %v1324, %v1421
    %1423 = vmatmul.f32.gmra.mxu0 %v1360
    %v1424 = vpop.f32.mrf.mxu0
    %v1425 = vadd.f32 %v1324, %v1424
    %1426 = vmatmul.f32.gmra.mxu0 %v1363
    %v1427 = vpop.f32.mrf.mxu0
    %v1428 = vadd.f32 %v1324, %v1427
    %1429 = vmatmul.f32.gmra.mxu0 %v1366
    %v1430 = vpop.f32.mrf.mxu0
    %v1431 = vadd.f32 %v1324, %v1430
    %1432 = vmatmul.f32.gmra.mxu0 %v1369
    %v1433 = vpop.f32.mrf.mxu0
    %v1434 = vadd.f32 %v1324, %v1433
    %1435 = vmatmul.f32.gmra.mxu0 %v1372
    %v1436 = vpop.f32.mrf.mxu0
    %v1437 = vadd.f32 %v1324, %v1436
    %1438 = vdwg.mxu0
    %v1439 = vmax.f32 %v1392, 0.0
    %v1440 = vmax.f32 %v1395, 0.0
    %v1441 = vmax.f32 %v1398, 0.0
    %v1442 = vmax.f32 %v1401, 0.0
    %v1443 = vmax.f32 %v1404, 0.0
    %v1444 = vmax.f32 %v1407, 0.0
    %v1445 = vmax.f32 %v1410, 0.0
    %v1446 = vmax.f32 %v1413, 0.0
    %v1447 = vmax.f32 %v1416, 0.0
    %v1448 = vmax.f32 %v1419, 0.0
    %v1449 = vmax.f32 %v1422, 0.0
    %v1450 = vmax.f32 %v1425, 0.0
    %v1451 = vmax.f32 %v1428, 0.0
    %v1452 = vmax.f32 %v1431, 0.0
    %v1453 = vmax.f32 %v1434, 0.0
    %v1454 = vmax.f32 %v1437, 0.0
    %1455 = vst.msk [vmem:[%s13] sm:$0xff] %vm282, %v1439
    %1456 = vst.msk [vmem:[%s13 + $0x8] sm:$0xff] %vm282, %v1440
    %1457 = vst.msk [vmem:[%s13 + $0x10] sm:$0xff] %vm282, %v1441
    %1458 = vst.msk [vmem:[%s13 + $0x18] sm:$0xff] %vm282, %v1442
    %1459 = vst.msk [vmem:[%s13 + $0x20] sm:$0xff] %vm282, %v1443
    %1460 = vst.msk [vmem:[%s13 + $0x28] sm:$0xff] %vm282, %v1444
    %1461 = vst.msk [vmem:[%s13 + $0x30] sm:$0xff] %vm282, %v1445
    %1462 = vst.msk [vmem:[%s13 + $0x38] sm:$0xff] %vm282, %v1446
    %1463 = vst.msk [vmem:[%s13 + $0x40] sm:$0xff] %vm282, %v1447
    %1464 = vst.msk [vmem:[%s13 + $0x48] sm:$0xff] %vm282, %v1448
    %1465 = vst.msk [vmem:[%s13 + $0x50] sm:$0xff] %vm282, %v1449
    %1466 = vst.msk [vmem:[%s13 + $0x58] sm:$0xff] %vm282, %v1450
    %1467 = vst.msk [vmem:[%s13 + $0x60] sm:$0xff] %vm282, %v1451
    %1468 = vst.msk [vmem:[%s13 + $0x68] sm:$0xff] %vm282, %v1452
    %1469 = vst.msk [vmem:[%s13 + $0x70] sm:$0xff] %vm282, %v1453
    %1470 = vst.msk [vmem:[%s13 + $0x78] sm:$0xff] %vm282, %v1454
    %v1471 = vld [vmem:[%s4] sm:$0xff]
    %v1472 = vld [vmem:[%s4 + $0x8] sm:$0xff]
    %v1473 = vld [vmem:[%s4 + $0x10] sm:$0xff]
    %v1474 = vld [vmem:[%s4 + $0x18] sm:$0xff]
    %v1475 = vld [vmem:[%s4 + $0x20] sm:$0xff]
    %v1476 = vld [vmem:[%s4 + $0x28] sm:$0xff]
    %v1477 = vld [vmem:[%s4 + $0x30] sm:$0xff]
    %v1478 = vld [vmem:[%s4 + $0x38] sm:$0xff]
    %v1479 = vld [vmem:[%s4 + $0x40] sm:$0xff]
    %v1480 = vld [vmem:[%s4 + $0x48] sm:$0xff]
    %v1481 = vld [vmem:[%s4 + $0x50] sm:$0xff]
    %v1482 = vld [vmem:[%s4 + $0x58] sm:$0xff]
    %v1483 = vld [vmem:[%s4 + $0x60] sm:$0xff]
    %v1484 = vld [vmem:[%s4 + $0x68] sm:$0xff]
    %v1485 = vld [vmem:[%s4 + $0x70] sm:$0xff]
    %v1486 = vld [vmem:[%s4 + $0x78] sm:$0xff]
    %v1487 = vadd.f32 %v1439, %v1471
    %v1488 = vadd.f32 %v1440, %v1472
    %v1489 = vadd.f32 %v1441, %v1473
    %v1490 = vadd.f32 %v1442, %v1474
    %v1491 = vadd.f32 %v1443, %v1475
    %v1492 = vadd.f32 %v1444, %v1476
    %v1493 = vadd.f32 %v1445, %v1477
    %v1494 = vadd.f32 %v1446, %v1478
    %v1495 = vadd.f32 %v1447, %v1479
    %v1496 = vadd.f32 %v1448, %v1480
    %v1497 = vadd.f32 %v1449, %v1481
    %v1498 = vadd.f32 %v1450, %v1482
    %v1499 = vadd.f32 %v1451, %v1483
    %v1500 = vadd.f32 %v1452, %v1484
    %v1501 = vadd.f32 %v1453, %v1485
    %v1502 = vadd.f32 %v1454, %v1486
    %1503 = vst.msk [vmem:[%s14] sm:$0xff] %vm282, %v1487
    %1504 = vst.msk [vmem:[%s14 + $0x8] sm:$0xff] %vm282, %v1488
    %1505 = vst.msk [vmem:[%s14 + $0x10] sm:$0xff] %vm282, %v1489
    %1506 = vst.msk [vmem:[%s14 + $0x18] sm:$0xff] %vm282, %v1490
    %1507 = vst.msk [vmem:[%s14 + $0x20] sm:$0xff] %vm282, %v1491
    %1508 = vst.msk [vmem:[%s14 + $0x28] sm:$0xff] %vm282, %v1492
    %1509 = vst.msk [vmem:[%s14 + $0x30] sm:$0xff] %vm282, %v1493
    %1510 = vst.msk [vmem:[%s14 + $0x38] sm:$0xff] %vm282, %v1494
    %1511 = vst.msk [vmem:[%s14 + $0x40] sm:$0xff] %vm282, %v1495
    %1512 = vst.msk [vmem:[%s14 + $0x48] sm:$0xff] %vm282, %v1496
    %1513 = vst.msk [vmem:[%s14 + $0x50] sm:$0xff] %vm282, %v1497
    %1514 = vst.msk [vmem:[%s14 + $0x58] sm:$0xff] %vm282, %v1498
    %1515 = vst.msk [vmem:[%s14 + $0x60] sm:$0xff] %vm282, %v1499
    %1516 = vst.msk [vmem:[%s14 + $0x68] sm:$0xff] %vm282, %v1500
    %1517 = vst.msk [vmem:[%s14 + $0x70] sm:$0xff] %vm282, %v1501
    %1518 = vst.msk [vmem:[%s14 + $0x78] sm:$0xff] %vm282, %v1502
  $region61: #{megnet_block_forward.10} parent=0 // pred_fallthru
    _
  // Predicated region
  $region62: #{megnet_block_forward.10} parent=0 // pred_check
    _
  $region63: #{megnet_block_forward.10} parent=0 // pred_check_branch
    %1520 = sbr.rel (0) target = $region65
  $region64: #{megnet_block_forward.10} parent=0 // pred_region
    _
  $region65: #{megnet_block_forward.10} parent=0 // pred_fallthru
    _
  // Predicated region
  $region66: #{megnet_block_forward.10} parent=0 // pred_check
    _
  $region67: #{megnet_block_forward.10} parent=0 // pred_check_branch
    %1522 = sbr.rel (0) target = $region69
  $region68: #{megnet_block_forward.10} parent=0 // pred_region
    _
  $region69: #{megnet_block_forward.10} parent=0 // pred_fallthru
    _
  // Predicated region
  $region70: #{megnet_block_forward.10} parent=0 // pred_check
    _
  $region71: #{megnet_block_forward.10} parent=0 // pred_check_branch
    %1524 = sbr.rel (0) target = $region73
  $region72: #{megnet_block_forward.10} parent=0 // pred_region
    _
  $region73: #{megnet_block_forward.10} parent=0 // pred_fallthru
    _
  // Predicated region
  $region74: #{megnet_block_forward.10} parent=0 // pred_check
    _
  $region75: #{megnet_block_forward.10} parent=0 // pred_check_branch
    %1526 = sbr.rel (0) target = $region77
  $region76: #{megnet_block_forward.10} parent=0 // pred_region
    _
  $region77: #{megnet_block_forward.10} parent=0 // pred_fallthru
    _

</llo_original>
